<compile_context>
chip_gen: v5e
topology: v5e:2x2
jax: 0.10.0
libtpu: 0.0.40
codegen_flags: <defaults>
</compile_context>

<pallas_src>
import functools
import math

import jax
import jax.numpy as jnp
from jax.experimental import pallas as pl
from jax.experimental.pallas import tpu as pltpu

NEG_INF = -1e30  # stands in for float('-inf') in the additive attention mask (f32 only)


# ----------------------------------------------------------------------------
# In-kernel helpers (trace-time functions operating on values + param refs)
# ----------------------------------------------------------------------------
def _matmul(x, w_ref, b_ref=None, relu=False):
    """y = x @ W (+ b), bf16 MXU operands, f32 accumulation, optional fused ReLU."""
    y = jnp.dot(x.astype(jnp.bfloat16), w_ref[...],
                preferred_element_type=jnp.float32)
    if b_ref is not None:
        y = y + b_ref[...]
    if relu:
        y = jnp.maximum(y, 0.0)
    return y


def _layernorm(x, ln_refs, eps=1e-5):
    g_ref, b_ref = ln_refs
    mu = jnp.mean(x, axis=-1, keepdims=True)
    var = jnp.mean(jnp.square(x - mu), axis=-1, keepdims=True)
    return (x - mu) * jax.lax.rsqrt(var + eps) * g_ref[...] + b_ref[...]


def _causal_mask(tq, tk):
    row = jax.lax.broadcasted_iota(jnp.int32, (tq, tk), 0)
    col = jax.lax.broadcasted_iota(jnp.int32, (tq, tk), 1)
    return jnp.where(col > row, NEG_INF, 0.0).astype(jnp.float32)


def _mha(q_full, k_full, v_full, *, h, mask):
    """Multi-head attention on (T, d) slabs; 1/sqrt(d) already folded into Wq.

    Head outputs are merged by masked accumulation into a lane-dense (Tq, d)
    slab (no lane-dim concat, no transposes).  All softmax math in f32.
    """
    tq, d = q_full.shape
    tk = k_full.shape[0]
    dh = d // h
    lane = jax.lax.broadcasted_iota(jnp.int32, (tk, d), 1)
    acc = jnp.zeros((tq, d), jnp.float32)
    for j in range(h):
        q = q_full[:, j * dh:(j + 1) * dh].astype(jnp.bfloat16)
        k = k_full[:, j * dh:(j + 1) * dh].astype(jnp.bfloat16)
        # q @ k^T via dot_general contracting (1, 1): transposed operand fed to
        # the MXU directly, no k.T materialization.
        s = jax.lax.dot_general(q, k, (((1,), (1,)), ((), ())),
                                preferred_element_type=jnp.float32)
        if mask is not None:
            s = s + mask
        s = s - jnp.max(s, axis=-1, keepdims=True)
        p = jnp.exp(s)
        p = p * pl.reciprocal(jnp.sum(p, axis=-1, keepdims=True), approx=True)
        vj = jnp.where((lane >= j * dh) & (lane < (j + 1) * dh), v_full, 0.0)
        acc = acc + jnp.dot(p.astype(jnp.bfloat16), vj.astype(jnp.bfloat16),
                            preferred_element_type=jnp.float32)
    return acc


def _self_attention(x, wqkv_ref, *, h, masking):
    """AttentionHead: fused QKV projection + MHA + residual (no out proj)."""
    t, d = x.shape
    qkv = _matmul(x, wqkv_ref)                               # (T, 3d)
    mask = _causal_mask(t, t) if masking else None           # skipped if unmasked
    return x + _mha(qkv[:, :d], qkv[:, d:2 * d], qkv[:, 2 * d:], h=h, mask=mask)


def _cross_attention(x, wq_ref, kv, *, h):
    """DecoderHead: Q from x, K/V slab from encoder, causal mask + residual."""
    tq, d = x.shape
    tk = kv.shape[0]
    q_full = _matmul(x, wq_ref)                              # (Tq, d)
    return x + _mha(q_full, kv[:, :d], kv[:, d:], h=h, mask=_causal_mask(tq, tk))


# ----------------------------------------------------------------------------
# Fused whole-forward kernel (one grid step per batch element)
# ----------------------------------------------------------------------------
def _fused_ed_kernel(*refs, treedef, h, n):
    n_leaves = treedef.num_leaves
    params = jax.tree_util.tree_unflatten(treedef, refs[:n_leaves])
    x_ref, y_ref = refs[n_leaves], refs[n_leaves + 1]
    o_ref = refs[n_leaves + 2]
    enc, dec = params['enc'], params['dec']

    # ---------------- Encoder ----------------
    x = x_ref[0].astype(jnp.float32)                         # (T_in, d_enc_in)
    for i in range(len(enc['emb']) - 1):
        x = _matmul(x, *enc['emb'][i], relu=True)
    x = _matmul(x, *enc['emb'][-1])
    x = x + enc['pos'][...]
    for i in range(n - 1):
        if i != 0:
            x = _layernorm(x, enc['norm1'][i - 1])
        x = _self_attention(x, enc['multi'][i], h=h, masking=False)
        x = _layernorm(x, enc['norm2'][i])
        x = x + _matmul(x, *enc['fc'][i], relu=True)
    x = _layernorm(x, enc['norm1'][n - 2])
    kv = _matmul(x, enc['final'])                            # (T_in, 2d) = [K | V]

    # ---------------- Decoder ----------------
    y = y_ref[0].astype(jnp.float32)                         # (T_dec, d_dec_in)
    for i in range(len(dec['emb']) - 1):
        y = _matmul(y, *dec['emb'][i], relu=True)
    y = _matmul(y, *dec['emb'][-1])
    y = y + dec['pos'][...]
    for i in range(n):
        if i != 0:
            y = _layernorm(y, dec['norm1'][i - 1])
        y = _self_attention(y, dec['multi1'][i], h=h, masking=True)
        y = _layernorm(y, dec['norm2'][i])
        y = _cross_attention(y, dec['multi2'][i], kv, h=h)
        y = _layernorm(y, dec['norm3'][i])
        y = _matmul(y, *dec['fc'][i], relu=True) + y
    y = _matmul(y, *dec['fc'][n])                            # (T_dec, d_out) logits
    o_ref[0] = y


# ----------------------------------------------------------------------------
# Forward wrapper (single pallas_call + plain-JAX ordinal head)
# ----------------------------------------------------------------------------
@functools.partial(jax.jit, static_argnames=('h', 'n'))
def transformer_ed_forward(kernel_params, cutoff, x, y, *, h, n):
    leaves, treedef = jax.tree_util.tree_flatten(kernel_params)
    B, T_in, d_in = x.shape
    _, T_dec, d_out = y.shape

    def _whole(a):
        nd = a.ndim
        return pl.BlockSpec(a.shape, lambda b, _nd=nd: (0,) * _nd)

    in_specs = [_whole(a) for a in leaves] + [
        pl.BlockSpec((1, T_in, d_in), lambda b: (b, 0, 0)),
        pl.BlockSpec((1, T_dec, d_out), lambda b: (b, 0, 0)),
    ]
    logits = pl.pallas_call(
        functools.partial(_fused_ed_kernel, treedef=treedef, h=h, n=n),
        grid=(B,),
        in_specs=in_specs,
        out_specs=pl.BlockSpec((1, T_dec, d_out), lambda b: (b, 0, 0)),
        out_shape=jax.ShapeDtypeStruct((B, T_dec, d_out), jnp.float32),
        compiler_params=pltpu.CompilerParams(
            dimension_semantics=("parallel",)),
    )(*leaves, x, y)

    # Ordinal (cumulative-logit) head — tiny elementwise glue, plain JAX.
    logits = logits[:, :-1, :]                               # matches [:, :-1, ...]
    b = jnp.concatenate([cutoff[:, :1], cutoff[:, 1:] ** 2], axis=1)
    b = jnp.cumsum(b, axis=1)[0]                             # (nb_classes - 1,)
    sig = jax.nn.sigmoid(b[None, None, None, :] - logits[..., None])
    probs = jnp.concatenate(
        [sig[..., :1], sig[..., 1:] - sig[..., :-1], 1.0 - sig[..., -1:]],
        axis=-1)
    return probs


# ----------------------------------------------------------------------------
# Positional encoding, parameter init (module-shaped), one-time prep (fused)
# ----------------------------------------------------------------------------
def get_positional_encoding(d, t_in):
    assert d % 2 == 0
    t = jnp.arange(1, t_in + 1, dtype=jnp.float32)[:, None]                 # (t_in, 1)
    kk = jnp.arange(d // 2, dtype=jnp.float32)
    omega = jnp.repeat(1.0 / (1000.0 ** (2.0 * kk / d)), 2)[None, :]        # (1, d)
    phase = jnp.tile(jnp.array([0.0, jnp.pi / 2], jnp.float32), d // 2)[None, :]
    return jnp.sin(t * omega + phase)                                       # (t_in, d)


def init_params(param, key):
    """Deterministic synthetic parameters matching the PyTorch module shapes."""
    n, h = param['dim']
    emb_dim = list(param['emb'])
    kd = emb_dim[-1]
    d_enc = param['max_ac'] * param['state_dim']
    d_dec = 1 if param['predict_spot'] else param['nb_lon'] * param['nb_lat']

    keys = iter(jax.random.split(key, 512))

    def lin(din, dout, bias=True):
        w = jax.random.normal(next(keys), (din, dout), jnp.float32) / math.sqrt(din)
        b = jax.random.normal(next(keys), (dout,), jnp.float32) * 0.01 if bias else None
        return (w, b)

    def ln(dim):
        return (jnp.ones((dim,), jnp.float32), jnp.zeros((dim,), jnp.float32))

    def attn_w():
        return {'wq': lin(kd, kd, False)[0],
                'wk': lin(kd, kd, False)[0],
                'wv': lin(kd, kd, False)[0]}

    enc = {
        'n': n,
        'emb': [lin(d_enc, emb_dim[0])] + [lin(emb_dim[i], emb_dim[i + 1]) for i in range(len(emb_dim) - 1)],
        'pos': get_positional_encoding(kd, param['T_in']),
        'multi': [attn_w() for _ in range(n - 1)],
        'norm1': [ln(kd) for _ in range(n - 1)],
        'norm2': [ln(kd) for _ in range(n - 1)],
        'fc': [lin(kd, kd) for _ in range(n - 1)],
        'final': {'wk': lin(kd, kd, False)[0], 'wv': lin(kd, kd, False)[0]},
    }
    dec = {
        'n': n,
        'emb': [lin(d_dec, emb_dim[0])] + [lin(emb_dim[i], emb_dim[i + 1]) for i in range(len(emb_dim) - 1)],
        'pos': get_positional_encoding(kd, param['T_out'] + 1),
        'multi1': [attn_w() for _ in range(n)],
        'multi2': [lin(kd, kd, False)[0] for _ in range(n)],
        'norm1': [ln(kd) for _ in range(n - 1)],
        'norm2': [ln(kd) for _ in range(n)],
        'norm3': [ln(kd) for _ in range(n)],
        'fc': [lin(kd, kd) for _ in range(n)] + [lin(kd, d_dec)],
        'cutoff': jax.random.uniform(next(keys), (1, param['nb_classes'] - 1), jnp.float32, -0.5, 0.5),
    }
    return {'enc': enc, 'dec': dec, 'h': h}


def prepare_params(params):
    """One-time prep (hoisted out of the forward): fuse QKV / KV weights, fold
    the 1/sqrt(d) scale into Wq, cast matmul weights to bf16, reshape biases
    and LayerNorm params to (1, d) f32 rows."""
    enc, dec, h = params['enc'], params['dec'], params['h']
    kd = enc['pos'].shape[1]
    scale = 1.0 / math.sqrt(kd)

    def lin(wb):
        w, b = wb
        return (w.astype(jnp.bfloat16), b.reshape(1, -1).astype(jnp.float32))

    def ln(gb):
        g, b = gb
        return (g.reshape(1, -1).astype(jnp.float32),
                b.reshape(1, -1).astype(jnp.float32))

    def qkv(m):
        return jnp.concatenate([m['wq'] * scale, m['wk'], m['wv']],
                               axis=1).astype(jnp.bfloat16)

    kenc = {
        'emb': [lin(e) for e in enc['emb']],
        'pos': enc['pos'].astype(jnp.float32),
        'multi': [qkv(m) for m in enc['multi']],
        'norm1': [ln(z) for z in enc['norm1']],
        'norm2': [ln(z) for z in enc['norm2']],
        'fc': [lin(e) for e in enc['fc']],
        'final': jnp.concatenate([enc['final']['wk'], enc['final']['wv']],
                                 axis=1).astype(jnp.bfloat16),
    }
    kdec = {
        'emb': [lin(e) for e in dec['emb']],
        'pos': dec['pos'].astype(jnp.float32),
        'multi1': [qkv(m) for m in dec['multi1']],
        'multi2': [(w * scale).astype(jnp.bfloat16) for w in dec['multi2']],
        'norm1': [ln(z) for z in dec['norm1']],
        'norm2': [ln(z) for z in dec['norm2']],
        'norm3': [ln(z) for z in dec['norm3']],
        'fc': [lin(e) for e in dec['fc']],
    }
    return {'kernel_params': {'enc': kenc, 'dec': kdec},
            'cutoff': dec['cutoff'].astype(jnp.float32),
            'h': h, 'n': enc['n']}


# ----------------------------------------------------------------------------
if __name__ == "__main__":
    param = {
        'dim': (2, 2),          # n = 2 blocks, h = 2 heads
        'emb': [32, 32],        # model dim k = 32
        'max_ac': 4, 'state_dim': 4,   # encoder input dim = 16
        'T_in': 8, 'T_out': 6,
        'predict_spot': False, 'nb_lon': 2, 'nb_lat': 2,  # decoder input dim = 4
        'nb_classes': 3,
    }
    B = 2
    key = jax.random.PRNGKey(0)
    kp, kx, ky = jax.random.split(key, 3)
    params = init_params(param, kp)
    prepared = prepare_params(params)

    d_dec = param['nb_lon'] * param['nb_lat']
    x = jax.random.normal(kx, (B, param['T_in'], param['max_ac'] * param['state_dim']), jnp.float32)
    y = jax.random.normal(ky, (B, param['T_out'] + 1, d_dec), jnp.float32)

    out = transformer_ed_forward(prepared['kernel_params'], prepared['cutoff'],
                                 x, y, h=prepared['h'], n=prepared['n'])
    out = jax.block_until_ready(out)

    assert out.shape == (B, param['T_out'], d_dec, param['nb_classes']), out.shape
    assert bool(jnp.all(jnp.isfinite(out)))
    # class probabilities of the ordinal head sum to 1
    assert bool(jnp.allclose(jnp.sum(out, axis=-1), 1.0, atol=1e-5))
    print("KERNEL_OK")
</pallas_src>

<mosaic_0001>
module attributes {stable_mosaic.version = 11 : i64} {
  func.func @_fused_ed_kernel(%arg0: i32, %arg1: memref<4x32xbf16, #tpu.memory_space<vmem>>, %arg2: memref<1x32xf32, #tpu.memory_space<vmem>>, %arg3: memref<32x32xbf16, #tpu.memory_space<vmem>>, %arg4: memref<1x32xf32, #tpu.memory_space<vmem>>, %arg5: memref<32x32xbf16, #tpu.memory_space<vmem>>, %arg6: memref<1x32xf32, #tpu.memory_space<vmem>>, %arg7: memref<32x32xbf16, #tpu.memory_space<vmem>>, %arg8: memref<1x32xf32, #tpu.memory_space<vmem>>, %arg9: memref<32x4xbf16, #tpu.memory_space<vmem>>, %arg10: memref<1x4xf32, #tpu.memory_space<vmem>>, %arg11: memref<32x96xbf16, #tpu.memory_space<vmem>>, %arg12: memref<32x96xbf16, #tpu.memory_space<vmem>>, %arg13: memref<32x32xbf16, #tpu.memory_space<vmem>>, %arg14: memref<32x32xbf16, #tpu.memory_space<vmem>>, %arg15: memref<1x32xf32, #tpu.memory_space<vmem>>, %arg16: memref<1x32xf32, #tpu.memory_space<vmem>>, %arg17: memref<1x32xf32, #tpu.memory_space<vmem>>, %arg18: memref<1x32xf32, #tpu.memory_space<vmem>>, %arg19: memref<1x32xf32, #tpu.memory_space<vmem>>, %arg20: memref<1x32xf32, #tpu.memory_space<vmem>>, %arg21: memref<1x32xf32, #tpu.memory_space<vmem>>, %arg22: memref<1x32xf32, #tpu.memory_space<vmem>>, %arg23: memref<1x32xf32, #tpu.memory_space<vmem>>, %arg24: memref<1x32xf32, #tpu.memory_space<vmem>>, %arg25: memref<7x32xf32, #tpu.memory_space<vmem>>, %arg26: memref<16x32xbf16, #tpu.memory_space<vmem>>, %arg27: memref<1x32xf32, #tpu.memory_space<vmem>>, %arg28: memref<32x32xbf16, #tpu.memory_space<vmem>>, %arg29: memref<1x32xf32, #tpu.memory_space<vmem>>, %arg30: memref<32x32xbf16, #tpu.memory_space<vmem>>, %arg31: memref<1x32xf32, #tpu.memory_space<vmem>>, %arg32: memref<32x64xbf16, #tpu.memory_space<vmem>>, %arg33: memref<32x96xbf16, #tpu.memory_space<vmem>>, %arg34: memref<1x32xf32, #tpu.memory_space<vmem>>, %arg35: memref<1x32xf32, #tpu.memory_space<vmem>>, %arg36: memref<1x32xf32, #tpu.memory_space<vmem>>, %arg37: memref<1x32xf32, #tpu.memory_space<vmem>>, %arg38: memref<8x32xf32, #tpu.memory_space<vmem>>, %arg39: memref<1x8x16xf32, #tpu.memory_space<vmem>>, %arg40: memref<1x7x4xf32, #tpu.memory_space<vmem>>, %arg41: memref<1x7x4xf32, #tpu.memory_space<vmem>>) attributes {dimension_semantics = [#tpu.dimension_semantics<parallel>], iteration_bounds = array<i64: 2>, scalar_prefetch = 0 : i64, scratch_operands = 0 : i64, tpu.core_type = #tpu.core_type<tc>, window_params = [{pipeline_mode = #tpu.pipeline_mode<synchronous>, transform_indices = @transform_0, window_bounds = array<i64: 4, 32>}, {pipeline_mode = #tpu.pipeline_mode<synchronous>, transform_indices = @transform_1, window_bounds = array<i64: 1, 32>}, {pipeline_mode = #tpu.pipeline_mode<synchronous>, transform_indices = @transform_2, window_bounds = array<i64: 32, 32>}, {pipeline_mode = #tpu.pipeline_mode<synchronous>, transform_indices = @transform_3, window_bounds = array<i64: 1, 32>}, {pipeline_mode = #tpu.pipeline_mode<synchronous>, transform_indices = @transform_4, window_bounds = array<i64: 32, 32>}, {pipeline_mode = #tpu.pipeline_mode<synchronous>, transform_indices = @transform_5, window_bounds = array<i64: 1, 32>}, {pipeline_mode = #tpu.pipeline_mode<synchronous>, transform_indices = @transform_6, window_bounds = array<i64: 32, 32>}, {pipeline_mode = #tpu.pipeline_mode<synchronous>, transform_indices = @transform_7, window_bounds = array<i64: 1, 32>}, {pipeline_mode = #tpu.pipeline_mode<synchronous>, transform_indices = @transform_8, window_bounds = array<i64: 32, 4>}, {pipeline_mode = #tpu.pipeline_mode<synchronous>, transform_indices = @transform_9, window_bounds = array<i64: 1, 4>}, {pipeline_mode = #tpu.pipeline_mode<synchronous>, transform_indices = @transform_10, window_bounds = array<i64: 32, 96>}, {pipeline_mode = #tpu.pipeline_mode<synchronous>, transform_indices = @transform_11, window_bounds = array<i64: 32, 96>}, {pipeline_mode = #tpu.pipeline_mode<synchronous>, transform_indices = @transform_12, window_bounds = array<i64: 32, 32>}, {pipeline_mode = #tpu.pipeline_mode<synchronous>, transform_indices = @transform_13, window_bounds = array<i64: 32, 32>}, {pipeline_mode = #tpu.pipeline_mode<synchronous>, transform_indices = @transform_14, window_bounds = array<i64: 1, 32>}, {pipeline_mode = #tpu.pipeline_mode<synchronous>, transform_indices = @transform_15, window_bounds = array<i64: 1, 32>}, {pipeline_mode = #tpu.pipeline_mode<synchronous>, transform_indices = @transform_16, window_bounds = array<i64: 1, 32>}, {pipeline_mode = #tpu.pipeline_mode<synchronous>, transform_indices = @transform_17, window_bounds = array<i64: 1, 32>}, {pipeline_mode = #tpu.pipeline_mode<synchronous>, transform_indices = @transform_18, window_bounds = array<i64: 1, 32>}, {pipeline_mode = #tpu.pipeline_mode<synchronous>, transform_indices = @transform_19, window_bounds = array<i64: 1, 32>}, {pipeline_mode = #tpu.pipeline_mode<synchronous>, transform_indices = @transform_20, window_bounds = array<i64: 1, 32>}, {pipeline_mode = #tpu.pipeline_mode<synchronous>, transform_indices = @transform_21, window_bounds = array<i64: 1, 32>}, {pipeline_mode = #tpu.pipeline_mode<synchronous>, transform_indices = @transform_22, window_bounds = array<i64: 1, 32>}, {pipeline_mode = #tpu.pipeline_mode<synchronous>, transform_indices = @transform_23, window_bounds = array<i64: 1, 32>}, {pipeline_mode = #tpu.pipeline_mode<synchronous>, transform_indices = @transform_24, window_bounds = array<i64: 7, 32>}, {pipeline_mode = #tpu.pipeline_mode<synchronous>, transform_indices = @transform_25, window_bounds = array<i64: 16, 32>}, {pipeline_mode = #tpu.pipeline_mode<synchronous>, transform_indices = @transform_26, window_bounds = array<i64: 1, 32>}, {pipeline_mode = #tpu.pipeline_mode<synchronous>, transform_indices = @transform_27, window_bounds = array<i64: 32, 32>}, {pipeline_mode = #tpu.pipeline_mode<synchronous>, transform_indices = @transform_28, window_bounds = array<i64: 1, 32>}, {pipeline_mode = #tpu.pipeline_mode<synchronous>, transform_indices = @transform_29, window_bounds = array<i64: 32, 32>}, {pipeline_mode = #tpu.pipeline_mode<synchronous>, transform_indices = @transform_30, window_bounds = array<i64: 1, 32>}, {pipeline_mode = #tpu.pipeline_mode<synchronous>, transform_indices = @transform_31, window_bounds = array<i64: 32, 64>}, {pipeline_mode = #tpu.pipeline_mode<synchronous>, transform_indices = @transform_32, window_bounds = array<i64: 32, 96>}, {pipeline_mode = #tpu.pipeline_mode<synchronous>, transform_indices = @transform_33, window_bounds = array<i64: 1, 32>}, {pipeline_mode = #tpu.pipeline_mode<synchronous>, transform_indices = @transform_34, window_bounds = array<i64: 1, 32>}, {pipeline_mode = #tpu.pipeline_mode<synchronous>, transform_indices = @transform_35, window_bounds = array<i64: 1, 32>}, {pipeline_mode = #tpu.pipeline_mode<synchronous>, transform_indices = @transform_36, window_bounds = array<i64: 1, 32>}, {pipeline_mode = #tpu.pipeline_mode<synchronous>, transform_indices = @transform_37, window_bounds = array<i64: 8, 32>}, {transform_indices = @transform_38, window_bounds = array<i64: 1, 8, 16>}, {transform_indices = @transform_39, window_bounds = array<i64: 1, 7, 4>}, {transform_indices = @transform_40, window_bounds = array<i64: 1, 7, 4>}]} {
    %c0 = arith.constant 0 : index
    %c0_0 = arith.constant 0 : index
    %c0_1 = arith.constant 0 : index
    %0 = vector.load %arg39[%c0, %c0_0, %c0_1] : memref<1x8x16xf32, #tpu.memory_space<vmem>>, vector<1x8x16xf32>
    %1 = vector.shape_cast %0 : vector<1x8x16xf32> to vector<8x16xf32>
    %2 = arith.truncf %1 : vector<8x16xf32> to vector<8x16xbf16>
    %c0_2 = arith.constant 0 : index
    %c0_3 = arith.constant 0 : index
    %3 = vector.load %arg26[%c0_2, %c0_3] : memref<16x32xbf16, #tpu.memory_space<vmem>>, vector<16x32xbf16>
    %cst = arith.constant dense<0.000000e+00> : vector<8x32xf32>
    %4 = tpu.matmul %2, %3, %cst {dimension_numbers = #tpu.dot_dimension_numbers<[1], [0], [0], [1], [0, 0, 1, 1], [], []>} : vector<8x16xbf16>, vector<16x32xbf16>, vector<8x32xf32> -> vector<8x32xf32>
    %c0_4 = arith.constant 0 : index
    %c0_5 = arith.constant 0 : index
    %5 = vector.load %arg27[%c0_4, %c0_5] : memref<1x32xf32, #tpu.memory_space<vmem>>, vector<1x32xf32>
    %6 = vector.broadcast %5 : vector<1x32xf32> to vector<8x32xf32>
    %7 = arith.addf %4, %6 : vector<8x32xf32>
    %cst_6 = arith.constant 0.000000e+00 : f32
    %8 = vector.broadcast %cst_6 : f32 to vector<8x32xf32>
    %9 = arith.maximumf %7, %8 : vector<8x32xf32>
    %10 = arith.truncf %9 : vector<8x32xf32> to vector<8x32xbf16>
    %c0_7 = arith.constant 0 : index
    %c0_8 = arith.constant 0 : index
    %11 = vector.load %arg28[%c0_7, %c0_8] : memref<32x32xbf16, #tpu.memory_space<vmem>>, vector<32x32xbf16>
    %cst_9 = arith.constant dense<0.000000e+00> : vector<8x32xf32>
    %12 = tpu.matmul %10, %11, %cst_9 {dimension_numbers = #tpu.dot_dimension_numbers<[1], [0], [0], [1], [0, 0, 1, 1], [], []>} : vector<8x32xbf16>, vector<32x32xbf16>, vector<8x32xf32> -> vector<8x32xf32>
    %c0_10 = arith.constant 0 : index
    %c0_11 = arith.constant 0 : index
    %13 = vector.load %arg29[%c0_10, %c0_11] : memref<1x32xf32, #tpu.memory_space<vmem>>, vector<1x32xf32>
    %14 = vector.broadcast %13 : vector<1x32xf32> to vector<8x32xf32>
    %15 = arith.addf %12, %14 : vector<8x32xf32>
    %c0_12 = arith.constant 0 : index
    %c0_13 = arith.constant 0 : index
    %16 = vector.load %arg38[%c0_12, %c0_13] : memref<8x32xf32, #tpu.memory_space<vmem>>, vector<8x32xf32>
    %17 = arith.addf %15, %16 : vector<8x32xf32>
    %18 = arith.truncf %17 : vector<8x32xf32> to vector<8x32xbf16>
    %c0_14 = arith.constant 0 : index
    %c0_15 = arith.constant 0 : index
    %19 = vector.load %arg33[%c0_14, %c0_15] : memref<32x96xbf16, #tpu.memory_space<vmem>>, vector<32x96xbf16>
    %cst_16 = arith.constant dense<0.000000e+00> : vector<8x96xf32>
    %20 = tpu.matmul %18, %19, %cst_16 {dimension_numbers = #tpu.dot_dimension_numbers<[1], [0], [0], [1], [0, 0, 1, 1], [], []>} : vector<8x32xbf16>, vector<32x96xbf16>, vector<8x96xf32> -> vector<8x96xf32>
    %21 = vector.extract_strided_slice %20 {offsets = [0, 0], sizes = [8, 32], strides = [1, 1]} : vector<8x96xf32> to vector<8x32xf32>
    %22 = vector.extract_strided_slice %20 {offsets = [0, 32], sizes = [8, 32], strides = [1, 1]} : vector<8x96xf32> to vector<8x32xf32>
    %23 = vector.extract_strided_slice %20 {offsets = [0, 64], sizes = [8, 32], strides = [1, 1]} : vector<8x96xf32> to vector<8x32xf32>
    %24 = tpu.iota {dimensions = array<i32: 1>} : vector<8x32xi32>
    %cst_17 = arith.constant 0.000000e+00 : f32
    %25 = vector.broadcast %cst_17 : f32 to vector<8x32xf32>
    %26 = vector.extract_strided_slice %21 {offsets = [0, 0], sizes = [8, 16], strides = [1, 1]} : vector<8x32xf32> to vector<8x16xf32>
    %27 = arith.truncf %26 : vector<8x16xf32> to vector<8x16xbf16>
    %28 = vector.extract_strided_slice %22 {offsets = [0, 0], sizes = [8, 16], strides = [1, 1]} : vector<8x32xf32> to vector<8x16xf32>
    %29 = arith.truncf %28 : vector<8x16xf32> to vector<8x16xbf16>
    %cst_18 = arith.constant dense<0.000000e+00> : vector<8x8xf32>
    %30 = tpu.matmul %27, %29, %cst_18 {dimension_numbers = #tpu.dot_dimension_numbers<[1], [1], [0], [0], [0, 0, 1, 0], [], []>} : vector<8x16xbf16>, vector<8x16xbf16>, vector<8x8xf32> -> vector<8x8xf32>
    %cst_19 = arith.constant dense<0xFF800000> : vector<8xf32>
    %31 = vector.multi_reduction <maximumf>, %30, %cst_19 [1] : vector<8x8xf32> to vector<8xf32>
    %32 = vector.shape_cast %31 : vector<8xf32> to vector<8x1xf32>
    %33 = vector.broadcast %32 : vector<8x1xf32> to vector<8x8xf32>
    %34 = arith.subf %30, %33 : vector<8x8xf32>
    %35 = math.exp %34 : vector<8x8xf32>
    %cst_20 = arith.constant dense<0.000000e+00> : vector<8xf32>
    %36 = vector.multi_reduction <add>, %35, %cst_20 [1] : vector<8x8xf32> to vector<8xf32>
    %37 = vector.shape_cast %36 : vector<8xf32> to vector<8x1xf32>
    %38 = tpu.reciprocal %37 {approx = true} : vector<8x1xf32> -> vector<8x1xf32>
    %39 = vector.broadcast %38 : vector<8x1xf32> to vector<8x8xf32>
    %40 = arith.mulf %35, %39 : vector<8x8xf32>
    %c0_i32 = arith.constant 0 : i32
    %41 = vector.broadcast %c0_i32 : i32 to vector<8x32xi32>
    %42 = arith.cmpi sge, %24, %41 : vector<8x32xi32>
    %c16_i32 = arith.constant 16 : i32
    %43 = vector.broadcast %c16_i32 : i32 to vector<8x32xi32>
    %44 = arith.cmpi slt, %24, %43 : vector<8x32xi32>
    %45 = arith.andi %42, %44 : vector<8x32xi1>
    %cst_21 = arith.constant 0.000000e+00 : f32
    %46 = vector.broadcast %cst_21 : f32 to vector<8x32xf32>
    %47 = arith.select %45, %23, %46 : vector<8x32xi1>, vector<8x32xf32>
    %48 = arith.truncf %40 : vector<8x8xf32> to vector<8x8xbf16>
    %49 = arith.truncf %47 : vector<8x32xf32> to vector<8x32xbf16>
    %cst_22 = arith.constant dense<0.000000e+00> : vector<8x32xf32>
    %50 = tpu.matmul %48, %49, %cst_22 {dimension_numbers = #tpu.dot_dimension_numbers<[1], [0], [0], [1], [0, 0, 1, 1], [], []>} : vector<8x8xbf16>, vector<8x32xbf16>, vector<8x32xf32> -> vector<8x32xf32>
    %51 = arith.addf %25, %50 : vector<8x32xf32>
    %52 = vector.extract_strided_slice %21 {offsets = [0, 16], sizes = [8, 16], strides = [1, 1]} : vector<8x32xf32> to vector<8x16xf32>
    %53 = arith.truncf %52 : vector<8x16xf32> to vector<8x16xbf16>
    %54 = vector.extract_strided_slice %22 {offsets = [0, 16], sizes = [8, 16], strides = [1, 1]} : vector<8x32xf32> to vector<8x16xf32>
    %55 = arith.truncf %54 : vector<8x16xf32> to vector<8x16xbf16>
    %cst_23 = arith.constant dense<0.000000e+00> : vector<8x8xf32>
    %56 = tpu.matmul %53, %55, %cst_23 {dimension_numbers = #tpu.dot_dimension_numbers<[1], [1], [0], [0], [0, 0, 1, 0], [], []>} : vector<8x16xbf16>, vector<8x16xbf16>, vector<8x8xf32> -> vector<8x8xf32>
    %cst_24 = arith.constant dense<0xFF800000> : vector<8xf32>
    %57 = vector.multi_reduction <maximumf>, %56, %cst_24 [1] : vector<8x8xf32> to vector<8xf32>
    %58 = vector.shape_cast %57 : vector<8xf32> to vector<8x1xf32>
    %59 = vector.broadcast %58 : vector<8x1xf32> to vector<8x8xf32>
    %60 = arith.subf %56, %59 : vector<8x8xf32>
    %61 = math.exp %60 : vector<8x8xf32>
    %cst_25 = arith.constant dense<0.000000e+00> : vector<8xf32>
    %62 = vector.multi_reduction <add>, %61, %cst_25 [1] : vector<8x8xf32> to vector<8xf32>
    %63 = vector.shape_cast %62 : vector<8xf32> to vector<8x1xf32>
    %64 = tpu.reciprocal %63 {approx = true} : vector<8x1xf32> -> vector<8x1xf32>
    %65 = vector.broadcast %64 : vector<8x1xf32> to vector<8x8xf32>
    %66 = arith.mulf %61, %65 : vector<8x8xf32>
    %c16_i32_26 = arith.constant 16 : i32
    %67 = vector.broadcast %c16_i32_26 : i32 to vector<8x32xi32>
    %68 = arith.cmpi sge, %24, %67 : vector<8x32xi32>
    %c32_i32 = arith.constant 32 : i32
    %69 = vector.broadcast %c32_i32 : i32 to vector<8x32xi32>
    %70 = arith.cmpi slt, %24, %69 : vector<8x32xi32>
    %71 = arith.andi %68, %70 : vector<8x32xi1>
    %cst_27 = arith.constant 0.000000e+00 : f32
    %72 = vector.broadcast %cst_27 : f32 to vector<8x32xf32>
    %73 = arith.select %71, %23, %72 : vector<8x32xi1>, vector<8x32xf32>
    %74 = arith.truncf %66 : vector<8x8xf32> to vector<8x8xbf16>
    %75 = arith.truncf %73 : vector<8x32xf32> to vector<8x32xbf16>
    %cst_28 = arith.constant dense<0.000000e+00> : vector<8x32xf32>
    %76 = tpu.matmul %74, %75, %cst_28 {dimension_numbers = #tpu.dot_dimension_numbers<[1], [0], [0], [1], [0, 0, 1, 1], [], []>} : vector<8x8xbf16>, vector<8x32xbf16>, vector<8x32xf32> -> vector<8x32xf32>
    %77 = arith.addf %51, %76 : vector<8x32xf32>
    %78 = arith.addf %17, %77 : vector<8x32xf32>
    %cst_29 = arith.constant dense<0.000000e+00> : vector<8xf32>
    %79 = vector.multi_reduction <add>, %78, %cst_29 [1] : vector<8x32xf32> to vector<8xf32>
    %80 = vector.shape_cast %79 : vector<8xf32> to vector<8x1xf32>
    %cst_30 = arith.constant 3.200000e+01 : f32
    %81 = vector.broadcast %cst_30 : f32 to vector<8x1xf32>
    %82 = arith.divf %80, %81 : vector<8x1xf32>
    %83 = vector.broadcast %82 : vector<8x1xf32> to vector<8x32xf32>
    %84 = arith.subf %78, %83 : vector<8x32xf32>
    %85 = arith.mulf %84, %84 : vector<8x32xf32>
    %cst_31 = arith.constant dense<0.000000e+00> : vector<8xf32>
    %86 = vector.multi_reduction <add>, %85, %cst_31 [1] : vector<8x32xf32> to vector<8xf32>
    %87 = vector.shape_cast %86 : vector<8xf32> to vector<8x1xf32>
    %cst_32 = arith.constant 3.200000e+01 : f32
    %88 = vector.broadcast %cst_32 : f32 to vector<8x1xf32>
    %89 = arith.divf %87, %88 : vector<8x1xf32>
    %90 = vector.broadcast %82 : vector<8x1xf32> to vector<8x32xf32>
    %91 = arith.subf %78, %90 : vector<8x32xf32>
    %cst_33 = arith.constant 9.99999974E-6 : f32
    %92 = vector.broadcast %cst_33 : f32 to vector<8x1xf32>
    %93 = arith.addf %89, %92 : vector<8x1xf32>
    %94 = math.rsqrt %93 : vector<8x1xf32>
    %95 = vector.broadcast %94 : vector<8x1xf32> to vector<8x32xf32>
    %96 = arith.mulf %91, %95 : vector<8x32xf32>
    %c0_34 = arith.constant 0 : index
    %c0_35 = arith.constant 0 : index
    %97 = vector.load %arg36[%c0_34, %c0_35] : memref<1x32xf32, #tpu.memory_space<vmem>>, vector<1x32xf32>
    %98 = vector.broadcast %97 : vector<1x32xf32> to vector<8x32xf32>
    %99 = arith.mulf %96, %98 : vector<8x32xf32>
    %c0_36 = arith.constant 0 : index
    %c0_37 = arith.constant 0 : index
    %100 = vector.load %arg37[%c0_36, %c0_37] : memref<1x32xf32, #tpu.memory_space<vmem>>, vector<1x32xf32>
    %101 = vector.broadcast %100 : vector<1x32xf32> to vector<8x32xf32>
    %102 = arith.addf %99, %101 : vector<8x32xf32>
    %103 = arith.truncf %102 : vector<8x32xf32> to vector<8x32xbf16>
    %c0_38 = arith.constant 0 : index
    %c0_39 = arith.constant 0 : index
    %104 = vector.load %arg30[%c0_38, %c0_39] : memref<32x32xbf16, #tpu.memory_space<vmem>>, vector<32x32xbf16>
    %cst_40 = arith.constant dense<0.000000e+00> : vector<8x32xf32>
    %105 = tpu.matmul %103, %104, %cst_40 {dimension_numbers = #tpu.dot_dimension_numbers<[1], [0], [0], [1], [0, 0, 1, 1], [], []>} : vector<8x32xbf16>, vector<32x32xbf16>, vector<8x32xf32> -> vector<8x32xf32>
    %c0_41 = arith.constant 0 : index
    %c0_42 = arith.constant 0 : index
    %106 = vector.load %arg31[%c0_41, %c0_42] : memref<1x32xf32, #tpu.memory_space<vmem>>, vector<1x32xf32>
    %107 = vector.broadcast %106 : vector<1x32xf32> to vector<8x32xf32>
    %108 = arith.addf %105, %107 : vector<8x32xf32>
    %cst_43 = arith.constant 0.000000e+00 : f32
    %109 = vector.broadcast %cst_43 : f32 to vector<8x32xf32>
    %110 = arith.maximumf %108, %109 : vector<8x32xf32>
    %111 = arith.addf %102, %110 : vector<8x32xf32>
    %cst_44 = arith.constant dense<0.000000e+00> : vector<8xf32>
    %112 = vector.multi_reduction <add>, %111, %cst_44 [1] : vector<8x32xf32> to vector<8xf32>
    %113 = vector.shape_cast %112 : vector<8xf32> to vector<8x1xf32>
    %cst_45 = arith.constant 3.200000e+01 : f32
    %114 = vector.broadcast %cst_45 : f32 to vector<8x1xf32>
    %115 = arith.divf %113, %114 : vector<8x1xf32>
    %116 = vector.broadcast %115 : vector<8x1xf32> to vector<8x32xf32>
    %117 = arith.subf %111, %116 : vector<8x32xf32>
    %118 = arith.mulf %117, %117 : vector<8x32xf32>
    %cst_46 = arith.constant dense<0.000000e+00> : vector<8xf32>
    %119 = vector.multi_reduction <add>, %118, %cst_46 [1] : vector<8x32xf32> to vector<8xf32>
    %120 = vector.shape_cast %119 : vector<8xf32> to vector<8x1xf32>
    %cst_47 = arith.constant 3.200000e+01 : f32
    %121 = vector.broadcast %cst_47 : f32 to vector<8x1xf32>
    %122 = arith.divf %120, %121 : vector<8x1xf32>
    %123 = vector.broadcast %115 : vector<8x1xf32> to vector<8x32xf32>
    %124 = arith.subf %111, %123 : vector<8x32xf32>
    %cst_48 = arith.constant 9.99999974E-6 : f32
    %125 = vector.broadcast %cst_48 : f32 to vector<8x1xf32>
    %126 = arith.addf %122, %125 : vector<8x1xf32>
    %127 = math.rsqrt %126 : vector<8x1xf32>
    %128 = vector.broadcast %127 : vector<8x1xf32> to vector<8x32xf32>
    %129 = arith.mulf %124, %128 : vector<8x32xf32>
    %c0_49 = arith.constant 0 : index
    %c0_50 = arith.constant 0 : index
    %130 = vector.load %arg34[%c0_49, %c0_50] : memref<1x32xf32, #tpu.memory_space<vmem>>, vector<1x32xf32>
    %131 = vector.broadcast %130 : vector<1x32xf32> to vector<8x32xf32>
    %132 = arith.mulf %129, %131 : vector<8x32xf32>
    %c0_51 = arith.constant 0 : index
    %c0_52 = arith.constant 0 : index
    %133 = vector.load %arg35[%c0_51, %c0_52] : memref<1x32xf32, #tpu.memory_space<vmem>>, vector<1x32xf32>
    %134 = vector.broadcast %133 : vector<1x32xf32> to vector<8x32xf32>
    %135 = arith.addf %132, %134 : vector<8x32xf32>
    %136 = arith.truncf %135 : vector<8x32xf32> to vector<8x32xbf16>
    %c0_53 = arith.constant 0 : index
    %c0_54 = arith.constant 0 : index
    %137 = vector.load %arg32[%c0_53, %c0_54] : memref<32x64xbf16, #tpu.memory_space<vmem>>, vector<32x64xbf16>
    %cst_55 = arith.constant dense<0.000000e+00> : vector<8x64xf32>
    %138 = tpu.matmul %136, %137, %cst_55 {dimension_numbers = #tpu.dot_dimension_numbers<[1], [0], [0], [1], [0, 0, 1, 1], [], []>} : vector<8x32xbf16>, vector<32x64xbf16>, vector<8x64xf32> -> vector<8x64xf32>
    %c0_56 = arith.constant 0 : index
    %c0_57 = arith.constant 0 : index
    %c0_58 = arith.constant 0 : index
    %139 = vector.load %arg40[%c0_56, %c0_57, %c0_58] : memref<1x7x4xf32, #tpu.memory_space<vmem>>, vector<1x7x4xf32>
    %140 = vector.shape_cast %139 : vector<1x7x4xf32> to vector<7x4xf32>
    %141 = arith.truncf %140 : vector<7x4xf32> to vector<7x4xbf16>
    %c0_59 = arith.constant 0 : index
    %c0_60 = arith.constant 0 : index
    %142 = vector.load %arg1[%c0_59, %c0_60] : memref<4x32xbf16, #tpu.memory_space<vmem>>, vector<4x32xbf16>
    %cst_61 = arith.constant dense<0.000000e+00> : vector<7x32xf32>
    %143 = tpu.matmul %141, %142, %cst_61 {dimension_numbers = #tpu.dot_dimension_numbers<[1], [0], [0], [1], [0, 0, 1, 1], [], []>} : vector<7x4xbf16>, vector<4x32xbf16>, vector<7x32xf32> -> vector<7x32xf32>
    %c0_62 = arith.constant 0 : index
    %c0_63 = arith.constant 0 : index
    %144 = vector.load %arg2[%c0_62, %c0_63] : memref<1x32xf32, #tpu.memory_space<vmem>>, vector<1x32xf32>
    %145 = vector.broadcast %144 : vector<1x32xf32> to vector<7x32xf32>
    %146 = arith.addf %143, %145 : vector<7x32xf32>
    %cst_64 = arith.constant 0.000000e+00 : f32
    %147 = vector.broadcast %cst_64 : f32 to vector<7x32xf32>
    %148 = arith.maximumf %146, %147 : vector<7x32xf32>
    %149 = arith.truncf %148 : vector<7x32xf32> to vector<7x32xbf16>
    %c0_65 = arith.constant 0 : index
    %c0_66 = arith.constant 0 : index
    %150 = vector.load %arg3[%c0_65, %c0_66] : memref<32x32xbf16, #tpu.memory_space<vmem>>, vector<32x32xbf16>
    %cst_67 = arith.constant dense<0.000000e+00> : vector<7x32xf32>
    %151 = tpu.matmul %149, %150, %cst_67 {dimension_numbers = #tpu.dot_dimension_numbers<[1], [0], [0], [1], [0, 0, 1, 1], [], []>} : vector<7x32xbf16>, vector<32x32xbf16>, vector<7x32xf32> -> vector<7x32xf32>
    %c0_68 = arith.constant 0 : index
    %c0_69 = arith.constant 0 : index
    %152 = vector.load %arg4[%c0_68, %c0_69] : memref<1x32xf32, #tpu.memory_space<vmem>>, vector<1x32xf32>
    %153 = vector.broadcast %152 : vector<1x32xf32> to vector<7x32xf32>
    %154 = arith.addf %151, %153 : vector<7x32xf32>
    %c0_70 = arith.constant 0 : index
    %c0_71 = arith.constant 0 : index
    %155 = vector.load %arg25[%c0_70, %c0_71] : memref<7x32xf32, #tpu.memory_space<vmem>>, vector<7x32xf32>
    %156 = arith.addf %154, %155 : vector<7x32xf32>
    %157 = arith.truncf %156 : vector<7x32xf32> to vector<7x32xbf16>
    %c0_72 = arith.constant 0 : index
    %c0_73 = arith.constant 0 : index
    %158 = vector.load %arg11[%c0_72, %c0_73] : memref<32x96xbf16, #tpu.memory_space<vmem>>, vector<32x96xbf16>
    %cst_74 = arith.constant dense<0.000000e+00> : vector<7x96xf32>
    %159 = tpu.matmul %157, %158, %cst_74 {dimension_numbers = #tpu.dot_dimension_numbers<[1], [0], [0], [1], [0, 0, 1, 1], [], []>} : vector<7x32xbf16>, vector<32x96xbf16>, vector<7x96xf32> -> vector<7x96xf32>
    %160 = tpu.iota {dimensions = array<i32: 0>} : vector<7x7xi32>
    %161 = tpu.iota {dimensions = array<i32: 1>} : vector<7x7xi32>
    %162 = arith.cmpi sgt, %161, %160 : vector<7x7xi32>
    %cst_75 = arith.constant -1.000000e+30 : f32
    %cst_76 = arith.constant 0.000000e+00 : f32
    %163 = vector.broadcast %cst_75 : f32 to vector<7x7xf32>
    %164 = vector.broadcast %cst_76 : f32 to vector<7x7xf32>
    %165 = arith.select %162, %163, %164 : vector<7x7xi1>, vector<7x7xf32>
    %166 = vector.extract_strided_slice %159 {offsets = [0, 0], sizes = [7, 32], strides = [1, 1]} : vector<7x96xf32> to vector<7x32xf32>
    %167 = vector.extract_strided_slice %159 {offsets = [0, 32], sizes = [7, 32], strides = [1, 1]} : vector<7x96xf32> to vector<7x32xf32>
    %168 = vector.extract_strided_slice %159 {offsets = [0, 64], sizes = [7, 32], strides = [1, 1]} : vector<7x96xf32> to vector<7x32xf32>
    %169 = tpu.iota {dimensions = array<i32: 1>} : vector<7x32xi32>
    %cst_77 = arith.constant 0.000000e+00 : f32
    %170 = vector.broadcast %cst_77 : f32 to vector<7x32xf32>
    %171 = vector.extract_strided_slice %166 {offsets = [0, 0], sizes = [7, 16], strides = [1, 1]} : vector<7x32xf32> to vector<7x16xf32>
    %172 = arith.truncf %171 : vector<7x16xf32> to vector<7x16xbf16>
    %173 = vector.extract_strided_slice %167 {offsets = [0, 0], sizes = [7, 16], strides = [1, 1]} : vector<7x32xf32> to vector<7x16xf32>
    %174 = arith.truncf %173 : vector<7x16xf32> to vector<7x16xbf16>
    %cst_78 = arith.constant dense<0.000000e+00> : vector<7x7xf32>
    %175 = tpu.matmul %172, %174, %cst_78 {dimension_numbers = #tpu.dot_dimension_numbers<[1], [1], [0], [0], [0, 0, 1, 0], [], []>} : vector<7x16xbf16>, vector<7x16xbf16>, vector<7x7xf32> -> vector<7x7xf32>
    %176 = arith.addf %175, %165 : vector<7x7xf32>
    %cst_79 = arith.constant dense<0xFF800000> : vector<7xf32>
    %177 = vector.multi_reduction <maximumf>, %176, %cst_79 [1] : vector<7x7xf32> to vector<7xf32>
    %178 = vector.shape_cast %177 : vector<7xf32> to vector<7x1xf32>
    %179 = vector.broadcast %178 : vector<7x1xf32> to vector<7x7xf32>
    %180 = arith.subf %176, %179 : vector<7x7xf32>
    %181 = math.exp %180 : vector<7x7xf32>
    %cst_80 = arith.constant dense<0.000000e+00> : vector<7xf32>
    %182 = vector.multi_reduction <add>, %181, %cst_80 [1] : vector<7x7xf32> to vector<7xf32>
    %183 = vector.shape_cast %182 : vector<7xf32> to vector<7x1xf32>
    %184 = tpu.reciprocal %183 {approx = true} : vector<7x1xf32> -> vector<7x1xf32>
    %185 = vector.broadcast %184 : vector<7x1xf32> to vector<7x7xf32>
    %186 = arith.mulf %181, %185 : vector<7x7xf32>
    %c0_i32_81 = arith.constant 0 : i32
    %187 = vector.broadcast %c0_i32_81 : i32 to vector<7x32xi32>
    %188 = arith.cmpi sge, %169, %187 : vector<7x32xi32>
    %c16_i32_82 = arith.constant 16 : i32
    %189 = vector.broadcast %c16_i32_82 : i32 to vector<7x32xi32>
    %190 = arith.cmpi slt, %169, %189 : vector<7x32xi32>
    %191 = arith.andi %188, %190 : vector<7x32xi1>
    %cst_83 = arith.constant 0.000000e+00 : f32
    %192 = vector.broadcast %cst_83 : f32 to vector<7x32xf32>
    %193 = arith.select %191, %168, %192 : vector<7x32xi1>, vector<7x32xf32>
    %194 = arith.truncf %186 : vector<7x7xf32> to vector<7x7xbf16>
    %195 = arith.truncf %193 : vector<7x32xf32> to vector<7x32xbf16>
    %cst_84 = arith.constant dense<0.000000e+00> : vector<7x32xf32>
    %196 = tpu.matmul %194, %195, %cst_84 {dimension_numbers = #tpu.dot_dimension_numbers<[1], [0], [0], [1], [0, 0, 1, 1], [], []>} : vector<7x7xbf16>, vector<7x32xbf16>, vector<7x32xf32> -> vector<7x32xf32>
    %197 = arith.addf %170, %196 : vector<7x32xf32>
    %198 = vector.extract_strided_slice %166 {offsets = [0, 16], sizes = [7, 16], strides = [1, 1]} : vector<7x32xf32> to vector<7x16xf32>
    %199 = arith.truncf %198 : vector<7x16xf32> to vector<7x16xbf16>
    %200 = vector.extract_strided_slice %167 {offsets = [0, 16], sizes = [7, 16], strides = [1, 1]} : vector<7x32xf32> to vector<7x16xf32>
    %201 = arith.truncf %200 : vector<7x16xf32> to vector<7x16xbf16>
    %cst_85 = arith.constant dense<0.000000e+00> : vector<7x7xf32>
    %202 = tpu.matmul %199, %201, %cst_85 {dimension_numbers = #tpu.dot_dimension_numbers<[1], [1], [0], [0], [0, 0, 1, 0], [], []>} : vector<7x16xbf16>, vector<7x16xbf16>, vector<7x7xf32> -> vector<7x7xf32>
    %203 = arith.addf %202, %165 : vector<7x7xf32>
    %cst_86 = arith.constant dense<0xFF800000> : vector<7xf32>
    %204 = vector.multi_reduction <maximumf>, %203, %cst_86 [1] : vector<7x7xf32> to vector<7xf32>
    %205 = vector.shape_cast %204 : vector<7xf32> to vector<7x1xf32>
    %206 = vector.broadcast %205 : vector<7x1xf32> to vector<7x7xf32>
    %207 = arith.subf %203, %206 : vector<7x7xf32>
    %208 = math.exp %207 : vector<7x7xf32>
    %cst_87 = arith.constant dense<0.000000e+00> : vector<7xf32>
    %209 = vector.multi_reduction <add>, %208, %cst_87 [1] : vector<7x7xf32> to vector<7xf32>
    %210 = vector.shape_cast %209 : vector<7xf32> to vector<7x1xf32>
    %211 = tpu.reciprocal %210 {approx = true} : vector<7x1xf32> -> vector<7x1xf32>
    %212 = vector.broadcast %211 : vector<7x1xf32> to vector<7x7xf32>
    %213 = arith.mulf %208, %212 : vector<7x7xf32>
    %c16_i32_88 = arith.constant 16 : i32
    %214 = vector.broadcast %c16_i32_88 : i32 to vector<7x32xi32>
    %215 = arith.cmpi sge, %169, %214 : vector<7x32xi32>
    %c32_i32_89 = arith.constant 32 : i32
    %216 = vector.broadcast %c32_i32_89 : i32 to vector<7x32xi32>
    %217 = arith.cmpi slt, %169, %216 : vector<7x32xi32>
    %218 = arith.andi %215, %217 : vector<7x32xi1>
    %cst_90 = arith.constant 0.000000e+00 : f32
    %219 = vector.broadcast %cst_90 : f32 to vector<7x32xf32>
    %220 = arith.select %218, %168, %219 : vector<7x32xi1>, vector<7x32xf32>
    %221 = arith.truncf %213 : vector<7x7xf32> to vector<7x7xbf16>
    %222 = arith.truncf %220 : vector<7x32xf32> to vector<7x32xbf16>
    %cst_91 = arith.constant dense<0.000000e+00> : vector<7x32xf32>
    %223 = tpu.matmul %221, %222, %cst_91 {dimension_numbers = #tpu.dot_dimension_numbers<[1], [0], [0], [1], [0, 0, 1, 1], [], []>} : vector<7x7xbf16>, vector<7x32xbf16>, vector<7x32xf32> -> vector<7x32xf32>
    %224 = arith.addf %197, %223 : vector<7x32xf32>
    %225 = arith.addf %156, %224 : vector<7x32xf32>
    %cst_92 = arith.constant dense<0.000000e+00> : vector<7xf32>
    %226 = vector.multi_reduction <add>, %225, %cst_92 [1] : vector<7x32xf32> to vector<7xf32>
    %227 = vector.shape_cast %226 : vector<7xf32> to vector<7x1xf32>
    %cst_93 = arith.constant 3.200000e+01 : f32
    %228 = vector.broadcast %cst_93 : f32 to vector<7x1xf32>
    %229 = arith.divf %227, %228 : vector<7x1xf32>
    %230 = vector.broadcast %229 : vector<7x1xf32> to vector<7x32xf32>
    %231 = arith.subf %225, %230 : vector<7x32xf32>
    %232 = arith.mulf %231, %231 : vector<7x32xf32>
    %cst_94 = arith.constant dense<0.000000e+00> : vector<7xf32>
    %233 = vector.multi_reduction <add>, %232, %cst_94 [1] : vector<7x32xf32> to vector<7xf32>
    %234 = vector.shape_cast %233 : vector<7xf32> to vector<7x1xf32>
    %cst_95 = arith.constant 3.200000e+01 : f32
    %235 = vector.broadcast %cst_95 : f32 to vector<7x1xf32>
    %236 = arith.divf %234, %235 : vector<7x1xf32>
    %237 = vector.broadcast %229 : vector<7x1xf32> to vector<7x32xf32>
    %238 = arith.subf %225, %237 : vector<7x32xf32>
    %cst_96 = arith.constant 9.99999974E-6 : f32
    %239 = vector.broadcast %cst_96 : f32 to vector<7x1xf32>
    %240 = arith.addf %236, %239 : vector<7x1xf32>
    %241 = math.rsqrt %240 : vector<7x1xf32>
    %242 = vector.broadcast %241 : vector<7x1xf32> to vector<7x32xf32>
    %243 = arith.mulf %238, %242 : vector<7x32xf32>
    %c0_97 = arith.constant 0 : index
    %c0_98 = arith.constant 0 : index
    %244 = vector.load %arg17[%c0_97, %c0_98] : memref<1x32xf32, #tpu.memory_space<vmem>>, vector<1x32xf32>
    %245 = vector.broadcast %244 : vector<1x32xf32> to vector<7x32xf32>
    %246 = arith.mulf %243, %245 : vector<7x32xf32>
    %c0_99 = arith.constant 0 : index
    %c0_100 = arith.constant 0 : index
    %247 = vector.load %arg18[%c0_99, %c0_100] : memref<1x32xf32, #tpu.memory_space<vmem>>, vector<1x32xf32>
    %248 = vector.broadcast %247 : vector<1x32xf32> to vector<7x32xf32>
    %249 = arith.addf %246, %248 : vector<7x32xf32>
    %250 = arith.truncf %249 : vector<7x32xf32> to vector<7x32xbf16>
    %c0_101 = arith.constant 0 : index
    %c0_102 = arith.constant 0 : index
    %251 = vector.load %arg13[%c0_101, %c0_102] : memref<32x32xbf16, #tpu.memory_space<vmem>>, vector<32x32xbf16>
    %cst_103 = arith.constant dense<0.000000e+00> : vector<7x32xf32>
    %252 = tpu.matmul %250, %251, %cst_103 {dimension_numbers = #tpu.dot_dimension_numbers<[1], [0], [0], [1], [0, 0, 1, 1], [], []>} : vector<7x32xbf16>, vector<32x32xbf16>, vector<7x32xf32> -> vector<7x32xf32>
    %253 = vector.extract_strided_slice %138 {offsets = [0, 0], sizes = [8, 32], strides = [1, 1]} : vector<8x64xf32> to vector<8x32xf32>
    %254 = vector.extract_strided_slice %138 {offsets = [0, 32], sizes = [8, 32], strides = [1, 1]} : vector<8x64xf32> to vector<8x32xf32>
    %255 = tpu.iota {dimensions = array<i32: 0>} : vector<7x8xi32>
    %256 = tpu.iota {dimensions = array<i32: 1>} : vector<7x8xi32>
    %257 = arith.cmpi sgt, %256, %255 : vector<7x8xi32>
    %cst_104 = arith.constant -1.000000e+30 : f32
    %cst_105 = arith.constant 0.000000e+00 : f32
    %258 = vector.broadcast %cst_104 : f32 to vector<7x8xf32>
    %259 = vector.broadcast %cst_105 : f32 to vector<7x8xf32>
    %260 = arith.select %257, %258, %259 : vector<7x8xi1>, vector<7x8xf32>
    %261 = tpu.iota {dimensions = array<i32: 1>} : vector<8x32xi32>
    %cst_106 = arith.constant 0.000000e+00 : f32
    %262 = vector.broadcast %cst_106 : f32 to vector<7x32xf32>
    %263 = vector.extract_strided_slice %252 {offsets = [0, 0], sizes = [7, 16], strides = [1, 1]} : vector<7x32xf32> to vector<7x16xf32>
    %264 = arith.truncf %263 : vector<7x16xf32> to vector<7x16xbf16>
    %265 = vector.extract_strided_slice %253 {offsets = [0, 0], sizes = [8, 16], strides = [1, 1]} : vector<8x32xf32> to vector<8x16xf32>
    %266 = arith.truncf %265 : vector<8x16xf32> to vector<8x16xbf16>
    %cst_107 = arith.constant dense<0.000000e+00> : vector<7x8xf32>
    %267 = tpu.matmul %264, %266, %cst_107 {dimension_numbers = #tpu.dot_dimension_numbers<[1], [1], [0], [0], [0, 0, 1, 0], [], []>} : vector<7x16xbf16>, vector<8x16xbf16>, vector<7x8xf32> -> vector<7x8xf32>
    %268 = arith.addf %267, %260 : vector<7x8xf32>
    %cst_108 = arith.constant dense<0xFF800000> : vector<7xf32>
    %269 = vector.multi_reduction <maximumf>, %268, %cst_108 [1] : vector<7x8xf32> to vector<7xf32>
    %270 = vector.shape_cast %269 : vector<7xf32> to vector<7x1xf32>
    %271 = vector.broadcast %270 : vector<7x1xf32> to vector<7x8xf32>
    %272 = arith.subf %268, %271 : vector<7x8xf32>
    %273 = math.exp %272 : vector<7x8xf32>
    %cst_109 = arith.constant dense<0.000000e+00> : vector<7xf32>
    %274 = vector.multi_reduction <add>, %273, %cst_109 [1] : vector<7x8xf32> to vector<7xf32>
    %275 = vector.shape_cast %274 : vector<7xf32> to vector<7x1xf32>
    %276 = tpu.reciprocal %275 {approx = true} : vector<7x1xf32> -> vector<7x1xf32>
    %277 = vector.broadcast %276 : vector<7x1xf32> to vector<7x8xf32>
    %278 = arith.mulf %273, %277 : vector<7x8xf32>
    %c0_i32_110 = arith.constant 0 : i32
    %279 = vector.broadcast %c0_i32_110 : i32 to vector<8x32xi32>
    %280 = arith.cmpi sge, %261, %279 : vector<8x32xi32>
    %c16_i32_111 = arith.constant 16 : i32
    %281 = vector.broadcast %c16_i32_111 : i32 to vector<8x32xi32>
    %282 = arith.cmpi slt, %261, %281 : vector<8x32xi32>
    %283 = arith.andi %280, %282 : vector<8x32xi1>
    %cst_112 = arith.constant 0.000000e+00 : f32
    %284 = vector.broadcast %cst_112 : f32 to vector<8x32xf32>
    %285 = arith.select %283, %254, %284 : vector<8x32xi1>, vector<8x32xf32>
    %286 = arith.truncf %278 : vector<7x8xf32> to vector<7x8xbf16>
    %287 = arith.truncf %285 : vector<8x32xf32> to vector<8x32xbf16>
    %cst_113 = arith.constant dense<0.000000e+00> : vector<7x32xf32>
    %288 = tpu.matmul %286, %287, %cst_113 {dimension_numbers = #tpu.dot_dimension_numbers<[1], [0], [0], [1], [0, 0, 1, 1], [], []>} : vector<7x8xbf16>, vector<8x32xbf16>, vector<7x32xf32> -> vector<7x32xf32>
    %289 = arith.addf %262, %288 : vector<7x32xf32>
    %290 = vector.extract_strided_slice %252 {offsets = [0, 16], sizes = [7, 16], strides = [1, 1]} : vector<7x32xf32> to vector<7x16xf32>
    %291 = arith.truncf %290 : vector<7x16xf32> to vector<7x16xbf16>
    %292 = vector.extract_strided_slice %253 {offsets = [0, 16], sizes = [8, 16], strides = [1, 1]} : vector<8x32xf32> to vector<8x16xf32>
    %293 = arith.truncf %292 : vector<8x16xf32> to vector<8x16xbf16>
    %cst_114 = arith.constant dense<0.000000e+00> : vector<7x8xf32>
    %294 = tpu.matmul %291, %293, %cst_114 {dimension_numbers = #tpu.dot_dimension_numbers<[1], [1], [0], [0], [0, 0, 1, 0], [], []>} : vector<7x16xbf16>, vector<8x16xbf16>, vector<7x8xf32> -> vector<7x8xf32>
    %295 = arith.addf %294, %260 : vector<7x8xf32>
    %cst_115 = arith.constant dense<0xFF800000> : vector<7xf32>
    %296 = vector.multi_reduction <maximumf>, %295, %cst_115 [1] : vector<7x8xf32> to vector<7xf32>
    %297 = vector.shape_cast %296 : vector<7xf32> to vector<7x1xf32>
    %298 = vector.broadcast %297 : vector<7x1xf32> to vector<7x8xf32>
    %299 = arith.subf %295, %298 : vector<7x8xf32>
    %300 = math.exp %299 : vector<7x8xf32>
    %cst_116 = arith.constant dense<0.000000e+00> : vector<7xf32>
    %301 = vector.multi_reduction <add>, %300, %cst_116 [1] : vector<7x8xf32> to vector<7xf32>
    %302 = vector.shape_cast %301 : vector<7xf32> to vector<7x1xf32>
    %303 = tpu.reciprocal %302 {approx = true} : vector<7x1xf32> -> vector<7x1xf32>
    %304 = vector.broadcast %303 : vector<7x1xf32> to vector<7x8xf32>
    %305 = arith.mulf %300, %304 : vector<7x8xf32>
    %c16_i32_117 = arith.constant 16 : i32
    %306 = vector.broadcast %c16_i32_117 : i32 to vector<8x32xi32>
    %307 = arith.cmpi sge, %261, %306 : vector<8x32xi32>
    %c32_i32_118 = arith.constant 32 : i32
    %308 = vector.broadcast %c32_i32_118 : i32 to vector<8x32xi32>
    %309 = arith.cmpi slt, %261, %308 : vector<8x32xi32>
    %310 = arith.andi %307, %309 : vector<8x32xi1>
    %cst_119 = arith.constant 0.000000e+00 : f32
    %311 = vector.broadcast %cst_119 : f32 to vector<8x32xf32>
    %312 = arith.select %310, %254, %311 : vector<8x32xi1>, vector<8x32xf32>
    %313 = arith.truncf %305 : vector<7x8xf32> to vector<7x8xbf16>
    %314 = arith.truncf %312 : vector<8x32xf32> to vector<8x32xbf16>
    %cst_120 = arith.constant dense<0.000000e+00> : vector<7x32xf32>
    %315 = tpu.matmul %313, %314, %cst_120 {dimension_numbers = #tpu.dot_dimension_numbers<[1], [0], [0], [1], [0, 0, 1, 1], [], []>} : vector<7x8xbf16>, vector<8x32xbf16>, vector<7x32xf32> -> vector<7x32xf32>
    %316 = arith.addf %289, %315 : vector<7x32xf32>
    %317 = arith.addf %249, %316 : vector<7x32xf32>
    %cst_121 = arith.constant dense<0.000000e+00> : vector<7xf32>
    %318 = vector.multi_reduction <add>, %317, %cst_121 [1] : vector<7x32xf32> to vector<7xf32>
    %319 = vector.shape_cast %318 : vector<7xf32> to vector<7x1xf32>
    %cst_122 = arith.constant 3.200000e+01 : f32
    %320 = vector.broadcast %cst_122 : f32 to vector<7x1xf32>
    %321 = arith.divf %319, %320 : vector<7x1xf32>
    %322 = vector.broadcast %321 : vector<7x1xf32> to vector<7x32xf32>
    %323 = arith.subf %317, %322 : vector<7x32xf32>
    %324 = arith.mulf %323, %323 : vector<7x32xf32>
    %cst_123 = arith.constant dense<0.000000e+00> : vector<7xf32>
    %325 = vector.multi_reduction <add>, %324, %cst_123 [1] : vector<7x32xf32> to vector<7xf32>
    %326 = vector.shape_cast %325 : vector<7xf32> to vector<7x1xf32>
    %cst_124 = arith.constant 3.200000e+01 : f32
    %327 = vector.broadcast %cst_124 : f32 to vector<7x1xf32>
    %328 = arith.divf %326, %327 : vector<7x1xf32>
    %329 = vector.broadcast %321 : vector<7x1xf32> to vector<7x32xf32>
    %330 = arith.subf %317, %329 : vector<7x32xf32>
    %cst_125 = arith.constant 9.99999974E-6 : f32
    %331 = vector.broadcast %cst_125 : f32 to vector<7x1xf32>
    %332 = arith.addf %328, %331 : vector<7x1xf32>
    %333 = math.rsqrt %332 : vector<7x1xf32>
    %334 = vector.broadcast %333 : vector<7x1xf32> to vector<7x32xf32>
    %335 = arith.mulf %330, %334 : vector<7x32xf32>
    %c0_126 = arith.constant 0 : index
    %c0_127 = arith.constant 0 : index
    %336 = vector.load %arg21[%c0_126, %c0_127] : memref<1x32xf32, #tpu.memory_space<vmem>>, vector<1x32xf32>
    %337 = vector.broadcast %336 : vector<1x32xf32> to vector<7x32xf32>
    %338 = arith.mulf %335, %337 : vector<7x32xf32>
    %c0_128 = arith.constant 0 : index
    %c0_129 = arith.constant 0 : index
    %339 = vector.load %arg22[%c0_128, %c0_129] : memref<1x32xf32, #tpu.memory_space<vmem>>, vector<1x32xf32>
    %340 = vector.broadcast %339 : vector<1x32xf32> to vector<7x32xf32>
    %341 = arith.addf %338, %340 : vector<7x32xf32>
    %342 = arith.truncf %341 : vector<7x32xf32> to vector<7x32xbf16>
    %c0_130 = arith.constant 0 : index
    %c0_131 = arith.constant 0 : index
    %343 = vector.load %arg5[%c0_130, %c0_131] : memref<32x32xbf16, #tpu.memory_space<vmem>>, vector<32x32xbf16>
    %cst_132 = arith.constant dense<0.000000e+00> : vector<7x32xf32>
    %344 = tpu.matmul %342, %343, %cst_132 {dimension_numbers = #tpu.dot_dimension_numbers<[1], [0], [0], [1], [0, 0, 1, 1], [], []>} : vector<7x32xbf16>, vector<32x32xbf16>, vector<7x32xf32> -> vector<7x32xf32>
    %c0_133 = arith.constant 0 : index
    %c0_134 = arith.constant 0 : index
    %345 = vector.load %arg6[%c0_133, %c0_134] : memref<1x32xf32, #tpu.memory_space<vmem>>, vector<1x32xf32>
    %346 = vector.broadcast %345 : vector<1x32xf32> to vector<7x32xf32>
    %347 = arith.addf %344, %346 : vector<7x32xf32>
    %cst_135 = arith.constant 0.000000e+00 : f32
    %348 = vector.broadcast %cst_135 : f32 to vector<7x32xf32>
    %349 = arith.maximumf %347, %348 : vector<7x32xf32>
    %350 = arith.addf %349, %341 : vector<7x32xf32>
    %cst_136 = arith.constant dense<0.000000e+00> : vector<7xf32>
    %351 = vector.multi_reduction <add>, %350, %cst_136 [1] : vector<7x32xf32> to vector<7xf32>
    %352 = vector.shape_cast %351 : vector<7xf32> to vector<7x1xf32>
    %cst_137 = arith.constant 3.200000e+01 : f32
    %353 = vector.broadcast %cst_137 : f32 to vector<7x1xf32>
    %354 = arith.divf %352, %353 : vector<7x1xf32>
    %355 = vector.broadcast %354 : vector<7x1xf32> to vector<7x32xf32>
    %356 = arith.subf %350, %355 : vector<7x32xf32>
    %357 = arith.mulf %356, %356 : vector<7x32xf32>
    %cst_138 = arith.constant dense<0.000000e+00> : vector<7xf32>
    %358 = vector.multi_reduction <add>, %357, %cst_138 [1] : vector<7x32xf32> to vector<7xf32>
    %359 = vector.shape_cast %358 : vector<7xf32> to vector<7x1xf32>
    %cst_139 = arith.constant 3.200000e+01 : f32
    %360 = vector.broadcast %cst_139 : f32 to vector<7x1xf32>
    %361 = arith.divf %359, %360 : vector<7x1xf32>
    %362 = vector.broadcast %354 : vector<7x1xf32> to vector<7x32xf32>
    %363 = arith.subf %350, %362 : vector<7x32xf32>
    %cst_140 = arith.constant 9.99999974E-6 : f32
    %364 = vector.broadcast %cst_140 : f32 to vector<7x1xf32>
    %365 = arith.addf %361, %364 : vector<7x1xf32>
    %366 = math.rsqrt %365 : vector<7x1xf32>
    %367 = vector.broadcast %366 : vector<7x1xf32> to vector<7x32xf32>
    %368 = arith.mulf %363, %367 : vector<7x32xf32>
    %c0_141 = arith.constant 0 : index
    %c0_142 = arith.constant 0 : index
    %369 = vector.load %arg15[%c0_141, %c0_142] : memref<1x32xf32, #tpu.memory_space<vmem>>, vector<1x32xf32>
    %370 = vector.broadcast %369 : vector<1x32xf32> to vector<7x32xf32>
    %371 = arith.mulf %368, %370 : vector<7x32xf32>
    %c0_143 = arith.constant 0 : index
    %c0_144 = arith.constant 0 : index
    %372 = vector.load %arg16[%c0_143, %c0_144] : memref<1x32xf32, #tpu.memory_space<vmem>>, vector<1x32xf32>
    %373 = vector.broadcast %372 : vector<1x32xf32> to vector<7x32xf32>
    %374 = arith.addf %371, %373 : vector<7x32xf32>
    %375 = arith.truncf %374 : vector<7x32xf32> to vector<7x32xbf16>
    %c0_145 = arith.constant 0 : index
    %c0_146 = arith.constant 0 : index
    %376 = vector.load %arg12[%c0_145, %c0_146] : memref<32x96xbf16, #tpu.memory_space<vmem>>, vector<32x96xbf16>
    %cst_147 = arith.constant dense<0.000000e+00> : vector<7x96xf32>
    %377 = tpu.matmul %375, %376, %cst_147 {dimension_numbers = #tpu.dot_dimension_numbers<[1], [0], [0], [1], [0, 0, 1, 1], [], []>} : vector<7x32xbf16>, vector<32x96xbf16>, vector<7x96xf32> -> vector<7x96xf32>
    %378 = tpu.iota {dimensions = array<i32: 0>} : vector<7x7xi32>
    %379 = tpu.iota {dimensions = array<i32: 1>} : vector<7x7xi32>
    %380 = arith.cmpi sgt, %379, %378 : vector<7x7xi32>
    %cst_148 = arith.constant -1.000000e+30 : f32
    %cst_149 = arith.constant 0.000000e+00 : f32
    %381 = vector.broadcast %cst_148 : f32 to vector<7x7xf32>
    %382 = vector.broadcast %cst_149 : f32 to vector<7x7xf32>
    %383 = arith.select %380, %381, %382 : vector<7x7xi1>, vector<7x7xf32>
    %384 = vector.extract_strided_slice %377 {offsets = [0, 0], sizes = [7, 32], strides = [1, 1]} : vector<7x96xf32> to vector<7x32xf32>
    %385 = vector.extract_strided_slice %377 {offsets = [0, 32], sizes = [7, 32], strides = [1, 1]} : vector<7x96xf32> to vector<7x32xf32>
    %386 = vector.extract_strided_slice %377 {offsets = [0, 64], sizes = [7, 32], strides = [1, 1]} : vector<7x96xf32> to vector<7x32xf32>
    %387 = tpu.iota {dimensions = array<i32: 1>} : vector<7x32xi32>
    %cst_150 = arith.constant 0.000000e+00 : f32
    %388 = vector.broadcast %cst_150 : f32 to vector<7x32xf32>
    %389 = vector.extract_strided_slice %384 {offsets = [0, 0], sizes = [7, 16], strides = [1, 1]} : vector<7x32xf32> to vector<7x16xf32>
    %390 = arith.truncf %389 : vector<7x16xf32> to vector<7x16xbf16>
    %391 = vector.extract_strided_slice %385 {offsets = [0, 0], sizes = [7, 16], strides = [1, 1]} : vector<7x32xf32> to vector<7x16xf32>
    %392 = arith.truncf %391 : vector<7x16xf32> to vector<7x16xbf16>
    %cst_151 = arith.constant dense<0.000000e+00> : vector<7x7xf32>
    %393 = tpu.matmul %390, %392, %cst_151 {dimension_numbers = #tpu.dot_dimension_numbers<[1], [1], [0], [0], [0, 0, 1, 0], [], []>} : vector<7x16xbf16>, vector<7x16xbf16>, vector<7x7xf32> -> vector<7x7xf32>
    %394 = arith.addf %393, %383 : vector<7x7xf32>
    %cst_152 = arith.constant dense<0xFF800000> : vector<7xf32>
    %395 = vector.multi_reduction <maximumf>, %394, %cst_152 [1] : vector<7x7xf32> to vector<7xf32>
    %396 = vector.shape_cast %395 : vector<7xf32> to vector<7x1xf32>
    %397 = vector.broadcast %396 : vector<7x1xf32> to vector<7x7xf32>
    %398 = arith.subf %394, %397 : vector<7x7xf32>
    %399 = math.exp %398 : vector<7x7xf32>
    %cst_153 = arith.constant dense<0.000000e+00> : vector<7xf32>
    %400 = vector.multi_reduction <add>, %399, %cst_153 [1] : vector<7x7xf32> to vector<7xf32>
    %401 = vector.shape_cast %400 : vector<7xf32> to vector<7x1xf32>
    %402 = tpu.reciprocal %401 {approx = true} : vector<7x1xf32> -> vector<7x1xf32>
    %403 = vector.broadcast %402 : vector<7x1xf32> to vector<7x7xf32>
    %404 = arith.mulf %399, %403 : vector<7x7xf32>
    %c0_i32_154 = arith.constant 0 : i32
    %405 = vector.broadcast %c0_i32_154 : i32 to vector<7x32xi32>
    %406 = arith.cmpi sge, %387, %405 : vector<7x32xi32>
    %c16_i32_155 = arith.constant 16 : i32
    %407 = vector.broadcast %c16_i32_155 : i32 to vector<7x32xi32>
    %408 = arith.cmpi slt, %387, %407 : vector<7x32xi32>
    %409 = arith.andi %406, %408 : vector<7x32xi1>
    %cst_156 = arith.constant 0.000000e+00 : f32
    %410 = vector.broadcast %cst_156 : f32 to vector<7x32xf32>
    %411 = arith.select %409, %386, %410 : vector<7x32xi1>, vector<7x32xf32>
    %412 = arith.truncf %404 : vector<7x7xf32> to vector<7x7xbf16>
    %413 = arith.truncf %411 : vector<7x32xf32> to vector<7x32xbf16>
    %cst_157 = arith.constant dense<0.000000e+00> : vector<7x32xf32>
    %414 = tpu.matmul %412, %413, %cst_157 {dimension_numbers = #tpu.dot_dimension_numbers<[1], [0], [0], [1], [0, 0, 1, 1], [], []>} : vector<7x7xbf16>, vector<7x32xbf16>, vector<7x32xf32> -> vector<7x32xf32>
    %415 = arith.addf %388, %414 : vector<7x32xf32>
    %416 = vector.extract_strided_slice %384 {offsets = [0, 16], sizes = [7, 16], strides = [1, 1]} : vector<7x32xf32> to vector<7x16xf32>
    %417 = arith.truncf %416 : vector<7x16xf32> to vector<7x16xbf16>
    %418 = vector.extract_strided_slice %385 {offsets = [0, 16], sizes = [7, 16], strides = [1, 1]} : vector<7x32xf32> to vector<7x16xf32>
    %419 = arith.truncf %418 : vector<7x16xf32> to vector<7x16xbf16>
    %cst_158 = arith.constant dense<0.000000e+00> : vector<7x7xf32>
    %420 = tpu.matmul %417, %419, %cst_158 {dimension_numbers = #tpu.dot_dimension_numbers<[1], [1], [0], [0], [0, 0, 1, 0], [], []>} : vector<7x16xbf16>, vector<7x16xbf16>, vector<7x7xf32> -> vector<7x7xf32>
    %421 = arith.addf %420, %383 : vector<7x7xf32>
    %cst_159 = arith.constant dense<0xFF800000> : vector<7xf32>
    %422 = vector.multi_reduction <maximumf>, %421, %cst_159 [1] : vector<7x7xf32> to vector<7xf32>
    %423 = vector.shape_cast %422 : vector<7xf32> to vector<7x1xf32>
    %424 = vector.broadcast %423 : vector<7x1xf32> to vector<7x7xf32>
    %425 = arith.subf %421, %424 : vector<7x7xf32>
    %426 = math.exp %425 : vector<7x7xf32>
    %cst_160 = arith.constant dense<0.000000e+00> : vector<7xf32>
    %427 = vector.multi_reduction <add>, %426, %cst_160 [1] : vector<7x7xf32> to vector<7xf32>
    %428 = vector.shape_cast %427 : vector<7xf32> to vector<7x1xf32>
    %429 = tpu.reciprocal %428 {approx = true} : vector<7x1xf32> -> vector<7x1xf32>
    %430 = vector.broadcast %429 : vector<7x1xf32> to vector<7x7xf32>
    %431 = arith.mulf %426, %430 : vector<7x7xf32>
    %c16_i32_161 = arith.constant 16 : i32
    %432 = vector.broadcast %c16_i32_161 : i32 to vector<7x32xi32>
    %433 = arith.cmpi sge, %387, %432 : vector<7x32xi32>
    %c32_i32_162 = arith.constant 32 : i32
    %434 = vector.broadcast %c32_i32_162 : i32 to vector<7x32xi32>
    %435 = arith.cmpi slt, %387, %434 : vector<7x32xi32>
    %436 = arith.andi %433, %435 : vector<7x32xi1>
    %cst_163 = arith.constant 0.000000e+00 : f32
    %437 = vector.broadcast %cst_163 : f32 to vector<7x32xf32>
    %438 = arith.select %436, %386, %437 : vector<7x32xi1>, vector<7x32xf32>
    %439 = arith.truncf %431 : vector<7x7xf32> to vector<7x7xbf16>
    %440 = arith.truncf %438 : vector<7x32xf32> to vector<7x32xbf16>
    %cst_164 = arith.constant dense<0.000000e+00> : vector<7x32xf32>
    %441 = tpu.matmul %439, %440, %cst_164 {dimension_numbers = #tpu.dot_dimension_numbers<[1], [0], [0], [1], [0, 0, 1, 1], [], []>} : vector<7x7xbf16>, vector<7x32xbf16>, vector<7x32xf32> -> vector<7x32xf32>
    %442 = arith.addf %415, %441 : vector<7x32xf32>
    %443 = arith.addf %374, %442 : vector<7x32xf32>
    %cst_165 = arith.constant dense<0.000000e+00> : vector<7xf32>
    %444 = vector.multi_reduction <add>, %443, %cst_165 [1] : vector<7x32xf32> to vector<7xf32>
    %445 = vector.shape_cast %444 : vector<7xf32> to vector<7x1xf32>
    %cst_166 = arith.constant 3.200000e+01 : f32
    %446 = vector.broadcast %cst_166 : f32 to vector<7x1xf32>
    %447 = arith.divf %445, %446 : vector<7x1xf32>
    %448 = vector.broadcast %447 : vector<7x1xf32> to vector<7x32xf32>
    %449 = arith.subf %443, %448 : vector<7x32xf32>
    %450 = arith.mulf %449, %449 : vector<7x32xf32>
    %cst_167 = arith.constant dense<0.000000e+00> : vector<7xf32>
    %451 = vector.multi_reduction <add>, %450, %cst_167 [1] : vector<7x32xf32> to vector<7xf32>
    %452 = vector.shape_cast %451 : vector<7xf32> to vector<7x1xf32>
    %cst_168 = arith.constant 3.200000e+01 : f32
    %453 = vector.broadcast %cst_168 : f32 to vector<7x1xf32>
    %454 = arith.divf %452, %453 : vector<7x1xf32>
    %455 = vector.broadcast %447 : vector<7x1xf32> to vector<7x32xf32>
    %456 = arith.subf %443, %455 : vector<7x32xf32>
    %cst_169 = arith.constant 9.99999974E-6 : f32
    %457 = vector.broadcast %cst_169 : f32 to vector<7x1xf32>
    %458 = arith.addf %454, %457 : vector<7x1xf32>
    %459 = math.rsqrt %458 : vector<7x1xf32>
    %460 = vector.broadcast %459 : vector<7x1xf32> to vector<7x32xf32>
    %461 = arith.mulf %456, %460 : vector<7x32xf32>
    %c0_170 = arith.constant 0 : index
    %c0_171 = arith.constant 0 : index
    %462 = vector.load %arg19[%c0_170, %c0_171] : memref<1x32xf32, #tpu.memory_space<vmem>>, vector<1x32xf32>
    %463 = vector.broadcast %462 : vector<1x32xf32> to vector<7x32xf32>
    %464 = arith.mulf %461, %463 : vector<7x32xf32>
    %c0_172 = arith.constant 0 : index
    %c0_173 = arith.constant 0 : index
    %465 = vector.load %arg20[%c0_172, %c0_173] : memref<1x32xf32, #tpu.memory_space<vmem>>, vector<1x32xf32>
    %466 = vector.broadcast %465 : vector<1x32xf32> to vector<7x32xf32>
    %467 = arith.addf %464, %466 : vector<7x32xf32>
    %468 = arith.truncf %467 : vector<7x32xf32> to vector<7x32xbf16>
    %c0_174 = arith.constant 0 : index
    %c0_175 = arith.constant 0 : index
    %469 = vector.load %arg14[%c0_174, %c0_175] : memref<32x32xbf16, #tpu.memory_space<vmem>>, vector<32x32xbf16>
    %cst_176 = arith.constant dense<0.000000e+00> : vector<7x32xf32>
    %470 = tpu.matmul %468, %469, %cst_176 {dimension_numbers = #tpu.dot_dimension_numbers<[1], [0], [0], [1], [0, 0, 1, 1], [], []>} : vector<7x32xbf16>, vector<32x32xbf16>, vector<7x32xf32> -> vector<7x32xf32>
    %471 = vector.extract_strided_slice %138 {offsets = [0, 0], sizes = [8, 32], strides = [1, 1]} : vector<8x64xf32> to vector<8x32xf32>
    %472 = vector.extract_strided_slice %138 {offsets = [0, 32], sizes = [8, 32], strides = [1, 1]} : vector<8x64xf32> to vector<8x32xf32>
    %473 = tpu.iota {dimensions = array<i32: 0>} : vector<7x8xi32>
    %474 = tpu.iota {dimensions = array<i32: 1>} : vector<7x8xi32>
    %475 = arith.cmpi sgt, %474, %473 : vector<7x8xi32>
    %cst_177 = arith.constant -1.000000e+30 : f32
    %cst_178 = arith.constant 0.000000e+00 : f32
    %476 = vector.broadcast %cst_177 : f32 to vector<7x8xf32>
    %477 = vector.broadcast %cst_178 : f32 to vector<7x8xf32>
    %478 = arith.select %475, %476, %477 : vector<7x8xi1>, vector<7x8xf32>
    %479 = tpu.iota {dimensions = array<i32: 1>} : vector<8x32xi32>
    %cst_179 = arith.constant 0.000000e+00 : f32
    %480 = vector.broadcast %cst_179 : f32 to vector<7x32xf32>
    %481 = vector.extract_strided_slice %470 {offsets = [0, 0], sizes = [7, 16], strides = [1, 1]} : vector<7x32xf32> to vector<7x16xf32>
    %482 = arith.truncf %481 : vector<7x16xf32> to vector<7x16xbf16>
    %483 = vector.extract_strided_slice %471 {offsets = [0, 0], sizes = [8, 16], strides = [1, 1]} : vector<8x32xf32> to vector<8x16xf32>
    %484 = arith.truncf %483 : vector<8x16xf32> to vector<8x16xbf16>
    %cst_180 = arith.constant dense<0.000000e+00> : vector<7x8xf32>
    %485 = tpu.matmul %482, %484, %cst_180 {dimension_numbers = #tpu.dot_dimension_numbers<[1], [1], [0], [0], [0, 0, 1, 0], [], []>} : vector<7x16xbf16>, vector<8x16xbf16>, vector<7x8xf32> -> vector<7x8xf32>
    %486 = arith.addf %485, %478 : vector<7x8xf32>
    %cst_181 = arith.constant dense<0xFF800000> : vector<7xf32>
    %487 = vector.multi_reduction <maximumf>, %486, %cst_181 [1] : vector<7x8xf32> to vector<7xf32>
    %488 = vector.shape_cast %487 : vector<7xf32> to vector<7x1xf32>
    %489 = vector.broadcast %488 : vector<7x1xf32> to vector<7x8xf32>
    %490 = arith.subf %486, %489 : vector<7x8xf32>
    %491 = math.exp %490 : vector<7x8xf32>
    %cst_182 = arith.constant dense<0.000000e+00> : vector<7xf32>
    %492 = vector.multi_reduction <add>, %491, %cst_182 [1] : vector<7x8xf32> to vector<7xf32>
    %493 = vector.shape_cast %492 : vector<7xf32> to vector<7x1xf32>
    %494 = tpu.reciprocal %493 {approx = true} : vector<7x1xf32> -> vector<7x1xf32>
    %495 = vector.broadcast %494 : vector<7x1xf32> to vector<7x8xf32>
    %496 = arith.mulf %491, %495 : vector<7x8xf32>
    %c0_i32_183 = arith.constant 0 : i32
    %497 = vector.broadcast %c0_i32_183 : i32 to vector<8x32xi32>
    %498 = arith.cmpi sge, %479, %497 : vector<8x32xi32>
    %c16_i32_184 = arith.constant 16 : i32
    %499 = vector.broadcast %c16_i32_184 : i32 to vector<8x32xi32>
    %500 = arith.cmpi slt, %479, %499 : vector<8x32xi32>
    %501 = arith.andi %498, %500 : vector<8x32xi1>
    %cst_185 = arith.constant 0.000000e+00 : f32
    %502 = vector.broadcast %cst_185 : f32 to vector<8x32xf32>
    %503 = arith.select %501, %472, %502 : vector<8x32xi1>, vector<8x32xf32>
    %504 = arith.truncf %496 : vector<7x8xf32> to vector<7x8xbf16>
    %505 = arith.truncf %503 : vector<8x32xf32> to vector<8x32xbf16>
    %cst_186 = arith.constant dense<0.000000e+00> : vector<7x32xf32>
    %506 = tpu.matmul %504, %505, %cst_186 {dimension_numbers = #tpu.dot_dimension_numbers<[1], [0], [0], [1], [0, 0, 1, 1], [], []>} : vector<7x8xbf16>, vector<8x32xbf16>, vector<7x32xf32> -> vector<7x32xf32>
    %507 = arith.addf %480, %506 : vector<7x32xf32>
    %508 = vector.extract_strided_slice %470 {offsets = [0, 16], sizes = [7, 16], strides = [1, 1]} : vector<7x32xf32> to vector<7x16xf32>
    %509 = arith.truncf %508 : vector<7x16xf32> to vector<7x16xbf16>
    %510 = vector.extract_strided_slice %471 {offsets = [0, 16], sizes = [8, 16], strides = [1, 1]} : vector<8x32xf32> to vector<8x16xf32>
    %511 = arith.truncf %510 : vector<8x16xf32> to vector<8x16xbf16>
    %cst_187 = arith.constant dense<0.000000e+00> : vector<7x8xf32>
    %512 = tpu.matmul %509, %511, %cst_187 {dimension_numbers = #tpu.dot_dimension_numbers<[1], [1], [0], [0], [0, 0, 1, 0], [], []>} : vector<7x16xbf16>, vector<8x16xbf16>, vector<7x8xf32> -> vector<7x8xf32>
    %513 = arith.addf %512, %478 : vector<7x8xf32>
    %cst_188 = arith.constant dense<0xFF800000> : vector<7xf32>
    %514 = vector.multi_reduction <maximumf>, %513, %cst_188 [1] : vector<7x8xf32> to vector<7xf32>
    %515 = vector.shape_cast %514 : vector<7xf32> to vector<7x1xf32>
    %516 = vector.broadcast %515 : vector<7x1xf32> to vector<7x8xf32>
    %517 = arith.subf %513, %516 : vector<7x8xf32>
    %518 = math.exp %517 : vector<7x8xf32>
    %cst_189 = arith.constant dense<0.000000e+00> : vector<7xf32>
    %519 = vector.multi_reduction <add>, %518, %cst_189 [1] : vector<7x8xf32> to vector<7xf32>
    %520 = vector.shape_cast %519 : vector<7xf32> to vector<7x1xf32>
    %521 = tpu.reciprocal %520 {approx = true} : vector<7x1xf32> -> vector<7x1xf32>
    %522 = vector.broadcast %521 : vector<7x1xf32> to vector<7x8xf32>
    %523 = arith.mulf %518, %522 : vector<7x8xf32>
    %c16_i32_190 = arith.constant 16 : i32
    %524 = vector.broadcast %c16_i32_190 : i32 to vector<8x32xi32>
    %525 = arith.cmpi sge, %479, %524 : vector<8x32xi32>
    %c32_i32_191 = arith.constant 32 : i32
    %526 = vector.broadcast %c32_i32_191 : i32 to vector<8x32xi32>
    %527 = arith.cmpi slt, %479, %526 : vector<8x32xi32>
    %528 = arith.andi %525, %527 : vector<8x32xi1>
    %cst_192 = arith.constant 0.000000e+00 : f32
    %529 = vector.broadcast %cst_192 : f32 to vector<8x32xf32>
    %530 = arith.select %528, %472, %529 : vector<8x32xi1>, vector<8x32xf32>
    %531 = arith.truncf %523 : vector<7x8xf32> to vector<7x8xbf16>
    %532 = arith.truncf %530 : vector<8x32xf32> to vector<8x32xbf16>
    %cst_193 = arith.constant dense<0.000000e+00> : vector<7x32xf32>
    %533 = tpu.matmul %531, %532, %cst_193 {dimension_numbers = #tpu.dot_dimension_numbers<[1], [0], [0], [1], [0, 0, 1, 1], [], []>} : vector<7x8xbf16>, vector<8x32xbf16>, vector<7x32xf32> -> vector<7x32xf32>
    %534 = arith.addf %507, %533 : vector<7x32xf32>
    %535 = arith.addf %467, %534 : vector<7x32xf32>
    %cst_194 = arith.constant dense<0.000000e+00> : vector<7xf32>
    %536 = vector.multi_reduction <add>, %535, %cst_194 [1] : vector<7x32xf32> to vector<7xf32>
    %537 = vector.shape_cast %536 : vector<7xf32> to vector<7x1xf32>
    %cst_195 = arith.constant 3.200000e+01 : f32
    %538 = vector.broadcast %cst_195 : f32 to vector<7x1xf32>
    %539 = arith.divf %537, %538 : vector<7x1xf32>
    %540 = vector.broadcast %539 : vector<7x1xf32> to vector<7x32xf32>
    %541 = arith.subf %535, %540 : vector<7x32xf32>
    %542 = arith.mulf %541, %541 : vector<7x32xf32>
    %cst_196 = arith.constant dense<0.000000e+00> : vector<7xf32>
    %543 = vector.multi_reduction <add>, %542, %cst_196 [1] : vector<7x32xf32> to vector<7xf32>
    %544 = vector.shape_cast %543 : vector<7xf32> to vector<7x1xf32>
    %cst_197 = arith.constant 3.200000e+01 : f32
    %545 = vector.broadcast %cst_197 : f32 to vector<7x1xf32>
    %546 = arith.divf %544, %545 : vector<7x1xf32>
    %547 = vector.broadcast %539 : vector<7x1xf32> to vector<7x32xf32>
    %548 = arith.subf %535, %547 : vector<7x32xf32>
    %cst_198 = arith.constant 9.99999974E-6 : f32
    %549 = vector.broadcast %cst_198 : f32 to vector<7x1xf32>
    %550 = arith.addf %546, %549 : vector<7x1xf32>
    %551 = math.rsqrt %550 : vector<7x1xf32>
    %552 = vector.broadcast %551 : vector<7x1xf32> to vector<7x32xf32>
    %553 = arith.mulf %548, %552 : vector<7x32xf32>
    %c0_199 = arith.constant 0 : index
    %c0_200 = arith.constant 0 : index
    %554 = vector.load %arg23[%c0_199, %c0_200] : memref<1x32xf32, #tpu.memory_space<vmem>>, vector<1x32xf32>
    %555 = vector.broadcast %554 : vector<1x32xf32> to vector<7x32xf32>
    %556 = arith.mulf %553, %555 : vector<7x32xf32>
    %c0_201 = arith.constant 0 : index
    %c0_202 = arith.constant 0 : index
    %557 = vector.load %arg24[%c0_201, %c0_202] : memref<1x32xf32, #tpu.memory_space<vmem>>, vector<1x32xf32>
    %558 = vector.broadcast %557 : vector<1x32xf32> to vector<7x32xf32>
    %559 = arith.addf %556, %558 : vector<7x32xf32>
    %560 = arith.truncf %559 : vector<7x32xf32> to vector<7x32xbf16>
    %c0_203 = arith.constant 0 : index
    %c0_204 = arith.constant 0 : index
    %561 = vector.load %arg7[%c0_203, %c0_204] : memref<32x32xbf16, #tpu.memory_space<vmem>>, vector<32x32xbf16>
    %cst_205 = arith.constant dense<0.000000e+00> : vector<7x32xf32>
    %562 = tpu.matmul %560, %561, %cst_205 {dimension_numbers = #tpu.dot_dimension_numbers<[1], [0], [0], [1], [0, 0, 1, 1], [], []>} : vector<7x32xbf16>, vector<32x32xbf16>, vector<7x32xf32> -> vector<7x32xf32>
    %c0_206 = arith.constant 0 : index
    %c0_207 = arith.constant 0 : index
    %563 = vector.load %arg8[%c0_206, %c0_207] : memref<1x32xf32, #tpu.memory_space<vmem>>, vector<1x32xf32>
    %564 = vector.broadcast %563 : vector<1x32xf32> to vector<7x32xf32>
    %565 = arith.addf %562, %564 : vector<7x32xf32>
    %cst_208 = arith.constant 0.000000e+00 : f32
    %566 = vector.broadcast %cst_208 : f32 to vector<7x32xf32>
    %567 = arith.maximumf %565, %566 : vector<7x32xf32>
    %568 = arith.addf %567, %559 : vector<7x32xf32>
    %569 = arith.truncf %568 : vector<7x32xf32> to vector<7x32xbf16>
    %c0_209 = arith.constant 0 : index
    %c0_210 = arith.constant 0 : index
    %570 = vector.load %arg9[%c0_209, %c0_210] : memref<32x4xbf16, #tpu.memory_space<vmem>>, vector<32x4xbf16>
    %cst_211 = arith.constant dense<0.000000e+00> : vector<7x4xf32>
    %571 = tpu.matmul %569, %570, %cst_211 {dimension_numbers = #tpu.dot_dimension_numbers<[1], [0], [0], [1], [0, 0, 1, 1], [], []>} : vector<7x32xbf16>, vector<32x4xbf16>, vector<7x4xf32> -> vector<7x4xf32>
    %c0_212 = arith.constant 0 : index
    %c0_213 = arith.constant 0 : index
    %572 = vector.load %arg10[%c0_212, %c0_213] : memref<1x4xf32, #tpu.memory_space<vmem>>, vector<1x4xf32>
    %573 = vector.broadcast %572 : vector<1x4xf32> to vector<7x4xf32>
    %574 = arith.addf %571, %573 : vector<7x4xf32>
    %c0_214 = arith.constant 0 : index
    %c0_215 = arith.constant 0 : index
    %c0_216 = arith.constant 0 : index
    %575 = vector.load %arg41[%c0_214, %c0_215, %c0_216] : memref<1x7x4xf32, #tpu.memory_space<vmem>>, vector<1x7x4xf32>
    %576 = vector.shape_cast %575 : vector<1x7x4xf32> to vector<7x4xf32>
    %577 = vector.shape_cast %574 : vector<7x4xf32> to vector<1x7x4xf32>
    tpu.vector_store %arg41[%c0_214, %c0_215, %c0_216], %577 {strides = array<i32>} : memref<1x7x4xf32, #tpu.memory_space<vmem>>, vector<1x7x4xf32>,
    return
  }
  func.func @transform_0(%arg0: i32) -> (i32, i32) {
    %c0_i32 = arith.constant 0 : i32
    %c0_i32_0 = arith.constant 0 : i32
    %c0_i32_1 = arith.constant 0 : i32
    return %c0_i32, %c0_i32_0 : i32, i32
  }
  func.func @transform_1(%arg0: i32) -> (i32, i32) {
    %c0_i32 = arith.constant 0 : i32
    %c0_i32_0 = arith.constant 0 : i32
    %c0_i32_1 = arith.constant 0 : i32
    return %c0_i32, %c0_i32_0 : i32, i32
  }
  func.func @transform_2(%arg0: i32) -> (i32, i32) {
    %c0_i32 = arith.constant 0 : i32
    %c0_i32_0 = arith.constant 0 : i32
    %c0_i32_1 = arith.constant 0 : i32
    return %c0_i32, %c0_i32_0 : i32, i32
  }
  func.func @transform_3(%arg0: i32) -> (i32, i32) {
    %c0_i32 = arith.constant 0 : i32
    %c0_i32_0 = arith.constant 0 : i32
    %c0_i32_1 = arith.constant 0 : i32
    return %c0_i32, %c0_i32_0 : i32, i32
  }
  func.func @transform_4(%arg0: i32) -> (i32, i32) {
    %c0_i32 = arith.constant 0 : i32
    %c0_i32_0 = arith.constant 0 : i32
    %c0_i32_1 = arith.constant 0 : i32
    return %c0_i32, %c0_i32_0 : i32, i32
  }
  func.func @transform_5(%arg0: i32) -> (i32, i32) {
    %c0_i32 = arith.constant 0 : i32
    %c0_i32_0 = arith.constant 0 : i32
    %c0_i32_1 = arith.constant 0 : i32
    return %c0_i32, %c0_i32_0 : i32, i32
  }
  func.func @transform_6(%arg0: i32) -> (i32, i32) {
    %c0_i32 = arith.constant 0 : i32
    %c0_i32_0 = arith.constant 0 : i32
    %c0_i32_1 = arith.constant 0 : i32
    return %c0_i32, %c0_i32_0 : i32, i32
  }
  func.func @transform_7(%arg0: i32) -> (i32, i32) {
    %c0_i32 = arith.constant 0 : i32
    %c0_i32_0 = arith.constant 0 : i32
    %c0_i32_1 = arith.constant 0 : i32
    return %c0_i32, %c0_i32_0 : i32, i32
  }
  func.func @transform_8(%arg0: i32) -> (i32, i32) {
    %c0_i32 = arith.constant 0 : i32
    %c0_i32_0 = arith.constant 0 : i32
    %c0_i32_1 = arith.constant 0 : i32
    return %c0_i32, %c0_i32_0 : i32, i32
  }
  func.func @transform_9(%arg0: i32) -> (i32, i32) {
    %c0_i32 = arith.constant 0 : i32
    %c0_i32_0 = arith.constant 0 : i32
    %c0_i32_1 = arith.constant 0 : i32
    return %c0_i32, %c0_i32_0 : i32, i32
  }
  func.func @transform_10(%arg0: i32) -> (i32, i32) {
    %c0_i32 = arith.constant 0 : i32
    %c0_i32_0 = arith.constant 0 : i32
    %c0_i32_1 = arith.constant 0 : i32
    return %c0_i32, %c0_i32_0 : i32, i32
  }
  func.func @transform_11(%arg0: i32) -> (i32, i32) {
    %c0_i32 = arith.constant 0 : i32
    %c0_i32_0 = arith.constant 0 : i32
    %c0_i32_1 = arith.constant 0 : i32
    return %c0_i32, %c0_i32_0 : i32, i32
  }
  func.func @transform_12(%arg0: i32) -> (i32, i32) {
    %c0_i32 = arith.constant 0 : i32
    %c0_i32_0 = arith.constant 0 : i32
    %c0_i32_1 = arith.constant 0 : i32
    return %c0_i32, %c0_i32_0 : i32, i32
  }
  func.func @transform_13(%arg0: i32) -> (i32, i32) {
    %c0_i32 = arith.constant 0 : i32
    %c0_i32_0 = arith.constant 0 : i32
    %c0_i32_1 = arith.constant 0 : i32
    return %c0_i32, %c0_i32_0 : i32, i32
  }
  func.func @transform_14(%arg0: i32) -> (i32, i32) {
    %c0_i32 = arith.constant 0 : i32
    %c0_i32_0 = arith.constant 0 : i32
    %c0_i32_1 = arith.constant 0 : i32
    return %c0_i32, %c0_i32_0 : i32, i32
  }
  func.func @transform_15(%arg0: i32) -> (i32, i32) {
    %c0_i32 = arith.constant 0 : i32
    %c0_i32_0 = arith.constant 0 : i32
    %c0_i32_1 = arith.constant 0 : i32
    return %c0_i32, %c0_i32_0 : i32, i32
  }
  func.func @transform_16(%arg0: i32) -> (i32, i32) {
    %c0_i32 = arith.constant 0 : i32
    %c0_i32_0 = arith.constant 0 : i32
    %c0_i32_1 = arith.constant 0 : i32
    return %c0_i32, %c0_i32_0 : i32, i32
  }
  func.func @transform_17(%arg0: i32) -> (i32, i32) {
    %c0_i32 = arith.constant 0 : i32
    %c0_i32_0 = arith.constant 0 : i32
    %c0_i32_1 = arith.constant 0 : i32
    return %c0_i32, %c0_i32_0 : i32, i32
  }
  func.func @transform_18(%arg0: i32) -> (i32, i32) {
    %c0_i32 = arith.constant 0 : i32
    %c0_i32_0 = arith.constant 0 : i32
    %c0_i32_1 = arith.constant 0 : i32
    return %c0_i32, %c0_i32_0 : i32, i32
  }
  func.func @transform_19(%arg0: i32) -> (i32, i32) {
    %c0_i32 = arith.constant 0 : i32
    %c0_i32_0 = arith.constant 0 : i32
    %c0_i32_1 = arith.constant 0 : i32
    return %c0_i32, %c0_i32_0 : i32, i32
  }
  func.func @transform_20(%arg0: i32) -> (i32, i32) {
    %c0_i32 = arith.constant 0 : i32
    %c0_i32_0 = arith.constant 0 : i32
    %c0_i32_1 = arith.constant 0 : i32
    return %c0_i32, %c0_i32_0 : i32, i32
  }
  func.func @transform_21(%arg0: i32) -> (i32, i32) {
    %c0_i32 = arith.constant 0 : i32
    %c0_i32_0 = arith.constant 0 : i32
    %c0_i32_1 = arith.constant 0 : i32
    return %c0_i32, %c0_i32_0 : i32, i32
  }
  func.func @transform_22(%arg0: i32) -> (i32, i32) {
    %c0_i32 = arith.constant 0 : i32
    %c0_i32_0 = arith.constant 0 : i32
    %c0_i32_1 = arith.constant 0 : i32
    return %c0_i32, %c0_i32_0 : i32, i32
  }
  func.func @transform_23(%arg0: i32) -> (i32, i32) {
    %c0_i32 = arith.constant 0 : i32
    %c0_i32_0 = arith.constant 0 : i32
    %c0_i32_1 = arith.constant 0 : i32
    return %c0_i32, %c0_i32_0 : i32, i32
  }
  func.func @transform_24(%arg0: i32) -> (i32, i32) {
    %c0_i32 = arith.constant 0 : i32
    %c0_i32_0 = arith.constant 0 : i32
    %c0_i32_1 = arith.constant 0 : i32
    return %c0_i32, %c0_i32_0 : i32, i32
  }
  func.func @transform_25(%arg0: i32) -> (i32, i32) {
    %c0_i32 = arith.constant 0 : i32
    %c0_i32_0 = arith.constant 0 : i32
    %c0_i32_1 = arith.constant 0 : i32
    return %c0_i32, %c0_i32_0 : i32, i32
  }
  func.func @transform_26(%arg0: i32) -> (i32, i32) {
    %c0_i32 = arith.constant 0 : i32
    %c0_i32_0 = arith.constant 0 : i32
    %c0_i32_1 = arith.constant 0 : i32
    return %c0_i32, %c0_i32_0 : i32, i32
  }
  func.func @transform_27(%arg0: i32) -> (i32, i32) {
    %c0_i32 = arith.constant 0 : i32
    %c0_i32_0 = arith.constant 0 : i32
    %c0_i32_1 = arith.constant 0 : i32
    return %c0_i32, %c0_i32_0 : i32, i32
  }
  func.func @transform_28(%arg0: i32) -> (i32, i32) {
    %c0_i32 = arith.constant 0 : i32
    %c0_i32_0 = arith.constant 0 : i32
    %c0_i32_1 = arith.constant 0 : i32
    return %c0_i32, %c0_i32_0 : i32, i32
  }
  func.func @transform_29(%arg0: i32) -> (i32, i32) {
    %c0_i32 = arith.constant 0 : i32
    %c0_i32_0 = arith.constant 0 : i32
    %c0_i32_1 = arith.constant 0 : i32
    return %c0_i32, %c0_i32_0 : i32, i32
  }
  func.func @transform_30(%arg0: i32) -> (i32, i32) {
    %c0_i32 = arith.constant 0 : i32
    %c0_i32_0 = arith.constant 0 : i32
    %c0_i32_1 = arith.constant 0 : i32
    return %c0_i32, %c0_i32_0 : i32, i32
  }
  func.func @transform_31(%arg0: i32) -> (i32, i32) {
    %c0_i32 = arith.constant 0 : i32
    %c0_i32_0 = arith.constant 0 : i32
    %c0_i32_1 = arith.constant 0 : i32
    return %c0_i32, %c0_i32_0 : i32, i32
  }
  func.func @transform_32(%arg0: i32) -> (i32, i32) {
    %c0_i32 = arith.constant 0 : i32
    %c0_i32_0 = arith.constant 0 : i32
    %c0_i32_1 = arith.constant 0 : i32
    return %c0_i32, %c0_i32_0 : i32, i32
  }
  func.func @transform_33(%arg0: i32) -> (i32, i32) {
    %c0_i32 = arith.constant 0 : i32
    %c0_i32_0 = arith.constant 0 : i32
    %c0_i32_1 = arith.constant 0 : i32
    return %c0_i32, %c0_i32_0 : i32, i32
  }
  func.func @transform_34(%arg0: i32) -> (i32, i32) {
    %c0_i32 = arith.constant 0 : i32
    %c0_i32_0 = arith.constant 0 : i32
    %c0_i32_1 = arith.constant 0 : i32
    return %c0_i32, %c0_i32_0 : i32, i32
  }
  func.func @transform_35(%arg0: i32) -> (i32, i32) {
    %c0_i32 = arith.constant 0 : i32
    %c0_i32_0 = arith.constant 0 : i32
    %c0_i32_1 = arith.constant 0 : i32
    return %c0_i32, %c0_i32_0 : i32, i32
  }
  func.func @transform_36(%arg0: i32) -> (i32, i32) {
    %c0_i32 = arith.constant 0 : i32
    %c0_i32_0 = arith.constant 0 : i32
    %c0_i32_1 = arith.constant 0 : i32
    return %c0_i32, %c0_i32_0 : i32, i32
  }
  func.func @transform_37(%arg0: i32) -> (i32, i32) {
    %c0_i32 = arith.constant 0 : i32
    %c0_i32_0 = arith.constant 0 : i32
    %c0_i32_1 = arith.constant 0 : i32
    return %c0_i32, %c0_i32_0 : i32, i32
  }
  func.func @transform_38(%arg0: i32) -> (i32, i32, i32) {
    %c0_i32 = arith.constant 0 : i32
    %c0_i32_0 = arith.constant 0 : i32
    %c0_i32_1 = arith.constant 0 : i32
    return %arg0, %c0_i32, %c0_i32_0 : i32, i32, i32
  }
  func.func @transform_39(%arg0: i32) -> (i32, i32, i32) {
    %c0_i32 = arith.constant 0 : i32
    %c0_i32_0 = arith.constant 0 : i32
    %c0_i32_1 = arith.constant 0 : i32
    return %arg0, %c0_i32, %c0_i32_0 : i32, i32, i32
  }
  func.func @transform_40(%arg0: i32) -> (i32, i32, i32) {
    %c0_i32 = arith.constant 0 : i32
    %c0_i32_0 = arith.constant 0 : i32
    %c0_i32_1 = arith.constant 0 : i32
    return %arg0, %c0_i32, %c0_i32_0 : i32, i32, i32
  }
}

</mosaic_0001>

<llo_original>
// kernel: transformer_ed_forward.1
$region0: #{transformer_ed_forward.1}
  #allocation0 [shape = 'u32[]', space=smem, size = 0x4, offset = 0x4, fixed_abs, tag = 'smem constant byte address 0x4 - core index']
  #allocation1 [shape = 'u32[72,128]{1,0:T(1,128)}', space=vmem, size = 0x9000, scoped, tag = 'internal scratch']
  %s0 = inlined_call_operand.smem [shape: u32[41], index: -1, kind: input, shape index: {}]
  %s1 = sld [smem:[%s0]]
  %s2 = scalar_lea.smem %s0, 1
  %s3 = sld [smem:[%s2]]
  %s4 = scalar_lea.smem %s0, 2
  %s5 = sld [smem:[%s4]]
  %s6 = scalar_lea.smem %s0, 3
  %s7 = sld [smem:[%s6]]
  %s8 = scalar_lea.smem %s0, 4
  %s9 = sld [smem:[%s8]]
  %s10 = scalar_lea.smem %s0, 5
  %s11 = sld [smem:[%s10]]
  %s12 = scalar_lea.smem %s0, 6
  %s13 = sld [smem:[%s12]]
  %s14 = scalar_lea.smem %s0, 7
  %s15 = sld [smem:[%s14]]
  %s16 = scalar_lea.smem %s0, 8
  %s17 = sld [smem:[%s16]]
  %s18 = scalar_lea.smem %s0, 9
  %s19 = sld [smem:[%s18]]
  %s20 = scalar_lea.smem %s0, 10
  %s21 = sld [smem:[%s20]]
  %s22 = scalar_lea.smem %s0, 11
  %s23 = sld [smem:[%s22]]
  %s24 = scalar_lea.smem %s0, 12
  %s25 = sld [smem:[%s24]]
  %s26 = scalar_lea.smem %s0, 13
  %s27 = sld [smem:[%s26]]
  %s28 = scalar_lea.smem %s0, 14
  %s29 = sld [smem:[%s28]]
  %s30 = scalar_lea.smem %s0, 15
  %s31 = sld [smem:[%s30]]
  %s32 = scalar_lea.smem %s0, 16
  %s33 = sld [smem:[%s32]]
  %s34 = scalar_lea.smem %s0, 17
  %s35 = sld [smem:[%s34]]
  %s36 = scalar_lea.smem %s0, 18
  %s37 = sld [smem:[%s36]]
  %s38 = scalar_lea.smem %s0, 19
  %s39 = sld [smem:[%s38]]
  %s40 = scalar_lea.smem %s0, 20
  %s41 = sld [smem:[%s40]]
  %s42 = scalar_lea.smem %s0, 21
  %s43 = sld [smem:[%s42]]
  %s44 = scalar_lea.smem %s0, 22
  %s45 = sld [smem:[%s44]]
  %s46 = scalar_lea.smem %s0, 23
  %s47 = sld [smem:[%s46]]
  %s48 = scalar_lea.smem %s0, 24
  %s49 = sld [smem:[%s48]]
  %s50 = scalar_lea.smem %s0, 25
  %s51 = sld [smem:[%s50]]
  %s52 = scalar_lea.smem %s0, 26
  %s53 = sld [smem:[%s52]]
  %s54 = scalar_lea.smem %s0, 27
  %s55 = sld [smem:[%s54]]
  %s56 = scalar_lea.smem %s0, 28
  %s57 = sld [smem:[%s56]]
  %s58 = scalar_lea.smem %s0, 29
  %s59 = sld [smem:[%s58]]
  %s60 = scalar_lea.smem %s0, 30
  %s61 = sld [smem:[%s60]]
  %s62 = scalar_lea.smem %s0, 31
  %s63 = sld [smem:[%s62]]
  %s64 = scalar_lea.smem %s0, 32
  %s65 = sld [smem:[%s64]]
  %s66 = scalar_lea.smem %s0, 33
  %s67 = sld [smem:[%s66]]
  %s68 = scalar_lea.smem %s0, 34
  %s69 = sld [smem:[%s68]]
  %s70 = scalar_lea.smem %s0, 35
  %s71 = sld [smem:[%s70]]
  %s72 = scalar_lea.smem %s0, 36
  %s73 = sld [smem:[%s72]]
  %s74 = scalar_lea.smem %s0, 37
  %s75 = sld [smem:[%s74]]
  %s76 = scalar_lea.smem %s0, 38
  %s77 = sld [smem:[%s76]]
  %s78 = scalar_lea.smem %s0, 39
  %s79 = sld [smem:[%s78]]
  %s80 = scalar_lea.smem %s0, 40
  %s81 = sld [smem:[%s80]]
  %s82 = sld [smem:[#allocation0]]
  $region305: #{transformer_ed_forward.1} parent=0
    _
  %s84 = ssub.s32 1, %s82
  %s85 = scalar_select 0, %s84, %s82
  $region1: #{transformer_ed_forward.1} parent=0
    #allocation2 [shape = 'u8[8192]{0}', space=vmem, size = 0x2000, scoped, tag = 'input window, operand 10, single buffered']
    #allocation3 [shape = 's32[2]{0}', space=sflag, size = 0x8, scoped, tag = 'scoped memory for transformer_ed_forward.1']
    #allocation4 [shape = 'u8[8192]{0}', space=vmem, size = 0x2000, scoped, tag = 'input window, operand 11, single buffered']
    #allocation5 [shape = 's32[1]{0}', space=sflag, size = 0x4, scoped, tag = 'scoped memory for transformer_ed_forward.1']
    #allocation6 [shape = 'u8[8192]{0}', space=vmem, size = 0x2000, scoped, tag = 'input window, operand 12, single buffered']
    #allocation7 [shape = 'u8[8192]{0}', space=vmem, size = 0x2000, scoped, tag = 'input window, operand 13, single buffered']
    #allocation8 [shape = 's32[1]{0}', space=sflag, size = 0x4, scoped, tag = 'scoped memory for transformer_ed_forward.1']
    #allocation9 [shape = 'u8[512]{0}', space=vmem, size = 0x400, scoped, tag = 'input window, operand 15, single buffered']
    #allocation10 [shape = 'u8[512]{0}', space=vmem, size = 0x400, scoped, tag = 'input window, operand 16, single buffered']
    #allocation11 [shape = 's32[1]{0}', space=sflag, size = 0x4, scoped, tag = 'scoped memory for transformer_ed_forward.1']
    #allocation12 [shape = 'u8[512]{0}', space=vmem, size = 0x400, scoped, tag = 'input window, operand 17, single buffered']
    #allocation13 [shape = 'u8[512]{0}', space=vmem, size = 0x400, scoped, tag = 'input window, operand 18, single buffered']
    #allocation14 [shape = 's32[1]{0}', space=sflag, size = 0x4, scoped, tag = 'scoped memory for transformer_ed_forward.1']
    #allocation15 [shape = 'u8[512]{0}', space=vmem, size = 0x400, scoped, tag = 'input window, operand 19, single buffered']
    #allocation16 [shape = 'u8[512]{0}', space=vmem, size = 0x400, scoped, tag = 'input window, operand 20, single buffered']
    #allocation17 [shape = 's32[1]{0}', space=sflag, size = 0x4, scoped, tag = 'scoped memory for transformer_ed_forward.1']
    #allocation18 [shape = 'u8[512]{0}', space=vmem, size = 0x400, scoped, tag = 'input window, operand 21, single buffered']
    #allocation19 [shape = 'u8[512]{0}', space=vmem, size = 0x400, scoped, tag = 'input window, operand 22, single buffered']
    #allocation20 [shape = 's32[1]{0}', space=sflag, size = 0x4, scoped, tag = 'scoped memory for transformer_ed_forward.1']
    #allocation21 [shape = 'u8[512]{0}', space=vmem, size = 0x400, scoped, tag = 'input window, operand 23, single buffered']
    #allocation22 [shape = 'u8[4096]{0}', space=vmem, size = 0x1000, scoped, tag = 'input window, operand 24, single buffered']
    #allocation23 [shape = 's32[1]{0}', space=sflag, size = 0x4, scoped, tag = 'scoped memory for transformer_ed_forward.1']
    #allocation24 [shape = 'u8[4096]{0}', space=vmem, size = 0x1000, scoped, tag = 'input window, operand 25, single buffered']
    #allocation25 [shape = 'u8[512]{0}', space=vmem, size = 0x400, scoped, tag = 'input window, operand 26, single buffered']
    #allocation26 [shape = 's32[1]{0}', space=sflag, size = 0x4, scoped, tag = 'scoped memory for transformer_ed_forward.1']
    #allocation27 [shape = 'u8[8192]{0}', space=vmem, size = 0x2000, scoped, tag = 'input window, operand 27, single buffered']
    #allocation28 [shape = 'u8[512]{0}', space=vmem, size = 0x400, scoped, tag = 'input window, operand 28, single buffered']
    #allocation29 [shape = 's32[1]{0}', space=sflag, size = 0x4, scoped, tag = 'scoped memory for transformer_ed_forward.1']
    #allocation30 [shape = 'u8[8192]{0}', space=vmem, size = 0x2000, scoped, tag = 'input window, operand 29, single buffered']
    #allocation31 [shape = 'u8[512]{0}', space=vmem, size = 0x400, scoped, tag = 'input window, operand 30, single buffered']
    #allocation32 [shape = 's32[1]{0}', space=sflag, size = 0x4, scoped, tag = 'scoped memory for transformer_ed_forward.1']
    #allocation33 [shape = 'u8[8192]{0}', space=vmem, size = 0x2000, scoped, tag = 'input window, operand 31, single buffered']
    #allocation34 [shape = 'u8[8192]{0}', space=vmem, size = 0x2000, scoped, tag = 'input window, operand 32, single buffered']
    #allocation35 [shape = 's32[1]{0}', space=sflag, size = 0x4, scoped, tag = 'scoped memory for transformer_ed_forward.1']
    #allocation36 [shape = 'u8[512]{0}', space=vmem, size = 0x400, scoped, tag = 'input window, operand 33, single buffered']
    #allocation37 [shape = 'u8[512]{0}', space=vmem, size = 0x400, scoped, tag = 'input window, operand 34, single buffered']
    #allocation38 [shape = 's32[1]{0}', space=sflag, size = 0x4, scoped, tag = 'scoped memory for transformer_ed_forward.1']
    #allocation39 [shape = 'u8[512]{0}', space=vmem, size = 0x400, scoped, tag = 'input window, operand 35, single buffered']
    #allocation40 [shape = 'u8[512]{0}', space=vmem, size = 0x400, scoped, tag = 'input window, operand 36, single buffered']
    #allocation41 [shape = 's32[1]{0}', space=sflag, size = 0x4, scoped, tag = 'scoped memory for transformer_ed_forward.1']
    #allocation42 [shape = 'u8[4096]{0}', space=vmem, size = 0x1000, scoped, tag = 'input window, operand 37, single buffered']
    #allocation43 [shape = 'u8[8192]{0}', space=vmem, size = 0x2000, scoped, tag = 'input window, operand 38']
    #allocation44 [shape = 's32[2]{0}', space=sflag, size = 0x8, scoped, tag = 'scoped memory for transformer_ed_forward.1']
    %86 = vsyncpa [#allocation3], 0
    %87 = vsyncpa [#allocation5], 0
    %88 = vsyncpa [#allocation8], 0
    %89 = vsyncpa [#allocation11], 0
    %90 = vsyncpa [#allocation14], 0
    %91 = vsyncpa [#allocation17], 0
    %92 = vsyncpa [#allocation20], 0
    %93 = vsyncpa [#allocation23], 0
    %94 = vsyncpa [#allocation26], 0
    %95 = vsyncpa [#allocation29], 0
    %96 = vsyncpa [#allocation32], 0
    %97 = vsyncpa [#allocation35], 0
    %98 = vsyncpa [#allocation38], 0
    %99 = vsyncpa [#allocation41], 0
    %100 = vsyncpa [#allocation44], 0
    %s101 = scalar_lea.sflag [#allocation44], 1
    %102 = vsyncpa %s101, 0
    loop: start=0, step=1, limit=4
    $region2: #{transformer_ed_forward.1} parent=1 // loop_pre_header
      _
    $region3: #{transformer_ed_forward.1} parent=1 // loop_header
      %s104 = sphi 0, %s108
      %p105 = scmp.ge.s32.totalorder %s104, 4
      %s112 = sphi 0, %s112
      %s114 = sphi 0, %s112
      %s115 = sphi 0, %s114
      %s129 = sphi 0, %s115
      %s133 = sphi 0, %s133
      %s135 = sphi 0, %s133
      %s136 = sphi 0, %s135
      %s150 = sphi 0, %s136
      %s154 = sphi 0, %s154
      %s156 = sphi 0, %s154
      %s157 = sphi 0, %s156
      %s171 = sphi 0, %s157
      %s175 = sphi 0, %s175
      %s177 = sphi 0, %s175
      %s178 = sphi 0, %s177
      %s192 = sphi 0, %s178
      %s196 = sphi 0, %s196
      %s198 = sphi 0, %s196
      %s199 = sphi 0, %s198
      %s213 = sphi 0, %s199
      %s217 = sphi 0, %s217
      %s219 = sphi 0, %s217
      %s220 = sphi 0, %s219
      %s234 = sphi 0, %s220
      %s238 = sphi 0, %s238
      %s240 = sphi 0, %s238
      %s241 = sphi 0, %s240
      %s255 = sphi 0, %s241
      %s259 = sphi 0, %s259
      %s261 = sphi 0, %s259
      %s262 = sphi 0, %s261
      %s276 = sphi 0, %s262
      %s280 = sphi 0, %s280
      %s282 = sphi 0, %s280
      %s283 = sphi 0, %s282
      %s297 = sphi 0, %s283
      %s301 = sphi 0, %s301
      %s303 = sphi 0, %s301
      %s304 = sphi 0, %s303
      %s318 = sphi 0, %s304
      %s322 = sphi 0, %s322
      %s324 = sphi 0, %s322
      %s325 = sphi 0, %s324
      %s339 = sphi 0, %s325
      %s343 = sphi 0, %s343
      %s345 = sphi 0, %s343
      %s346 = sphi 0, %s345
      %s360 = sphi 0, %s346
      %s364 = sphi 0, %s364
      %s366 = sphi 0, %s364
      %s367 = sphi 0, %s366
      %s381 = sphi 0, %s367
      %s385 = sphi 0, %s385
      %s387 = sphi 0, %s385
      %s388 = sphi 0, %s387
      %s402 = sphi 0, %s388
      %s406 = sphi 0, %s406
      %s408 = sphi 0, %s406
      %s409 = sphi 0, %s408
      %s423 = sphi 0, %s409
      %s427 = sphi 0, %s427
      %s429 = sphi 0, %s427
      %s430 = sphi 0, %s429
      %s444 = sphi 0, %s430
      %s448 = sphi 0, %s448
      %s450 = sphi 0, %s448
      %s451 = sphi 0, %s450
      %s465 = sphi 0, %s451
      %s469 = sphi 0, %s469
      %s471 = sphi 0, %s469
      %s472 = sphi 0, %s471
      %s486 = sphi 0, %s472
      %s490 = sphi 0, %s490
      %s492 = sphi 0, %s490
      %s493 = sphi 0, %s492
      %s507 = sphi 0, %s493
      %s511 = sphi 0, %s511
      %s513 = sphi 0, %s511
      %s514 = sphi 0, %s513
      %s528 = sphi 0, %s514
      %s532 = sphi 0, %s532
      %s534 = sphi 0, %s532
      %s535 = sphi 0, %s534
      %s549 = sphi 0, %s535
      %s553 = sphi 0, %s553
      %s555 = sphi 0, %s553
      %s556 = sphi 0, %s555
      %s570 = sphi 0, %s556
      %s574 = sphi 0, %s574
      %s576 = sphi 0, %s574
      %s577 = sphi 0, %s576
      %s591 = sphi 0, %s577
      %s595 = sphi 0, %s595
      %s597 = sphi 0, %s595
      %s598 = sphi 0, %s597
      %s612 = sphi 0, %s598
      %s616 = sphi 0, %s616
      %s618 = sphi 0, %s616
      %s619 = sphi 0, %s618
      %s633 = sphi 0, %s619
      %s637 = sphi 0, %s637
      %s639 = sphi 0, %s637
      %s640 = sphi 0, %s639
      %s654 = sphi 0, %s640
      %s658 = sphi 0, %s658
      %s660 = sphi 0, %s658
      %s661 = sphi 0, %s660
      %s675 = sphi 0, %s661
      %s679 = sphi 0, %s679
      %s681 = sphi 0, %s679
      %s682 = sphi 0, %s681
      %s696 = sphi 0, %s682
      %s700 = sphi 0, %s700
      %s702 = sphi 0, %s700
      %s703 = sphi 0, %s702
      %s717 = sphi 0, %s703
      %s721 = sphi 0, %s721
      %s723 = sphi 0, %s721
      %s724 = sphi 0, %s723
      %s738 = sphi 0, %s724
      %s742 = sphi 0, %s742
      %s744 = sphi 0, %s742
      %s745 = sphi 0, %s744
      %s759 = sphi 0, %s745
      %s763 = sphi 0, %s763
      %s765 = sphi 0, %s763
      %s766 = sphi 0, %s765
      %s780 = sphi 0, %s766
      %s784 = sphi 0, %s784
      %s786 = sphi 0, %s784
      %s787 = sphi 0, %s786
      %s801 = sphi 0, %s787
      %s805 = sphi 0, %s805
      %s807 = sphi 0, %s805
      %s808 = sphi 0, %s807
      %s822 = sphi 0, %s808
      %s826 = sphi 0, %s826
      %s828 = sphi 0, %s826
      %s829 = sphi 0, %s828
      %s843 = sphi 0, %s829
      %s847 = sphi 0, %s847
      %s849 = sphi 0, %s847
      %s850 = sphi 0, %s849
      %s864 = sphi 0, %s850
      %s868 = sphi 0, %s868
      %s870 = sphi 0, %s868
      %s871 = sphi 0, %s870
      %s885 = sphi 0, %s871
      %s889 = sphi 0, %s889
      %s891 = sphi 0, %s889
      %s892 = sphi 0, %s891
      %s906 = sphi 0, %s892
      %s912 = sphi 0, %s914
      %s915 = sphi 0, %s912
      %s916 = sphi 0, %s915
      %s932 = sphi 0, %s916
      %s938 = sphi 0, %s940
      %s941 = sphi 0, %s938
      %s942 = sphi 0, %s941
      %s958 = sphi 0, %s942
      %s964 = sphi 0, %s966
      %s967 = sphi 0, %s964
      %s968 = sphi 0, %s967
      %s984 = sphi 0, %s968
    $region4: #{transformer_ed_forward.1} parent=1 // loop_header_branch
      %107 = sbr.rel (%p105) target = $region8
    $region5: #{transformer_ed_forward.1} parent=1 // loop_body
      %s109 = ssub.s32 %s104, 1
      %s110 = ssub.s32 %s104, 2
      %s111 = sadd.s32 %s104, 1
      %s113 = sadd.s32 %s112, 1
      %p116 = scmp.eq.s32.totalorder %s104, 1
      %p117 = scmp.ne.s32.totalorder %s112, %s114
      %p118 = scmp.eq.s32.totalorder %s104, 0
      %p119 = por %p117, %p118
      %p120 = scmp.ne.s32.totalorder %s112, %s114
      %p121 = scmp.eq.s32.totalorder %s109, 1
      %p122 = por %p120, %p121
      %p123 = scmp.ne.s32.totalorder %s114, %s115
      %p124 = scmp.eq.s32.totalorder %s109, 0
      %p125 = por %p123, %p124
      %p126 = scmp.ne.s32.totalorder %s114, %s115
      %p127 = scmp.eq.s32.totalorder %s110, 1
      %p128 = por %p126, %p127
      %p130 = scmp.ne.s32.totalorder %s115, %s129
      %p131 = scmp.eq.s32.totalorder %s110, 0
      %p132 = por %p130, %p131
      %s134 = sadd.s32 %s133, 1
      %p137 = scmp.eq.s32.totalorder %s104, 1
      %p138 = scmp.ne.s32.totalorder %s133, %s135
      %p139 = scmp.eq.s32.totalorder %s104, 0
      %p140 = por %p138, %p139
      %p141 = scmp.ne.s32.totalorder %s133, %s135
      %p142 = scmp.eq.s32.totalorder %s109, 1
      %p143 = por %p141, %p142
      %p144 = scmp.ne.s32.totalorder %s135, %s136
      %p145 = scmp.eq.s32.totalorder %s109, 0
      %p146 = por %p144, %p145
      %p147 = scmp.ne.s32.totalorder %s135, %s136
      %p148 = scmp.eq.s32.totalorder %s110, 1
      %p149 = por %p147, %p148
      %p151 = scmp.ne.s32.totalorder %s136, %s150
      %p152 = scmp.eq.s32.totalorder %s110, 0
      %p153 = por %p151, %p152
      %s155 = sadd.s32 %s154, 1
      %p158 = scmp.eq.s32.totalorder %s104, 1
      %p159 = scmp.ne.s32.totalorder %s154, %s156
      %p160 = scmp.eq.s32.totalorder %s104, 0
      %p161 = por %p159, %p160
      %p162 = scmp.ne.s32.totalorder %s154, %s156
      %p163 = scmp.eq.s32.totalorder %s109, 1
      %p164 = por %p162, %p163
      %p165 = scmp.ne.s32.totalorder %s156, %s157
      %p166 = scmp.eq.s32.totalorder %s109, 0
      %p167 = por %p165, %p166
      %p168 = scmp.ne.s32.totalorder %s156, %s157
      %p169 = scmp.eq.s32.totalorder %s110, 1
      %p170 = por %p168, %p169
      %p172 = scmp.ne.s32.totalorder %s157, %s171
      %p173 = scmp.eq.s32.totalorder %s110, 0
      %p174 = por %p172, %p173
      %s176 = sadd.s32 %s175, 1
      %p179 = scmp.eq.s32.totalorder %s104, 1
      %p180 = scmp.ne.s32.totalorder %s175, %s177
      %p181 = scmp.eq.s32.totalorder %s104, 0
      %p182 = por %p180, %p181
      %p183 = scmp.ne.s32.totalorder %s175, %s177
      %p184 = scmp.eq.s32.totalorder %s109, 1
      %p185 = por %p183, %p184
      %p186 = scmp.ne.s32.totalorder %s177, %s178
      %p187 = scmp.eq.s32.totalorder %s109, 0
      %p188 = por %p186, %p187
      %p189 = scmp.ne.s32.totalorder %s177, %s178
      %p190 = scmp.eq.s32.totalorder %s110, 1
      %p191 = por %p189, %p190
      %p193 = scmp.ne.s32.totalorder %s178, %s192
      %p194 = scmp.eq.s32.totalorder %s110, 0
      %p195 = por %p193, %p194
      %s197 = sadd.s32 %s196, 1
      %p200 = scmp.eq.s32.totalorder %s104, 1
      %p201 = scmp.ne.s32.totalorder %s196, %s198
      %p202 = scmp.eq.s32.totalorder %s104, 0
      %p203 = por %p201, %p202
      %p204 = scmp.ne.s32.totalorder %s196, %s198
      %p205 = scmp.eq.s32.totalorder %s109, 1
      %p206 = por %p204, %p205
      %p207 = scmp.ne.s32.totalorder %s198, %s199
      %p208 = scmp.eq.s32.totalorder %s109, 0
      %p209 = por %p207, %p208
      %p210 = scmp.ne.s32.totalorder %s198, %s199
      %p211 = scmp.eq.s32.totalorder %s110, 1
      %p212 = por %p210, %p211
      %p214 = scmp.ne.s32.totalorder %s199, %s213
      %p215 = scmp.eq.s32.totalorder %s110, 0
      %p216 = por %p214, %p215
      %s218 = sadd.s32 %s217, 1
      %p221 = scmp.eq.s32.totalorder %s104, 1
      %p222 = scmp.ne.s32.totalorder %s217, %s219
      %p223 = scmp.eq.s32.totalorder %s104, 0
      %p224 = por %p222, %p223
      %p225 = scmp.ne.s32.totalorder %s217, %s219
      %p226 = scmp.eq.s32.totalorder %s109, 1
      %p227 = por %p225, %p226
      %p228 = scmp.ne.s32.totalorder %s219, %s220
      %p229 = scmp.eq.s32.totalorder %s109, 0
      %p230 = por %p228, %p229
      %p231 = scmp.ne.s32.totalorder %s219, %s220
      %p232 = scmp.eq.s32.totalorder %s110, 1
      %p233 = por %p231, %p232
      %p235 = scmp.ne.s32.totalorder %s220, %s234
      %p236 = scmp.eq.s32.totalorder %s110, 0
      %p237 = por %p235, %p236
      %s239 = sadd.s32 %s238, 1
      %p242 = scmp.eq.s32.totalorder %s104, 1
      %p243 = scmp.ne.s32.totalorder %s238, %s240
      %p244 = scmp.eq.s32.totalorder %s104, 0
      %p245 = por %p243, %p244
      %p246 = scmp.ne.s32.totalorder %s238, %s240
      %p247 = scmp.eq.s32.totalorder %s109, 1
      %p248 = por %p246, %p247
      %p249 = scmp.ne.s32.totalorder %s240, %s241
      %p250 = scmp.eq.s32.totalorder %s109, 0
      %p251 = por %p249, %p250
      %p252 = scmp.ne.s32.totalorder %s240, %s241
      %p253 = scmp.eq.s32.totalorder %s110, 1
      %p254 = por %p252, %p253
      %p256 = scmp.ne.s32.totalorder %s241, %s255
      %p257 = scmp.eq.s32.totalorder %s110, 0
      %p258 = por %p256, %p257
      %s260 = sadd.s32 %s259, 1
      %p263 = scmp.eq.s32.totalorder %s104, 1
      %p264 = scmp.ne.s32.totalorder %s259, %s261
      %p265 = scmp.eq.s32.totalorder %s104, 0
      %p266 = por %p264, %p265
      %p267 = scmp.ne.s32.totalorder %s259, %s261
      %p268 = scmp.eq.s32.totalorder %s109, 1
      %p269 = por %p267, %p268
      %p270 = scmp.ne.s32.totalorder %s261, %s262
      %p271 = scmp.eq.s32.totalorder %s109, 0
      %p272 = por %p270, %p271
      %p273 = scmp.ne.s32.totalorder %s261, %s262
      %p274 = scmp.eq.s32.totalorder %s110, 1
      %p275 = por %p273, %p274
      %p277 = scmp.ne.s32.totalorder %s262, %s276
      %p278 = scmp.eq.s32.totalorder %s110, 0
      %p279 = por %p277, %p278
      %s281 = sadd.s32 %s280, 1
      %p284 = scmp.eq.s32.totalorder %s104, 1
      %p285 = scmp.ne.s32.totalorder %s280, %s282
      %p286 = scmp.eq.s32.totalorder %s104, 0
      %p287 = por %p285, %p286
      %p288 = scmp.ne.s32.totalorder %s280, %s282
      %p289 = scmp.eq.s32.totalorder %s109, 1
      %p290 = por %p288, %p289
      %p291 = scmp.ne.s32.totalorder %s282, %s283
      %p292 = scmp.eq.s32.totalorder %s109, 0
      %p293 = por %p291, %p292
      %p294 = scmp.ne.s32.totalorder %s282, %s283
      %p295 = scmp.eq.s32.totalorder %s110, 1
      %p296 = por %p294, %p295
      %p298 = scmp.ne.s32.totalorder %s283, %s297
      %p299 = scmp.eq.s32.totalorder %s110, 0
      %p300 = por %p298, %p299
      %s302 = sadd.s32 %s301, 1
      %p305 = scmp.eq.s32.totalorder %s104, 1
      %p306 = scmp.ne.s32.totalorder %s301, %s303
      %p307 = scmp.eq.s32.totalorder %s104, 0
      %p308 = por %p306, %p307
      %p309 = scmp.ne.s32.totalorder %s301, %s303
      %p310 = scmp.eq.s32.totalorder %s109, 1
      %p311 = por %p309, %p310
      %p312 = scmp.ne.s32.totalorder %s303, %s304
      %p313 = scmp.eq.s32.totalorder %s109, 0
      %p314 = por %p312, %p313
      %p315 = scmp.ne.s32.totalorder %s303, %s304
      %p316 = scmp.eq.s32.totalorder %s110, 1
      %p317 = por %p315, %p316
      %p319 = scmp.ne.s32.totalorder %s304, %s318
      %p320 = scmp.eq.s32.totalorder %s110, 0
      %p321 = por %p319, %p320
      %s323 = sadd.s32 %s322, 1
      %p326 = scmp.eq.s32.totalorder %s104, 1
      %p327 = scmp.ne.s32.totalorder %s322, %s324
      %p328 = scmp.eq.s32.totalorder %s104, 0
      %p329 = por %p327, %p328
      %p330 = scmp.ne.s32.totalorder %s322, %s324
      %p331 = scmp.eq.s32.totalorder %s109, 1
      %p332 = por %p330, %p331
      %p333 = scmp.ne.s32.totalorder %s324, %s325
      %p334 = scmp.eq.s32.totalorder %s109, 0
      %p335 = por %p333, %p334
      %p336 = scmp.ne.s32.totalorder %s324, %s325
      %p337 = scmp.eq.s32.totalorder %s110, 1
      %p338 = por %p336, %p337
      %p340 = scmp.ne.s32.totalorder %s325, %s339
      %p341 = scmp.eq.s32.totalorder %s110, 0
      %p342 = por %p340, %p341
      %s344 = sadd.s32 %s343, 1
      %p347 = scmp.eq.s32.totalorder %s104, 1
      %p348 = scmp.ne.s32.totalorder %s343, %s345
      %p349 = scmp.eq.s32.totalorder %s104, 0
      %p350 = por %p348, %p349
      %p351 = scmp.ne.s32.totalorder %s343, %s345
      %p352 = scmp.eq.s32.totalorder %s109, 1
      %p353 = por %p351, %p352
      %p354 = scmp.ne.s32.totalorder %s345, %s346
      %p355 = scmp.eq.s32.totalorder %s109, 0
      %p356 = por %p354, %p355
      %p357 = scmp.ne.s32.totalorder %s345, %s346
      %p358 = scmp.eq.s32.totalorder %s110, 1
      %p359 = por %p357, %p358
      %p361 = scmp.ne.s32.totalorder %s346, %s360
      %p362 = scmp.eq.s32.totalorder %s110, 0
      %p363 = por %p361, %p362
      %s365 = sadd.s32 %s364, 1
      %p368 = scmp.eq.s32.totalorder %s104, 1
      %p369 = scmp.ne.s32.totalorder %s364, %s366
      %p370 = scmp.eq.s32.totalorder %s104, 0
      %p371 = por %p369, %p370
      %p372 = scmp.ne.s32.totalorder %s364, %s366
      %p373 = scmp.eq.s32.totalorder %s109, 1
      %p374 = por %p372, %p373
      %p375 = scmp.ne.s32.totalorder %s366, %s367
      %p376 = scmp.eq.s32.totalorder %s109, 0
      %p377 = por %p375, %p376
      %p378 = scmp.ne.s32.totalorder %s366, %s367
      %p379 = scmp.eq.s32.totalorder %s110, 1
      %p380 = por %p378, %p379
      %p382 = scmp.ne.s32.totalorder %s367, %s381
      %p383 = scmp.eq.s32.totalorder %s110, 0
      %p384 = por %p382, %p383
      %s386 = sadd.s32 %s385, 1
      %p389 = scmp.eq.s32.totalorder %s104, 1
      %p390 = scmp.ne.s32.totalorder %s385, %s387
      %p391 = scmp.eq.s32.totalorder %s104, 0
      %p392 = por %p390, %p391
      %p393 = scmp.ne.s32.totalorder %s385, %s387
      %p394 = scmp.eq.s32.totalorder %s109, 1
      %p395 = por %p393, %p394
      %p396 = scmp.ne.s32.totalorder %s387, %s388
      %p397 = scmp.eq.s32.totalorder %s109, 0
      %p398 = por %p396, %p397
      %p399 = scmp.ne.s32.totalorder %s387, %s388
      %p400 = scmp.eq.s32.totalorder %s110, 1
      %p401 = por %p399, %p400
      %p403 = scmp.ne.s32.totalorder %s388, %s402
      %p404 = scmp.eq.s32.totalorder %s110, 0
      %p405 = por %p403, %p404
      %s407 = sadd.s32 %s406, 1
      %p410 = scmp.eq.s32.totalorder %s104, 1
      %p411 = scmp.ne.s32.totalorder %s406, %s408
      %p412 = scmp.eq.s32.totalorder %s104, 0
      %p413 = por %p411, %p412
      %p414 = scmp.ne.s32.totalorder %s406, %s408
      %p415 = scmp.eq.s32.totalorder %s109, 1
      %p416 = por %p414, %p415
      %p417 = scmp.ne.s32.totalorder %s408, %s409
      %p418 = scmp.eq.s32.totalorder %s109, 0
      %p419 = por %p417, %p418
      %p420 = scmp.ne.s32.totalorder %s408, %s409
      %p421 = scmp.eq.s32.totalorder %s110, 1
      %p422 = por %p420, %p421
      %p424 = scmp.ne.s32.totalorder %s409, %s423
      %p425 = scmp.eq.s32.totalorder %s110, 0
      %p426 = por %p424, %p425
      %s428 = sadd.s32 %s427, 1
      %p431 = scmp.eq.s32.totalorder %s104, 1
      %p432 = scmp.ne.s32.totalorder %s427, %s429
      %p433 = scmp.eq.s32.totalorder %s104, 0
      %p434 = por %p432, %p433
      %p435 = scmp.ne.s32.totalorder %s427, %s429
      %p436 = scmp.eq.s32.totalorder %s109, 1
      %p437 = por %p435, %p436
      %p438 = scmp.ne.s32.totalorder %s429, %s430
      %p439 = scmp.eq.s32.totalorder %s109, 0
      %p440 = por %p438, %p439
      %p441 = scmp.ne.s32.totalorder %s429, %s430
      %p442 = scmp.eq.s32.totalorder %s110, 1
      %p443 = por %p441, %p442
      %p445 = scmp.ne.s32.totalorder %s430, %s444
      %p446 = scmp.eq.s32.totalorder %s110, 0
      %p447 = por %p445, %p446
      %s449 = sadd.s32 %s448, 1
      %p452 = scmp.eq.s32.totalorder %s104, 1
      %p453 = scmp.ne.s32.totalorder %s448, %s450
      %p454 = scmp.eq.s32.totalorder %s104, 0
      %p455 = por %p453, %p454
      %p456 = scmp.ne.s32.totalorder %s448, %s450
      %p457 = scmp.eq.s32.totalorder %s109, 1
      %p458 = por %p456, %p457
      %p459 = scmp.ne.s32.totalorder %s450, %s451
      %p460 = scmp.eq.s32.totalorder %s109, 0
      %p461 = por %p459, %p460
      %p462 = scmp.ne.s32.totalorder %s450, %s451
      %p463 = scmp.eq.s32.totalorder %s110, 1
      %p464 = por %p462, %p463
      %p466 = scmp.ne.s32.totalorder %s451, %s465
      %p467 = scmp.eq.s32.totalorder %s110, 0
      %p468 = por %p466, %p467
      %s470 = sadd.s32 %s469, 1
      %p473 = scmp.eq.s32.totalorder %s104, 1
      %p474 = scmp.ne.s32.totalorder %s469, %s471
      %p475 = scmp.eq.s32.totalorder %s104, 0
      %p476 = por %p474, %p475
      %p477 = scmp.ne.s32.totalorder %s469, %s471
      %p478 = scmp.eq.s32.totalorder %s109, 1
      %p479 = por %p477, %p478
      %p480 = scmp.ne.s32.totalorder %s471, %s472
      %p481 = scmp.eq.s32.totalorder %s109, 0
      %p482 = por %p480, %p481
      %p483 = scmp.ne.s32.totalorder %s471, %s472
      %p484 = scmp.eq.s32.totalorder %s110, 1
      %p485 = por %p483, %p484
      %p487 = scmp.ne.s32.totalorder %s472, %s486
      %p488 = scmp.eq.s32.totalorder %s110, 0
      %p489 = por %p487, %p488
      %s491 = sadd.s32 %s490, 1
      %p494 = scmp.eq.s32.totalorder %s104, 1
      %p495 = scmp.ne.s32.totalorder %s490, %s492
      %p496 = scmp.eq.s32.totalorder %s104, 0
      %p497 = por %p495, %p496
      %p498 = scmp.ne.s32.totalorder %s490, %s492
      %p499 = scmp.eq.s32.totalorder %s109, 1
      %p500 = por %p498, %p499
      %p501 = scmp.ne.s32.totalorder %s492, %s493
      %p502 = scmp.eq.s32.totalorder %s109, 0
      %p503 = por %p501, %p502
      %p504 = scmp.ne.s32.totalorder %s492, %s493
      %p505 = scmp.eq.s32.totalorder %s110, 1
      %p506 = por %p504, %p505
      %p508 = scmp.ne.s32.totalorder %s493, %s507
      %p509 = scmp.eq.s32.totalorder %s110, 0
      %p510 = por %p508, %p509
      %s512 = sadd.s32 %s511, 1
      %p515 = scmp.eq.s32.totalorder %s104, 1
      %p516 = scmp.ne.s32.totalorder %s511, %s513
      %p517 = scmp.eq.s32.totalorder %s104, 0
      %p518 = por %p516, %p517
      %p519 = scmp.ne.s32.totalorder %s511, %s513
      %p520 = scmp.eq.s32.totalorder %s109, 1
      %p521 = por %p519, %p520
      %p522 = scmp.ne.s32.totalorder %s513, %s514
      %p523 = scmp.eq.s32.totalorder %s109, 0
      %p524 = por %p522, %p523
      %p525 = scmp.ne.s32.totalorder %s513, %s514
      %p526 = scmp.eq.s32.totalorder %s110, 1
      %p527 = por %p525, %p526
      %p529 = scmp.ne.s32.totalorder %s514, %s528
      %p530 = scmp.eq.s32.totalorder %s110, 0
      %p531 = por %p529, %p530
      %s533 = sadd.s32 %s532, 1
      %p536 = scmp.eq.s32.totalorder %s104, 1
      %p537 = scmp.ne.s32.totalorder %s532, %s534
      %p538 = scmp.eq.s32.totalorder %s104, 0
      %p539 = por %p537, %p538
      %p540 = scmp.ne.s32.totalorder %s532, %s534
      %p541 = scmp.eq.s32.totalorder %s109, 1
      %p542 = por %p540, %p541
      %p543 = scmp.ne.s32.totalorder %s534, %s535
      %p544 = scmp.eq.s32.totalorder %s109, 0
      %p545 = por %p543, %p544
      %p546 = scmp.ne.s32.totalorder %s534, %s535
      %p547 = scmp.eq.s32.totalorder %s110, 1
      %p548 = por %p546, %p547
      %p550 = scmp.ne.s32.totalorder %s535, %s549
      %p551 = scmp.eq.s32.totalorder %s110, 0
      %p552 = por %p550, %p551
      %s554 = sadd.s32 %s553, 1
      %p557 = scmp.eq.s32.totalorder %s104, 1
      %p558 = scmp.ne.s32.totalorder %s553, %s555
      %p559 = scmp.eq.s32.totalorder %s104, 0
      %p560 = por %p558, %p559
      %p561 = scmp.ne.s32.totalorder %s553, %s555
      %p562 = scmp.eq.s32.totalorder %s109, 1
      %p563 = por %p561, %p562
      %p564 = scmp.ne.s32.totalorder %s555, %s556
      %p565 = scmp.eq.s32.totalorder %s109, 0
      %p566 = por %p564, %p565
      %p567 = scmp.ne.s32.totalorder %s555, %s556
      %p568 = scmp.eq.s32.totalorder %s110, 1
      %p569 = por %p567, %p568
      %p571 = scmp.ne.s32.totalorder %s556, %s570
      %p572 = scmp.eq.s32.totalorder %s110, 0
      %p573 = por %p571, %p572
      %s575 = sadd.s32 %s574, 1
      %p578 = scmp.eq.s32.totalorder %s104, 1
      %p579 = scmp.ne.s32.totalorder %s574, %s576
      %p580 = scmp.eq.s32.totalorder %s104, 0
      %p581 = por %p579, %p580
      %p582 = scmp.ne.s32.totalorder %s574, %s576
      %p583 = scmp.eq.s32.totalorder %s109, 1
      %p584 = por %p582, %p583
      %p585 = scmp.ne.s32.totalorder %s576, %s577
      %p586 = scmp.eq.s32.totalorder %s109, 0
      %p587 = por %p585, %p586
      %p588 = scmp.ne.s32.totalorder %s576, %s577
      %p589 = scmp.eq.s32.totalorder %s110, 1
      %p590 = por %p588, %p589
      %p592 = scmp.ne.s32.totalorder %s577, %s591
      %p593 = scmp.eq.s32.totalorder %s110, 0
      %p594 = por %p592, %p593
      %s596 = sadd.s32 %s595, 1
      %p599 = scmp.eq.s32.totalorder %s104, 1
      %p600 = scmp.ne.s32.totalorder %s595, %s597
      %p601 = scmp.eq.s32.totalorder %s104, 0
      %p602 = por %p600, %p601
      %p603 = scmp.ne.s32.totalorder %s595, %s597
      %p604 = scmp.eq.s32.totalorder %s109, 1
      %p605 = por %p603, %p604
      %p606 = scmp.ne.s32.totalorder %s597, %s598
      %p607 = scmp.eq.s32.totalorder %s109, 0
      %p608 = por %p606, %p607
      %p609 = scmp.ne.s32.totalorder %s597, %s598
      %p610 = scmp.eq.s32.totalorder %s110, 1
      %p611 = por %p609, %p610
      %p613 = scmp.ne.s32.totalorder %s598, %s612
      %p614 = scmp.eq.s32.totalorder %s110, 0
      %p615 = por %p613, %p614
      %s617 = sadd.s32 %s616, 1
      %p620 = scmp.eq.s32.totalorder %s104, 1
      %p621 = scmp.ne.s32.totalorder %s616, %s618
      %p622 = scmp.eq.s32.totalorder %s104, 0
      %p623 = por %p621, %p622
      %p624 = scmp.ne.s32.totalorder %s616, %s618
      %p625 = scmp.eq.s32.totalorder %s109, 1
      %p626 = por %p624, %p625
      %p627 = scmp.ne.s32.totalorder %s618, %s619
      %p628 = scmp.eq.s32.totalorder %s109, 0
      %p629 = por %p627, %p628
      %p630 = scmp.ne.s32.totalorder %s618, %s619
      %p631 = scmp.eq.s32.totalorder %s110, 1
      %p632 = por %p630, %p631
      %p634 = scmp.ne.s32.totalorder %s619, %s633
      %p635 = scmp.eq.s32.totalorder %s110, 0
      %p636 = por %p634, %p635
      %s638 = sadd.s32 %s637, 1
      %p641 = scmp.eq.s32.totalorder %s104, 1
      %p642 = scmp.ne.s32.totalorder %s637, %s639
      %p643 = scmp.eq.s32.totalorder %s104, 0
      %p644 = por %p642, %p643
      %p645 = scmp.ne.s32.totalorder %s637, %s639
      %p646 = scmp.eq.s32.totalorder %s109, 1
      %p647 = por %p645, %p646
      %p648 = scmp.ne.s32.totalorder %s639, %s640
      %p649 = scmp.eq.s32.totalorder %s109, 0
      %p650 = por %p648, %p649
      %p651 = scmp.ne.s32.totalorder %s639, %s640
      %p652 = scmp.eq.s32.totalorder %s110, 1
      %p653 = por %p651, %p652
      %p655 = scmp.ne.s32.totalorder %s640, %s654
      %p656 = scmp.eq.s32.totalorder %s110, 0
      %p657 = por %p655, %p656
      %s659 = sadd.s32 %s658, 1
      %p662 = scmp.eq.s32.totalorder %s104, 1
      %p663 = scmp.ne.s32.totalorder %s658, %s660
      %p664 = scmp.eq.s32.totalorder %s104, 0
      %p665 = por %p663, %p664
      %p666 = scmp.ne.s32.totalorder %s658, %s660
      %p667 = scmp.eq.s32.totalorder %s109, 1
      %p668 = por %p666, %p667
      %p669 = scmp.ne.s32.totalorder %s660, %s661
      %p670 = scmp.eq.s32.totalorder %s109, 0
      %p671 = por %p669, %p670
      %p672 = scmp.ne.s32.totalorder %s660, %s661
      %p673 = scmp.eq.s32.totalorder %s110, 1
      %p674 = por %p672, %p673
      %p676 = scmp.ne.s32.totalorder %s661, %s675
      %p677 = scmp.eq.s32.totalorder %s110, 0
      %p678 = por %p676, %p677
      %s680 = sadd.s32 %s679, 1
      %p683 = scmp.eq.s32.totalorder %s104, 1
      %p684 = scmp.ne.s32.totalorder %s679, %s681
      %p685 = scmp.eq.s32.totalorder %s104, 0
      %p686 = por %p684, %p685
      %p687 = scmp.ne.s32.totalorder %s679, %s681
      %p688 = scmp.eq.s32.totalorder %s109, 1
      %p689 = por %p687, %p688
      %p690 = scmp.ne.s32.totalorder %s681, %s682
      %p691 = scmp.eq.s32.totalorder %s109, 0
      %p692 = por %p690, %p691
      %p693 = scmp.ne.s32.totalorder %s681, %s682
      %p694 = scmp.eq.s32.totalorder %s110, 1
      %p695 = por %p693, %p694
      %p697 = scmp.ne.s32.totalorder %s682, %s696
      %p698 = scmp.eq.s32.totalorder %s110, 0
      %p699 = por %p697, %p698
      %s701 = sadd.s32 %s700, 1
      %p704 = scmp.eq.s32.totalorder %s104, 1
      %p705 = scmp.ne.s32.totalorder %s700, %s702
      %p706 = scmp.eq.s32.totalorder %s104, 0
      %p707 = por %p705, %p706
      %p708 = scmp.ne.s32.totalorder %s700, %s702
      %p709 = scmp.eq.s32.totalorder %s109, 1
      %p710 = por %p708, %p709
      %p711 = scmp.ne.s32.totalorder %s702, %s703
      %p712 = scmp.eq.s32.totalorder %s109, 0
      %p713 = por %p711, %p712
      %p714 = scmp.ne.s32.totalorder %s702, %s703
      %p715 = scmp.eq.s32.totalorder %s110, 1
      %p716 = por %p714, %p715
      %p718 = scmp.ne.s32.totalorder %s703, %s717
      %p719 = scmp.eq.s32.totalorder %s110, 0
      %p720 = por %p718, %p719
      %s722 = sadd.s32 %s721, 1
      %p725 = scmp.eq.s32.totalorder %s104, 1
      %p726 = scmp.ne.s32.totalorder %s721, %s723
      %p727 = scmp.eq.s32.totalorder %s104, 0
      %p728 = por %p726, %p727
      %p729 = scmp.ne.s32.totalorder %s721, %s723
      %p730 = scmp.eq.s32.totalorder %s109, 1
      %p731 = por %p729, %p730
      %p732 = scmp.ne.s32.totalorder %s723, %s724
      %p733 = scmp.eq.s32.totalorder %s109, 0
      %p734 = por %p732, %p733
      %p735 = scmp.ne.s32.totalorder %s723, %s724
      %p736 = scmp.eq.s32.totalorder %s110, 1
      %p737 = por %p735, %p736
      %p739 = scmp.ne.s32.totalorder %s724, %s738
      %p740 = scmp.eq.s32.totalorder %s110, 0
      %p741 = por %p739, %p740
      %s743 = sadd.s32 %s742, 1
      %p746 = scmp.eq.s32.totalorder %s104, 1
      %p747 = scmp.ne.s32.totalorder %s742, %s744
      %p748 = scmp.eq.s32.totalorder %s104, 0
      %p749 = por %p747, %p748
      %p750 = scmp.ne.s32.totalorder %s742, %s744
      %p751 = scmp.eq.s32.totalorder %s109, 1
      %p752 = por %p750, %p751
      %p753 = scmp.ne.s32.totalorder %s744, %s745
      %p754 = scmp.eq.s32.totalorder %s109, 0
      %p755 = por %p753, %p754
      %p756 = scmp.ne.s32.totalorder %s744, %s745
      %p757 = scmp.eq.s32.totalorder %s110, 1
      %p758 = por %p756, %p757
      %p760 = scmp.ne.s32.totalorder %s745, %s759
      %p761 = scmp.eq.s32.totalorder %s110, 0
      %p762 = por %p760, %p761
      %s764 = sadd.s32 %s763, 1
      %p767 = scmp.eq.s32.totalorder %s104, 1
      %p768 = scmp.ne.s32.totalorder %s763, %s765
      %p769 = scmp.eq.s32.totalorder %s104, 0
      %p770 = por %p768, %p769
      %p771 = scmp.ne.s32.totalorder %s763, %s765
      %p772 = scmp.eq.s32.totalorder %s109, 1
      %p773 = por %p771, %p772
      %p774 = scmp.ne.s32.totalorder %s765, %s766
      %p775 = scmp.eq.s32.totalorder %s109, 0
      %p776 = por %p774, %p775
      %p777 = scmp.ne.s32.totalorder %s765, %s766
      %p778 = scmp.eq.s32.totalorder %s110, 1
      %p779 = por %p777, %p778
      %p781 = scmp.ne.s32.totalorder %s766, %s780
      %p782 = scmp.eq.s32.totalorder %s110, 0
      %p783 = por %p781, %p782
      %s785 = sadd.s32 %s784, 1
      %p788 = scmp.eq.s32.totalorder %s104, 1
      %p789 = scmp.ne.s32.totalorder %s784, %s786
      %p790 = scmp.eq.s32.totalorder %s104, 0
      %p791 = por %p789, %p790
      %p792 = scmp.ne.s32.totalorder %s784, %s786
      %p793 = scmp.eq.s32.totalorder %s109, 1
      %p794 = por %p792, %p793
      %p795 = scmp.ne.s32.totalorder %s786, %s787
      %p796 = scmp.eq.s32.totalorder %s109, 0
      %p797 = por %p795, %p796
      %p798 = scmp.ne.s32.totalorder %s786, %s787
      %p799 = scmp.eq.s32.totalorder %s110, 1
      %p800 = por %p798, %p799
      %p802 = scmp.ne.s32.totalorder %s787, %s801
      %p803 = scmp.eq.s32.totalorder %s110, 0
      %p804 = por %p802, %p803
      %s806 = sadd.s32 %s805, 1
      %p809 = scmp.eq.s32.totalorder %s104, 1
      %p810 = scmp.ne.s32.totalorder %s805, %s807
      %p811 = scmp.eq.s32.totalorder %s104, 0
      %p812 = por %p810, %p811
      %p813 = scmp.ne.s32.totalorder %s805, %s807
      %p814 = scmp.eq.s32.totalorder %s109, 1
      %p815 = por %p813, %p814
      %p816 = scmp.ne.s32.totalorder %s807, %s808
      %p817 = scmp.eq.s32.totalorder %s109, 0
      %p818 = por %p816, %p817
      %p819 = scmp.ne.s32.totalorder %s807, %s808
      %p820 = scmp.eq.s32.totalorder %s110, 1
      %p821 = por %p819, %p820
      %p823 = scmp.ne.s32.totalorder %s808, %s822
      %p824 = scmp.eq.s32.totalorder %s110, 0
      %p825 = por %p823, %p824
      %s827 = sadd.s32 %s826, 1
      %p830 = scmp.eq.s32.totalorder %s104, 1
      %p831 = scmp.ne.s32.totalorder %s826, %s828
      %p832 = scmp.eq.s32.totalorder %s104, 0
      %p833 = por %p831, %p832
      %p834 = scmp.ne.s32.totalorder %s826, %s828
      %p835 = scmp.eq.s32.totalorder %s109, 1
      %p836 = por %p834, %p835
      %p837 = scmp.ne.s32.totalorder %s828, %s829
      %p838 = scmp.eq.s32.totalorder %s109, 0
      %p839 = por %p837, %p838
      %p840 = scmp.ne.s32.totalorder %s828, %s829
      %p841 = scmp.eq.s32.totalorder %s110, 1
      %p842 = por %p840, %p841
      %p844 = scmp.ne.s32.totalorder %s829, %s843
      %p845 = scmp.eq.s32.totalorder %s110, 0
      %p846 = por %p844, %p845
      %s848 = sadd.s32 %s847, 1
      %p851 = scmp.eq.s32.totalorder %s104, 1
      %p852 = scmp.ne.s32.totalorder %s847, %s849
      %p853 = scmp.eq.s32.totalorder %s104, 0
      %p854 = por %p852, %p853
      %p855 = scmp.ne.s32.totalorder %s847, %s849
      %p856 = scmp.eq.s32.totalorder %s109, 1
      %p857 = por %p855, %p856
      %p858 = scmp.ne.s32.totalorder %s849, %s850
      %p859 = scmp.eq.s32.totalorder %s109, 0
      %p860 = por %p858, %p859
      %p861 = scmp.ne.s32.totalorder %s849, %s850
      %p862 = scmp.eq.s32.totalorder %s110, 1
      %p863 = por %p861, %p862
      %p865 = scmp.ne.s32.totalorder %s850, %s864
      %p866 = scmp.eq.s32.totalorder %s110, 0
      %p867 = por %p865, %p866
      %s869 = sadd.s32 %s868, 1
      %p872 = scmp.eq.s32.totalorder %s104, 1
      %p873 = scmp.ne.s32.totalorder %s868, %s870
      %p874 = scmp.eq.s32.totalorder %s104, 0
      %p875 = por %p873, %p874
      %p876 = scmp.ne.s32.totalorder %s868, %s870
      %p877 = scmp.eq.s32.totalorder %s109, 1
      %p878 = por %p876, %p877
      %p879 = scmp.ne.s32.totalorder %s870, %s871
      %p880 = scmp.eq.s32.totalorder %s109, 0
      %p881 = por %p879, %p880
      %p882 = scmp.ne.s32.totalorder %s870, %s871
      %p883 = scmp.eq.s32.totalorder %s110, 1
      %p884 = por %p882, %p883
      %p886 = scmp.ne.s32.totalorder %s871, %s885
      %p887 = scmp.eq.s32.totalorder %s110, 0
      %p888 = por %p886, %p887
      %s890 = sadd.s32 %s889, 1
      %p893 = scmp.eq.s32.totalorder %s104, 1
      %p894 = scmp.ne.s32.totalorder %s889, %s891
      %p895 = scmp.eq.s32.totalorder %s104, 0
      %p896 = por %p894, %p895
      %p897 = scmp.ne.s32.totalorder %s889, %s891
      %p898 = scmp.eq.s32.totalorder %s109, 1
      %p899 = por %p897, %p898
      %p900 = scmp.ne.s32.totalorder %s891, %s892
      %p901 = scmp.eq.s32.totalorder %s109, 0
      %p902 = por %p900, %p901
      %p903 = scmp.ne.s32.totalorder %s891, %s892
      %p904 = scmp.eq.s32.totalorder %s110, 1
      %p905 = por %p903, %p904
      %p907 = scmp.ne.s32.totalorder %s892, %s906
      %p908 = scmp.eq.s32.totalorder %s110, 0
      %p909 = por %p907, %p908
      %s910 = ssub.s32 %s104, %s111
      %p911 = scmp.eq.s32.totalorder %s910, 0
      %s913 = sadd.s32 %s912, 1
      %s914 = scalar_select %p911, %s912, %s913
      %p917 = pneg %p911
      %p918 = scmp.eq.s32.totalorder %s104, 1
      %p919 = por %p917, %p918
      %p920 = scmp.ne.s32.totalorder %s912, %s915
      %p921 = scmp.eq.s32.totalorder %s104, 0
      %p922 = por %p920, %p921
      %p923 = scmp.ne.s32.totalorder %s912, %s915
      %p924 = scmp.eq.s32.totalorder %s109, 1
      %p925 = por %p923, %p924
      %p926 = scmp.ne.s32.totalorder %s915, %s916
      %p927 = scmp.eq.s32.totalorder %s109, 0
      %p928 = por %p926, %p927
      %p929 = scmp.ne.s32.totalorder %s915, %s916
      %p930 = scmp.eq.s32.totalorder %s110, 1
      %p931 = por %p929, %p930
      %p933 = scmp.ne.s32.totalorder %s916, %s932
      %p934 = scmp.eq.s32.totalorder %s110, 0
      %p935 = por %p933, %p934
      %s936 = ssub.s32 %s104, %s111
      %p937 = scmp.eq.s32.totalorder %s936, 0
      %s939 = sadd.s32 %s938, 1
      %s940 = scalar_select %p937, %s938, %s939
      %p943 = pneg %p937
      %p944 = scmp.eq.s32.totalorder %s104, 1
      %p945 = por %p943, %p944
      %p946 = scmp.ne.s32.totalorder %s938, %s941
      %p947 = scmp.eq.s32.totalorder %s104, 0
      %p948 = por %p946, %p947
      %p949 = scmp.ne.s32.totalorder %s938, %s941
      %p950 = scmp.eq.s32.totalorder %s109, 1
      %p951 = por %p949, %p950
      %p952 = scmp.ne.s32.totalorder %s941, %s942
      %p953 = scmp.eq.s32.totalorder %s109, 0
      %p954 = por %p952, %p953
      %p955 = scmp.ne.s32.totalorder %s941, %s942
      %p956 = scmp.eq.s32.totalorder %s110, 1
      %p957 = por %p955, %p956
      %p959 = scmp.ne.s32.totalorder %s942, %s958
      %p960 = scmp.eq.s32.totalorder %s110, 0
      %p961 = por %p959, %p960
      %s962 = ssub.s32 %s104, %s111
      %p963 = scmp.eq.s32.totalorder %s962, 0
      %s965 = sadd.s32 %s964, 1
      %s966 = scalar_select %p963, %s964, %s965
      %p969 = pneg %p963
      %p970 = scmp.eq.s32.totalorder %s104, 1
      %p971 = por %p969, %p970
      %p972 = scmp.ne.s32.totalorder %s964, %s967
      %p973 = scmp.eq.s32.totalorder %s104, 0
      %p974 = por %p972, %p973
      %p975 = scmp.ne.s32.totalorder %s964, %s967
      %p976 = scmp.eq.s32.totalorder %s109, 1
      %p977 = por %p975, %p976
      %p978 = scmp.ne.s32.totalorder %s967, %s968
      %p979 = scmp.eq.s32.totalorder %s109, 0
      %p980 = por %p978, %p979
      %p981 = scmp.ne.s32.totalorder %s967, %s968
      %p982 = scmp.eq.s32.totalorder %s110, 1
      %p983 = por %p981, %p982
      %p985 = scmp.ne.s32.totalorder %s968, %s984
      %p986 = scmp.eq.s32.totalorder %s110, 0
      %p987 = por %p985, %p986
      %p988 = scmp.le.s32.totalorder 1, %s104
      %p989 = scmp.lt.s32.totalorder %s104, 3
      %p990 = pnand %p988, %p989
      %p991 = pneg %p990
      // Predicated region
      $region9: #{transformer_ed_forward.1} parent=5 // pred_check
        _
      $region10: #{transformer_ed_forward.1} parent=5 // pred_check_branch
        %993 = sbr.rel (%p990) target = $region12
      $region11: #{transformer_ed_forward.1} parent=5 // pred_region
        %s994 = ssub.s32 %s104, 1
        // Predicated region
        $region13: #{transformer_ed_forward.1} parent=11 // pred_check
          %p995 = pneg %p125
        $region14: #{transformer_ed_forward.1} parent=11 // pred_check_branch
          %997 = sbr.rel (%p995) target = $region16
        $region15: #{transformer_ed_forward.1} parent=11 // pred_region
          _
        $region16: #{transformer_ed_forward.1} parent=11 // pred_fallthru
          _
        // Predicated region
        $region17: #{transformer_ed_forward.1} parent=11 // pred_check
          %p998 = pneg %p146
        $region18: #{transformer_ed_forward.1} parent=11 // pred_check_branch
          %1000 = sbr.rel (%p998) target = $region20
        $region19: #{transformer_ed_forward.1} parent=11 // pred_region
          _
        $region20: #{transformer_ed_forward.1} parent=11 // pred_fallthru
          _
        // Predicated region
        $region21: #{transformer_ed_forward.1} parent=11 // pred_check
          %p1001 = pneg %p167
        $region22: #{transformer_ed_forward.1} parent=11 // pred_check_branch
          %1003 = sbr.rel (%p1001) target = $region24
        $region23: #{transformer_ed_forward.1} parent=11 // pred_region
          _
        $region24: #{transformer_ed_forward.1} parent=11 // pred_fallthru
          _
        // Predicated region
        $region25: #{transformer_ed_forward.1} parent=11 // pred_check
          %p1004 = pneg %p188
        $region26: #{transformer_ed_forward.1} parent=11 // pred_check_branch
          %1006 = sbr.rel (%p1004) target = $region28
        $region27: #{transformer_ed_forward.1} parent=11 // pred_region
          _
        $region28: #{transformer_ed_forward.1} parent=11 // pred_fallthru
          _
        // Predicated region
        $region29: #{transformer_ed_forward.1} parent=11 // pred_check
          %p1007 = pneg %p209
        $region30: #{transformer_ed_forward.1} parent=11 // pred_check_branch
          %1009 = sbr.rel (%p1007) target = $region32
        $region31: #{transformer_ed_forward.1} parent=11 // pred_region
          _
        $region32: #{transformer_ed_forward.1} parent=11 // pred_fallthru
          _
        // Predicated region
        $region33: #{transformer_ed_forward.1} parent=11 // pred_check
          %p1010 = pneg %p230
        $region34: #{transformer_ed_forward.1} parent=11 // pred_check_branch
          %1012 = sbr.rel (%p1010) target = $region36
        $region35: #{transformer_ed_forward.1} parent=11 // pred_region
          _
        $region36: #{transformer_ed_forward.1} parent=11 // pred_fallthru
          _
        // Predicated region
        $region37: #{transformer_ed_forward.1} parent=11 // pred_check
          %p1013 = pneg %p251
        $region38: #{transformer_ed_forward.1} parent=11 // pred_check_branch
          %1015 = sbr.rel (%p1013) target = $region40
        $region39: #{transformer_ed_forward.1} parent=11 // pred_region
          _
        $region40: #{transformer_ed_forward.1} parent=11 // pred_fallthru
          _
        // Predicated region
        $region41: #{transformer_ed_forward.1} parent=11 // pred_check
          %p1016 = pneg %p272
        $region42: #{transformer_ed_forward.1} parent=11 // pred_check_branch
          %1018 = sbr.rel (%p1016) target = $region44
        $region43: #{transformer_ed_forward.1} parent=11 // pred_region
          _
        $region44: #{transformer_ed_forward.1} parent=11 // pred_fallthru
          _
        // Predicated region
        $region45: #{transformer_ed_forward.1} parent=11 // pred_check
          %p1019 = pneg %p293
        $region46: #{transformer_ed_forward.1} parent=11 // pred_check_branch
          %1021 = sbr.rel (%p1019) target = $region48
        $region47: #{transformer_ed_forward.1} parent=11 // pred_region
          _
        $region48: #{transformer_ed_forward.1} parent=11 // pred_fallthru
          _
        // Predicated region
        $region49: #{transformer_ed_forward.1} parent=11 // pred_check
          %p1022 = pneg %p314
        $region50: #{transformer_ed_forward.1} parent=11 // pred_check_branch
          %1024 = sbr.rel (%p1022) target = $region52
        $region51: #{transformer_ed_forward.1} parent=11 // pred_region
          _
        $region52: #{transformer_ed_forward.1} parent=11 // pred_fallthru
          _
        // Predicated region
        $region53: #{transformer_ed_forward.1} parent=11 // pred_check
          %p1025 = pneg %p335
        $region54: #{transformer_ed_forward.1} parent=11 // pred_check_branch
          %1027 = sbr.rel (%p1025) target = $region56
        $region55: #{transformer_ed_forward.1} parent=11 // pred_region
          %1029 = vsyncadd [#allocation3], 0
          %s1030 = sshll.u32 %s21, 4
          %s1031 = int_to_ptr.hbm [resolvable:$true] %s1030
          %s1032 = sshll.u32 [#allocation2], 4
          %s1033 = int_to_ptr.vmem [resolvable:$true] %s1032
          %1038 = dma.hbm_to_vmem [thread:$0]  %s1031, 256, %s1033, [#allocation3], 64, 64, 4
        $region56: #{transformer_ed_forward.1} parent=11 // pred_fallthru
          _
        // Predicated region
        $region57: #{transformer_ed_forward.1} parent=11 // pred_check
          %p1039 = pneg %p356
        $region58: #{transformer_ed_forward.1} parent=11 // pred_check_branch
          %1041 = sbr.rel (%p1039) target = $region60
        $region59: #{transformer_ed_forward.1} parent=11 // pred_region
          %1043 = vsyncadd [#allocation5], 0
          %s1044 = sshll.u32 %s23, 4
          %s1045 = int_to_ptr.hbm [resolvable:$true] %s1044
          %s1046 = sshll.u32 [#allocation4], 4
          %s1047 = int_to_ptr.vmem [resolvable:$true] %s1046
          %1052 = dma.hbm_to_vmem [thread:$0]  %s1045, 256, %s1047, [#allocation5], 64, 64, 4
        $region60: #{transformer_ed_forward.1} parent=11 // pred_fallthru
          _
        // Predicated region
        $region61: #{transformer_ed_forward.1} parent=11 // pred_check
          %p1053 = pneg %p377
        $region62: #{transformer_ed_forward.1} parent=11 // pred_check_branch
          %1055 = sbr.rel (%p1053) target = $region64
        $region63: #{transformer_ed_forward.1} parent=11 // pred_region
          %1057 = vsyncadd [#allocation5], 0
          %s1058 = sshll.u32 %s25, 4
          %s1059 = int_to_ptr.hbm [resolvable:$true] %s1058
          %s1060 = sshll.u32 [#allocation6], 4
          %s1061 = int_to_ptr.vmem [resolvable:$true] %s1060
          %1066 = dma.hbm_to_vmem [thread:$0]  %s1059, 256, %s1061, [#allocation5], 64, 64, 4
        $region64: #{transformer_ed_forward.1} parent=11 // pred_fallthru
          _
        // Predicated region
        $region65: #{transformer_ed_forward.1} parent=11 // pred_check
          %p1067 = pneg %p398
        $region66: #{transformer_ed_forward.1} parent=11 // pred_check_branch
          %1069 = sbr.rel (%p1067) target = $region68
        $region67: #{transformer_ed_forward.1} parent=11 // pred_region
          %1071 = vsyncadd [#allocation8], 0
          %s1072 = sshll.u32 %s27, 4
          %s1073 = int_to_ptr.hbm [resolvable:$true] %s1072
          %s1074 = sshll.u32 [#allocation7], 4
          %s1075 = int_to_ptr.vmem [resolvable:$true] %s1074
          %1080 = dma.hbm_to_vmem [thread:$0]  %s1073, 256, %s1075, [#allocation8], 64, 64, 4
        $region68: #{transformer_ed_forward.1} parent=11 // pred_fallthru
          _
        // Predicated region
        $region69: #{transformer_ed_forward.1} parent=11 // pred_check
          %p1081 = pneg %p419
        $region70: #{transformer_ed_forward.1} parent=11 // pred_check_branch
          %1083 = sbr.rel (%p1081) target = $region72
        $region71: #{transformer_ed_forward.1} parent=11 // pred_region
          _
        $region72: #{transformer_ed_forward.1} parent=11 // pred_fallthru
          _
        // Predicated region
        $region73: #{transformer_ed_forward.1} parent=11 // pred_check
          %p1084 = pneg %p440
        $region74: #{transformer_ed_forward.1} parent=11 // pred_check_branch
          %1086 = sbr.rel (%p1084) target = $region76
        $region75: #{transformer_ed_forward.1} parent=11 // pred_region
          %1088 = vsyncadd [#allocation8], 0
          %s1090 = sshll.u32 %s31, 4
          %s1091 = int_to_ptr.hbm [resolvable:$true] %s1090
          %s1092 = sshll.u32 [#allocation9], 4
          %s1093 = int_to_ptr.vmem [resolvable:$true] %s1092
          %1095 = dma.hbm_to_vmem [thread:$0]  %s1091, 16, %s1093, [#allocation8]
        $region76: #{transformer_ed_forward.1} parent=11 // pred_fallthru
          _
        // Predicated region
        $region77: #{transformer_ed_forward.1} parent=11 // pred_check
          %p1096 = pneg %p461
        $region78: #{transformer_ed_forward.1} parent=11 // pred_check_branch
          %1098 = sbr.rel (%p1096) target = $region80
        $region79: #{transformer_ed_forward.1} parent=11 // pred_region
          %1100 = vsyncadd [#allocation11], 0
          %s1102 = sshll.u32 %s33, 4
          %s1103 = int_to_ptr.hbm [resolvable:$true] %s1102
          %s1104 = sshll.u32 [#allocation10], 4
          %s1105 = int_to_ptr.vmem [resolvable:$true] %s1104
          %1107 = dma.hbm_to_vmem [thread:$0]  %s1103, 16, %s1105, [#allocation11]
        $region80: #{transformer_ed_forward.1} parent=11 // pred_fallthru
          _
        // Predicated region
        $region81: #{transformer_ed_forward.1} parent=11 // pred_check
          %p1108 = pneg %p482
        $region82: #{transformer_ed_forward.1} parent=11 // pred_check_branch
          %1110 = sbr.rel (%p1108) target = $region84
        $region83: #{transformer_ed_forward.1} parent=11 // pred_region
          %1112 = vsyncadd [#allocation11], 0
          %s1114 = sshll.u32 %s35, 4
          %s1115 = int_to_ptr.hbm [resolvable:$true] %s1114
          %s1116 = sshll.u32 [#allocation12], 4
          %s1117 = int_to_ptr.vmem [resolvable:$true] %s1116
          %1119 = dma.hbm_to_vmem [thread:$0]  %s1115, 16, %s1117, [#allocation11]
        $region84: #{transformer_ed_forward.1} parent=11 // pred_fallthru
          _
        // Predicated region
        $region85: #{transformer_ed_forward.1} parent=11 // pred_check
          %p1120 = pneg %p503
        $region86: #{transformer_ed_forward.1} parent=11 // pred_check_branch
          %1122 = sbr.rel (%p1120) target = $region88
        $region87: #{transformer_ed_forward.1} parent=11 // pred_region
          %1124 = vsyncadd [#allocation14], 0
          %s1126 = sshll.u32 %s37, 4
          %s1127 = int_to_ptr.hbm [resolvable:$true] %s1126
          %s1128 = sshll.u32 [#allocation13], 4
          %s1129 = int_to_ptr.vmem [resolvable:$true] %s1128
          %1131 = dma.hbm_to_vmem [thread:$0]  %s1127, 16, %s1129, [#allocation14]
        $region88: #{transformer_ed_forward.1} parent=11 // pred_fallthru
          _
        // Predicated region
        $region89: #{transformer_ed_forward.1} parent=11 // pred_check
          %p1132 = pneg %p524
        $region90: #{transformer_ed_forward.1} parent=11 // pred_check_branch
          %1134 = sbr.rel (%p1132) target = $region92
        $region91: #{transformer_ed_forward.1} parent=11 // pred_region
          %1136 = vsyncadd [#allocation14], 0
          %s1138 = sshll.u32 %s39, 4
          %s1139 = int_to_ptr.hbm [resolvable:$true] %s1138
          %s1140 = sshll.u32 [#allocation15], 4
          %s1141 = int_to_ptr.vmem [resolvable:$true] %s1140
          %1143 = dma.hbm_to_vmem [thread:$0]  %s1139, 16, %s1141, [#allocation14]
        $region92: #{transformer_ed_forward.1} parent=11 // pred_fallthru
          _
        // Predicated region
        $region93: #{transformer_ed_forward.1} parent=11 // pred_check
          %p1144 = pneg %p545
        $region94: #{transformer_ed_forward.1} parent=11 // pred_check_branch
          %1146 = sbr.rel (%p1144) target = $region96
        $region95: #{transformer_ed_forward.1} parent=11 // pred_region
          %1148 = vsyncadd [#allocation17], 0
          %s1150 = sshll.u32 %s41, 4
          %s1151 = int_to_ptr.hbm [resolvable:$true] %s1150
          %s1152 = sshll.u32 [#allocation16], 4
          %s1153 = int_to_ptr.vmem [resolvable:$true] %s1152
          %1155 = dma.hbm_to_vmem [thread:$0]  %s1151, 16, %s1153, [#allocation17]
        $region96: #{transformer_ed_forward.1} parent=11 // pred_fallthru
          _
        // Predicated region
        $region97: #{transformer_ed_forward.1} parent=11 // pred_check
          %p1156 = pneg %p566
        $region98: #{transformer_ed_forward.1} parent=11 // pred_check_branch
          %1158 = sbr.rel (%p1156) target = $region100
        $region99: #{transformer_ed_forward.1} parent=11 // pred_region
          %1160 = vsyncadd [#allocation17], 0
          %s1162 = sshll.u32 %s43, 4
          %s1163 = int_to_ptr.hbm [resolvable:$true] %s1162
          %s1164 = sshll.u32 [#allocation18], 4
          %s1165 = int_to_ptr.vmem [resolvable:$true] %s1164
          %1167 = dma.hbm_to_vmem [thread:$0]  %s1163, 16, %s1165, [#allocation17]
        $region100: #{transformer_ed_forward.1} parent=11 // pred_fallthru
          _
        // Predicated region
        $region101: #{transformer_ed_forward.1} parent=11 // pred_check
          %p1168 = pneg %p587
        $region102: #{transformer_ed_forward.1} parent=11 // pred_check_branch
          %1170 = sbr.rel (%p1168) target = $region104
        $region103: #{transformer_ed_forward.1} parent=11 // pred_region
          %1172 = vsyncadd [#allocation20], 0
          %s1174 = sshll.u32 %s45, 4
          %s1175 = int_to_ptr.hbm [resolvable:$true] %s1174
          %s1176 = sshll.u32 [#allocation19], 4
          %s1177 = int_to_ptr.vmem [resolvable:$true] %s1176
          %1179 = dma.hbm_to_vmem [thread:$0]  %s1175, 16, %s1177, [#allocation20]
        $region104: #{transformer_ed_forward.1} parent=11 // pred_fallthru
          _
        // Predicated region
        $region105: #{transformer_ed_forward.1} parent=11 // pred_check
          %p1180 = pneg %p608
        $region106: #{transformer_ed_forward.1} parent=11 // pred_check_branch
          %1182 = sbr.rel (%p1180) target = $region108
        $region107: #{transformer_ed_forward.1} parent=11 // pred_region
          %1184 = vsyncadd [#allocation20], 0
          %s1186 = sshll.u32 %s47, 4
          %s1187 = int_to_ptr.hbm [resolvable:$true] %s1186
          %s1188 = sshll.u32 [#allocation21], 4
          %s1189 = int_to_ptr.vmem [resolvable:$true] %s1188
          %1191 = dma.hbm_to_vmem [thread:$0]  %s1187, 16, %s1189, [#allocation20]
        $region108: #{transformer_ed_forward.1} parent=11 // pred_fallthru
          _
        // Predicated region
        $region109: #{transformer_ed_forward.1} parent=11 // pred_check
          %p1192 = pneg %p629
        $region110: #{transformer_ed_forward.1} parent=11 // pred_check_branch
          %1194 = sbr.rel (%p1192) target = $region112
        $region111: #{transformer_ed_forward.1} parent=11 // pred_region
          %1196 = vsyncadd [#allocation23], 0
          %s1198 = sshll.u32 %s49, 4
          %s1199 = int_to_ptr.hbm [resolvable:$true] %s1198
          %s1200 = sshll.u32 [#allocation22], 4
          %s1201 = int_to_ptr.vmem [resolvable:$true] %s1200
          %1203 = dma.hbm_to_vmem [thread:$0]  %s1199, 128, %s1201, [#allocation23]
        $region112: #{transformer_ed_forward.1} parent=11 // pred_fallthru
          _
        // Predicated region
        $region113: #{transformer_ed_forward.1} parent=11 // pred_check
          %p1204 = pneg %p650
        $region114: #{transformer_ed_forward.1} parent=11 // pred_check_branch
          %1206 = sbr.rel (%p1204) target = $region116
        $region115: #{transformer_ed_forward.1} parent=11 // pred_region
          %1208 = vsyncadd [#allocation23], 0
          %s1209 = sshll.u32 %s51, 4
          %s1210 = int_to_ptr.hbm [resolvable:$true] %s1209
          %s1211 = sshll.u32 [#allocation24], 4
          %s1212 = int_to_ptr.vmem [resolvable:$true] %s1211
          %1217 = dma.hbm_to_vmem [thread:$0]  %s1210, 128, %s1212, [#allocation23], 64, 64, 4
        $region116: #{transformer_ed_forward.1} parent=11 // pred_fallthru
          _
        // Predicated region
        $region117: #{transformer_ed_forward.1} parent=11 // pred_check
          %p1218 = pneg %p671
        $region118: #{transformer_ed_forward.1} parent=11 // pred_check_branch
          %1220 = sbr.rel (%p1218) target = $region120
        $region119: #{transformer_ed_forward.1} parent=11 // pred_region
          %1222 = vsyncadd [#allocation26], 0
          %s1224 = sshll.u32 %s53, 4
          %s1225 = int_to_ptr.hbm [resolvable:$true] %s1224
          %s1226 = sshll.u32 [#allocation25], 4
          %s1227 = int_to_ptr.vmem [resolvable:$true] %s1226
          %1229 = dma.hbm_to_vmem [thread:$0]  %s1225, 16, %s1227, [#allocation26]
        $region120: #{transformer_ed_forward.1} parent=11 // pred_fallthru
          _
        // Predicated region
        $region121: #{transformer_ed_forward.1} parent=11 // pred_check
          %p1230 = pneg %p692
        $region122: #{transformer_ed_forward.1} parent=11 // pred_check_branch
          %1232 = sbr.rel (%p1230) target = $region124
        $region123: #{transformer_ed_forward.1} parent=11 // pred_region
          %1234 = vsyncadd [#allocation26], 0
          %s1235 = sshll.u32 %s55, 4
          %s1236 = int_to_ptr.hbm [resolvable:$true] %s1235
          %s1237 = sshll.u32 [#allocation27], 4
          %s1238 = int_to_ptr.vmem [resolvable:$true] %s1237
          %1243 = dma.hbm_to_vmem [thread:$0]  %s1236, 256, %s1238, [#allocation26], 64, 64, 4
        $region124: #{transformer_ed_forward.1} parent=11 // pred_fallthru
          _
        // Predicated region
        $region125: #{transformer_ed_forward.1} parent=11 // pred_check
          %p1244 = pneg %p713
        $region126: #{transformer_ed_forward.1} parent=11 // pred_check_branch
          %1246 = sbr.rel (%p1244) target = $region128
        $region127: #{transformer_ed_forward.1} parent=11 // pred_region
          %1248 = vsyncadd [#allocation29], 0
          %s1250 = sshll.u32 %s57, 4
          %s1251 = int_to_ptr.hbm [resolvable:$true] %s1250
          %s1252 = sshll.u32 [#allocation28], 4
          %s1253 = int_to_ptr.vmem [resolvable:$true] %s1252
          %1255 = dma.hbm_to_vmem [thread:$0]  %s1251, 16, %s1253, [#allocation29]
        $region128: #{transformer_ed_forward.1} parent=11 // pred_fallthru
          _
        // Predicated region
        $region129: #{transformer_ed_forward.1} parent=11 // pred_check
          %p1256 = pneg %p734
        $region130: #{transformer_ed_forward.1} parent=11 // pred_check_branch
          %1258 = sbr.rel (%p1256) target = $region132
        $region131: #{transformer_ed_forward.1} parent=11 // pred_region
          %1260 = vsyncadd [#allocation29], 0
          %s1261 = sshll.u32 %s59, 4
          %s1262 = int_to_ptr.hbm [resolvable:$true] %s1261
          %s1263 = sshll.u32 [#allocation30], 4
          %s1264 = int_to_ptr.vmem [resolvable:$true] %s1263
          %1269 = dma.hbm_to_vmem [thread:$0]  %s1262, 256, %s1264, [#allocation29], 64, 64, 4
        $region132: #{transformer_ed_forward.1} parent=11 // pred_fallthru
          _
        // Predicated region
        $region133: #{transformer_ed_forward.1} parent=11 // pred_check
          %p1270 = pneg %p755
        $region134: #{transformer_ed_forward.1} parent=11 // pred_check_branch
          %1272 = sbr.rel (%p1270) target = $region136
        $region135: #{transformer_ed_forward.1} parent=11 // pred_region
          %1274 = vsyncadd [#allocation32], 0
          %s1276 = sshll.u32 %s61, 4
          %s1277 = int_to_ptr.hbm [resolvable:$true] %s1276
          %s1278 = sshll.u32 [#allocation31], 4
          %s1279 = int_to_ptr.vmem [resolvable:$true] %s1278
          %1281 = dma.hbm_to_vmem [thread:$0]  %s1277, 16, %s1279, [#allocation32]
        $region136: #{transformer_ed_forward.1} parent=11 // pred_fallthru
          _
        // Predicated region
        $region137: #{transformer_ed_forward.1} parent=11 // pred_check
          %p1282 = pneg %p776
        $region138: #{transformer_ed_forward.1} parent=11 // pred_check_branch
          %1284 = sbr.rel (%p1282) target = $region140
        $region139: #{transformer_ed_forward.1} parent=11 // pred_region
          %1286 = vsyncadd [#allocation32], 0
          %s1287 = sshll.u32 %s63, 4
          %s1288 = int_to_ptr.hbm [resolvable:$true] %s1287
          %s1289 = sshll.u32 [#allocation33], 4
          %s1290 = int_to_ptr.vmem [resolvable:$true] %s1289
          %1295 = dma.hbm_to_vmem [thread:$0]  %s1288, 256, %s1290, [#allocation32], 64, 64, 4
        $region140: #{transformer_ed_forward.1} parent=11 // pred_fallthru
          _
        // Predicated region
        $region141: #{transformer_ed_forward.1} parent=11 // pred_check
          %p1296 = pneg %p797
        $region142: #{transformer_ed_forward.1} parent=11 // pred_check_branch
          %1298 = sbr.rel (%p1296) target = $region144
        $region143: #{transformer_ed_forward.1} parent=11 // pred_region
          %1300 = vsyncadd [#allocation35], 0
          %s1301 = sshll.u32 %s65, 4
          %s1302 = int_to_ptr.hbm [resolvable:$true] %s1301
          %s1303 = sshll.u32 [#allocation34], 4
          %s1304 = int_to_ptr.vmem [resolvable:$true] %s1303
          %1309 = dma.hbm_to_vmem [thread:$0]  %s1302, 256, %s1304, [#allocation35], 64, 64, 4
        $region144: #{transformer_ed_forward.1} parent=11 // pred_fallthru
          _
        // Predicated region
        $region145: #{transformer_ed_forward.1} parent=11 // pred_check
          %p1310 = pneg %p818
        $region146: #{transformer_ed_forward.1} parent=11 // pred_check_branch
          %1312 = sbr.rel (%p1310) target = $region148
        $region147: #{transformer_ed_forward.1} parent=11 // pred_region
          %1314 = vsyncadd [#allocation35], 0
          %s1316 = sshll.u32 %s67, 4
          %s1317 = int_to_ptr.hbm [resolvable:$true] %s1316
          %s1318 = sshll.u32 [#allocation36], 4
          %s1319 = int_to_ptr.vmem [resolvable:$true] %s1318
          %1321 = dma.hbm_to_vmem [thread:$0]  %s1317, 16, %s1319, [#allocation35]
        $region148: #{transformer_ed_forward.1} parent=11 // pred_fallthru
          _
        // Predicated region
        $region149: #{transformer_ed_forward.1} parent=11 // pred_check
          %p1322 = pneg %p839
        $region150: #{transformer_ed_forward.1} parent=11 // pred_check_branch
          %1324 = sbr.rel (%p1322) target = $region152
        $region151: #{transformer_ed_forward.1} parent=11 // pred_region
          %1326 = vsyncadd [#allocation38], 0
          %s1328 = sshll.u32 %s69, 4
          %s1329 = int_to_ptr.hbm [resolvable:$true] %s1328
          %s1330 = sshll.u32 [#allocation37], 4
          %s1331 = int_to_ptr.vmem [resolvable:$true] %s1330
          %1333 = dma.hbm_to_vmem [thread:$0]  %s1329, 16, %s1331, [#allocation38]
        $region152: #{transformer_ed_forward.1} parent=11 // pred_fallthru
          _
        // Predicated region
        $region153: #{transformer_ed_forward.1} parent=11 // pred_check
          %p1334 = pneg %p860
        $region154: #{transformer_ed_forward.1} parent=11 // pred_check_branch
          %1336 = sbr.rel (%p1334) target = $region156
        $region155: #{transformer_ed_forward.1} parent=11 // pred_region
          %1338 = vsyncadd [#allocation38], 0
          %s1340 = sshll.u32 %s71, 4
          %s1341 = int_to_ptr.hbm [resolvable:$true] %s1340
          %s1342 = sshll.u32 [#allocation39], 4
          %s1343 = int_to_ptr.vmem [resolvable:$true] %s1342
          %1345 = dma.hbm_to_vmem [thread:$0]  %s1341, 16, %s1343, [#allocation38]
        $region156: #{transformer_ed_forward.1} parent=11 // pred_fallthru
          _
        // Predicated region
        $region157: #{transformer_ed_forward.1} parent=11 // pred_check
          %p1346 = pneg %p881
        $region158: #{transformer_ed_forward.1} parent=11 // pred_check_branch
          %1348 = sbr.rel (%p1346) target = $region160
        $region159: #{transformer_ed_forward.1} parent=11 // pred_region
          %1350 = vsyncadd [#allocation41], 0
          %s1352 = sshll.u32 %s73, 4
          %s1353 = int_to_ptr.hbm [resolvable:$true] %s1352
          %s1354 = sshll.u32 [#allocation40], 4
          %s1355 = int_to_ptr.vmem [resolvable:$true] %s1354
          %1357 = dma.hbm_to_vmem [thread:$0]  %s1353, 16, %s1355, [#allocation41]
        $region160: #{transformer_ed_forward.1} parent=11 // pred_fallthru
          _
        // Predicated region
        $region161: #{transformer_ed_forward.1} parent=11 // pred_check
          %p1358 = pneg %p902
        $region162: #{transformer_ed_forward.1} parent=11 // pred_check_branch
          %1360 = sbr.rel (%p1358) target = $region164
        $region163: #{transformer_ed_forward.1} parent=11 // pred_region
          %1362 = vsyncadd [#allocation41], 0
          %s1364 = sshll.u32 %s75, 4
          %s1365 = int_to_ptr.hbm [resolvable:$true] %s1364
          %s1366 = sshll.u32 [#allocation42], 4
          %s1367 = int_to_ptr.vmem [resolvable:$true] %s1366
          %1369 = dma.hbm_to_vmem [thread:$0]  %s1365, 128, %s1367, [#allocation41]
        $region164: #{transformer_ed_forward.1} parent=11 // pred_fallthru
          _
      $region12: #{transformer_ed_forward.1} parent=5 // pred_fallthru
        _
      %p1370 = scmp.lt.s32.totalorder %s104, 2
      // Predicated region
      $region165: #{transformer_ed_forward.1} parent=5 // pred_check
        %p1371 = pneg %p1370
      $region166: #{transformer_ed_forward.1} parent=5 // pred_check_branch
        %1373 = sbr.rel (%p1371) target = $region168
      $region167: #{transformer_ed_forward.1} parent=5 // pred_region
        // Predicated region
        $region169: #{transformer_ed_forward.1} parent=167 // pred_check
          %p1374 = pneg %p922
        $region170: #{transformer_ed_forward.1} parent=167 // pred_check_branch
          %1376 = sbr.rel (%p1374) target = $region172
        $region171: #{transformer_ed_forward.1} parent=167 // pred_region
          %s1377 = sand.u32 %s912, 1
          %s1378 = scalar_lea.sflag [#allocation44], %s1377
          %s1379 = sand.u32 %s912, 1
          %s1380 = smul.addr %s1379, 8
          %s1381 = scalar_lea.vmem [#allocation43], %s1380
          %1383 = vsyncadd %s1378, 0
          %s1384 = smul.addr %s104, 8
          %s1385 = scalar_lea.hbm %s77, %s1384
          %s1387 = sshll.u32 %s1385, 4
          %s1388 = int_to_ptr.hbm [resolvable:$true] %s1387
          %s1389 = sshll.u32 %s1381, 4
          %s1390 = int_to_ptr.vmem [resolvable:$true] %s1389
          %1392 = dma.hbm_to_vmem [thread:$0]  %s1388, 128, %s1390, %s1378
        $region172: #{transformer_ed_forward.1} parent=167 // pred_fallthru
          _
        // Predicated region
        $region173: #{transformer_ed_forward.1} parent=167 // pred_check
          %p1393 = pneg %p948
        $region174: #{transformer_ed_forward.1} parent=167 // pred_check_branch
          %1395 = sbr.rel (%p1393) target = $region176
        $region175: #{transformer_ed_forward.1} parent=167 // pred_region
          %p1396 = scmp.lt.s32.totalorder %s104, 1
          %s1397 = scalar_select %p1396, %s104, 1
          %s1398 = smul.addr %s1397, 8
          %s1399 = scalar_lea.vmem %s79, %s1398
        $region176: #{transformer_ed_forward.1} parent=167 // pred_fallthru
          _
      $region168: #{transformer_ed_forward.1} parent=5 // pred_fallthru
        _
      %p1400 = scmp.le.s32.totalorder 1, %s104
      %p1401 = scmp.lt.s32.totalorder %s104, 3
      %p1402 = pnand %p1400, %p1401
      %p1403 = pneg %p1402
      // Predicated region
      $region177: #{transformer_ed_forward.1} parent=5 // pred_check
        _
      $region178: #{transformer_ed_forward.1} parent=5 // pred_check_branch
        %1405 = sbr.rel (%p1402) target = $region180
      $region179: #{transformer_ed_forward.1} parent=5 // pred_region
        %s1406 = ssub.s32 %s104, 1
        // Predicated region
        $region181: #{transformer_ed_forward.1} parent=179 // pred_check
          %p1407 = pneg %p335
        $region182: #{transformer_ed_forward.1} parent=179 // pred_check_branch
          %1409 = sbr.rel (%p1407) target = $region184
        $region183: #{transformer_ed_forward.1} parent=179 // pred_region
          %1411 = dma.done [#allocation3], 256
        $region184: #{transformer_ed_forward.1} parent=179 // pred_fallthru
          _
        // Predicated region
        $region185: #{transformer_ed_forward.1} parent=179 // pred_check
          %p1412 = pneg %p356
        $region186: #{transformer_ed_forward.1} parent=179 // pred_check_branch
          %1414 = sbr.rel (%p1412) target = $region188
        $region187: #{transformer_ed_forward.1} parent=179 // pred_region
          %1416 = dma.done [#allocation5], 256
        $region188: #{transformer_ed_forward.1} parent=179 // pred_fallthru
          _
        // Predicated region
        $region189: #{transformer_ed_forward.1} parent=179 // pred_check
          %p1417 = pneg %p377
        $region190: #{transformer_ed_forward.1} parent=179 // pred_check_branch
          %1419 = sbr.rel (%p1417) target = $region192
        $region191: #{transformer_ed_forward.1} parent=179 // pred_region
          %1421 = dma.done [#allocation5], 256
        $region192: #{transformer_ed_forward.1} parent=179 // pred_fallthru
          _
        // Predicated region
        $region193: #{transformer_ed_forward.1} parent=179 // pred_check
          %p1422 = pneg %p398
        $region194: #{transformer_ed_forward.1} parent=179 // pred_check_branch
          %1424 = sbr.rel (%p1422) target = $region196
        $region195: #{transformer_ed_forward.1} parent=179 // pred_region
          %1426 = dma.done [#allocation8], 256
        $region196: #{transformer_ed_forward.1} parent=179 // pred_fallthru
          _
        // Predicated region
        $region197: #{transformer_ed_forward.1} parent=179 // pred_check
          %p1427 = pneg %p440
        $region198: #{transformer_ed_forward.1} parent=179 // pred_check_branch
          %1429 = sbr.rel (%p1427) target = $region200
        $region199: #{transformer_ed_forward.1} parent=179 // pred_region
          %1431 = dma.done [#allocation8], 16
        $region200: #{transformer_ed_forward.1} parent=179 // pred_fallthru
          _
        // Predicated region
        $region201: #{transformer_ed_forward.1} parent=179 // pred_check
          %p1432 = pneg %p461
        $region202: #{transformer_ed_forward.1} parent=179 // pred_check_branch
          %1434 = sbr.rel (%p1432) target = $region204
        $region203: #{transformer_ed_forward.1} parent=179 // pred_region
          %1436 = dma.done [#allocation11], 16
        $region204: #{transformer_ed_forward.1} parent=179 // pred_fallthru
          _
        // Predicated region
        $region205: #{transformer_ed_forward.1} parent=179 // pred_check
          %p1437 = pneg %p482
        $region206: #{transformer_ed_forward.1} parent=179 // pred_check_branch
          %1439 = sbr.rel (%p1437) target = $region208
        $region207: #{transformer_ed_forward.1} parent=179 // pred_region
          %1441 = dma.done [#allocation11], 16
        $region208: #{transformer_ed_forward.1} parent=179 // pred_fallthru
          _
        // Predicated region
        $region209: #{transformer_ed_forward.1} parent=179 // pred_check
          %p1442 = pneg %p503
        $region210: #{transformer_ed_forward.1} parent=179 // pred_check_branch
          %1444 = sbr.rel (%p1442) target = $region212
        $region211: #{transformer_ed_forward.1} parent=179 // pred_region
          %1446 = dma.done [#allocation14], 16
        $region212: #{transformer_ed_forward.1} parent=179 // pred_fallthru
          _
        // Predicated region
        $region213: #{transformer_ed_forward.1} parent=179 // pred_check
          %p1447 = pneg %p524
        $region214: #{transformer_ed_forward.1} parent=179 // pred_check_branch
          %1449 = sbr.rel (%p1447) target = $region216
        $region215: #{transformer_ed_forward.1} parent=179 // pred_region
          %1451 = dma.done [#allocation14], 16
        $region216: #{transformer_ed_forward.1} parent=179 // pred_fallthru
          _
        // Predicated region
        $region217: #{transformer_ed_forward.1} parent=179 // pred_check
          %p1452 = pneg %p545
        $region218: #{transformer_ed_forward.1} parent=179 // pred_check_branch
          %1454 = sbr.rel (%p1452) target = $region220
        $region219: #{transformer_ed_forward.1} parent=179 // pred_region
          %1456 = dma.done [#allocation17], 16
        $region220: #{transformer_ed_forward.1} parent=179 // pred_fallthru
          _
        // Predicated region
        $region221: #{transformer_ed_forward.1} parent=179 // pred_check
          %p1457 = pneg %p566
        $region222: #{transformer_ed_forward.1} parent=179 // pred_check_branch
          %1459 = sbr.rel (%p1457) target = $region224
        $region223: #{transformer_ed_forward.1} parent=179 // pred_region
          %1461 = dma.done [#allocation17], 16
        $region224: #{transformer_ed_forward.1} parent=179 // pred_fallthru
          _
        // Predicated region
        $region225: #{transformer_ed_forward.1} parent=179 // pred_check
          %p1462 = pneg %p587
        $region226: #{transformer_ed_forward.1} parent=179 // pred_check_branch
          %1464 = sbr.rel (%p1462) target = $region228
        $region227: #{transformer_ed_forward.1} parent=179 // pred_region
          %1466 = dma.done [#allocation20], 16
        $region228: #{transformer_ed_forward.1} parent=179 // pred_fallthru
          _
        // Predicated region
        $region229: #{transformer_ed_forward.1} parent=179 // pred_check
          %p1467 = pneg %p608
        $region230: #{transformer_ed_forward.1} parent=179 // pred_check_branch
          %1469 = sbr.rel (%p1467) target = $region232
        $region231: #{transformer_ed_forward.1} parent=179 // pred_region
          %1471 = dma.done [#allocation20], 16
        $region232: #{transformer_ed_forward.1} parent=179 // pred_fallthru
          _
        // Predicated region
        $region233: #{transformer_ed_forward.1} parent=179 // pred_check
          %p1472 = pneg %p629
        $region234: #{transformer_ed_forward.1} parent=179 // pred_check_branch
          %1474 = sbr.rel (%p1472) target = $region236
        $region235: #{transformer_ed_forward.1} parent=179 // pred_region
          %1476 = dma.done [#allocation23], 128
        $region236: #{transformer_ed_forward.1} parent=179 // pred_fallthru
          _
        // Predicated region
        $region237: #{transformer_ed_forward.1} parent=179 // pred_check
          %p1477 = pneg %p650
        $region238: #{transformer_ed_forward.1} parent=179 // pred_check_branch
          %1479 = sbr.rel (%p1477) target = $region240
        $region239: #{transformer_ed_forward.1} parent=179 // pred_region
          %1481 = dma.done [#allocation23], 128
        $region240: #{transformer_ed_forward.1} parent=179 // pred_fallthru
          _
        // Predicated region
        $region241: #{transformer_ed_forward.1} parent=179 // pred_check
          %p1482 = pneg %p671
        $region242: #{transformer_ed_forward.1} parent=179 // pred_check_branch
          %1484 = sbr.rel (%p1482) target = $region244
        $region243: #{transformer_ed_forward.1} parent=179 // pred_region
          %1486 = dma.done [#allocation26], 16
        $region244: #{transformer_ed_forward.1} parent=179 // pred_fallthru
          _
        // Predicated region
        $region245: #{transformer_ed_forward.1} parent=179 // pred_check
          %p1487 = pneg %p692
        $region246: #{transformer_ed_forward.1} parent=179 // pred_check_branch
          %1489 = sbr.rel (%p1487) target = $region248
        $region247: #{transformer_ed_forward.1} parent=179 // pred_region
          %1491 = dma.done [#allocation26], 256
        $region248: #{transformer_ed_forward.1} parent=179 // pred_fallthru
          _
        // Predicated region
        $region249: #{transformer_ed_forward.1} parent=179 // pred_check
          %p1492 = pneg %p713
        $region250: #{transformer_ed_forward.1} parent=179 // pred_check_branch
          %1494 = sbr.rel (%p1492) target = $region252
        $region251: #{transformer_ed_forward.1} parent=179 // pred_region
          %1496 = dma.done [#allocation29], 16
        $region252: #{transformer_ed_forward.1} parent=179 // pred_fallthru
          _
        // Predicated region
        $region253: #{transformer_ed_forward.1} parent=179 // pred_check
          %p1497 = pneg %p734
        $region254: #{transformer_ed_forward.1} parent=179 // pred_check_branch
          %1499 = sbr.rel (%p1497) target = $region256
        $region255: #{transformer_ed_forward.1} parent=179 // pred_region
          %1501 = dma.done [#allocation29], 256
        $region256: #{transformer_ed_forward.1} parent=179 // pred_fallthru
          _
        // Predicated region
        $region257: #{transformer_ed_forward.1} parent=179 // pred_check
          %p1502 = pneg %p755
        $region258: #{transformer_ed_forward.1} parent=179 // pred_check_branch
          %1504 = sbr.rel (%p1502) target = $region260
        $region259: #{transformer_ed_forward.1} parent=179 // pred_region
          %1506 = dma.done [#allocation32], 16
        $region260: #{transformer_ed_forward.1} parent=179 // pred_fallthru
          _
        // Predicated region
        $region261: #{transformer_ed_forward.1} parent=179 // pred_check
          %p1507 = pneg %p776
        $region262: #{transformer_ed_forward.1} parent=179 // pred_check_branch
          %1509 = sbr.rel (%p1507) target = $region264
        $region263: #{transformer_ed_forward.1} parent=179 // pred_region
          %1511 = dma.done [#allocation32], 256
        $region264: #{transformer_ed_forward.1} parent=179 // pred_fallthru
          _
        // Predicated region
        $region265: #{transformer_ed_forward.1} parent=179 // pred_check
          %p1512 = pneg %p797
        $region266: #{transformer_ed_forward.1} parent=179 // pred_check_branch
          %1514 = sbr.rel (%p1512) target = $region268
        $region267: #{transformer_ed_forward.1} parent=179 // pred_region
          %1516 = dma.done [#allocation35], 256
        $region268: #{transformer_ed_forward.1} parent=179 // pred_fallthru
          _
        // Predicated region
        $region269: #{transformer_ed_forward.1} parent=179 // pred_check
          %p1517 = pneg %p818
        $region270: #{transformer_ed_forward.1} parent=179 // pred_check_branch
          %1519 = sbr.rel (%p1517) target = $region272
        $region271: #{transformer_ed_forward.1} parent=179 // pred_region
          %1521 = dma.done [#allocation35], 16
        $region272: #{transformer_ed_forward.1} parent=179 // pred_fallthru
          _
        // Predicated region
        $region273: #{transformer_ed_forward.1} parent=179 // pred_check
          %p1522 = pneg %p839
        $region274: #{transformer_ed_forward.1} parent=179 // pred_check_branch
          %1524 = sbr.rel (%p1522) target = $region276
        $region275: #{transformer_ed_forward.1} parent=179 // pred_region
          %1526 = dma.done [#allocation38], 16
        $region276: #{transformer_ed_forward.1} parent=179 // pred_fallthru
          _
        // Predicated region
        $region277: #{transformer_ed_forward.1} parent=179 // pred_check
          %p1527 = pneg %p860
        $region278: #{transformer_ed_forward.1} parent=179 // pred_check_branch
          %1529 = sbr.rel (%p1527) target = $region280
        $region279: #{transformer_ed_forward.1} parent=179 // pred_region
          %1531 = dma.done [#allocation38], 16
        $region280: #{transformer_ed_forward.1} parent=179 // pred_fallthru
          _
        // Predicated region
        $region281: #{transformer_ed_forward.1} parent=179 // pred_check
          %p1532 = pneg %p881
        $region282: #{transformer_ed_forward.1} parent=179 // pred_check_branch
          %1534 = sbr.rel (%p1532) target = $region284
        $region283: #{transformer_ed_forward.1} parent=179 // pred_region
          %1536 = dma.done [#allocation41], 16
        $region284: #{transformer_ed_forward.1} parent=179 // pred_fallthru
          _
        // Predicated region
        $region285: #{transformer_ed_forward.1} parent=179 // pred_check
          %p1537 = pneg %p902
        $region286: #{transformer_ed_forward.1} parent=179 // pred_check_branch
          %1539 = sbr.rel (%p1537) target = $region288
        $region287: #{transformer_ed_forward.1} parent=179 // pred_region
          %1541 = dma.done [#allocation41], 128
        $region288: #{transformer_ed_forward.1} parent=179 // pred_fallthru
          _
        %s1542 = sand.u32 %s915, 1
        %s1543 = scalar_lea.sflag [#allocation44], %s1542
        %s1544 = sand.u32 %s915, 1
        %s1545 = smul.addr %s1544, 8
        %s1546 = scalar_lea.vmem [#allocation43], %s1545
        // Predicated region
        $region289: #{transformer_ed_forward.1} parent=179 // pred_check
          %p1547 = pneg %p928
        $region290: #{transformer_ed_forward.1} parent=179 // pred_check_branch
          %1549 = sbr.rel (%p1547) target = $region292
        $region291: #{transformer_ed_forward.1} parent=179 // pred_region
          %1551 = dma.done %s1543, 128
        $region292: #{transformer_ed_forward.1} parent=179 // pred_fallthru
          _
        %p1552 = pneg %p125
        %p1553 = pneg %p122
        %p1554 = pneg %p146
        %p1555 = pneg %p143
        %p1556 = pneg %p167
        %p1557 = pneg %p164
        %p1558 = pneg %p188
        %p1559 = pneg %p185
        %p1560 = pneg %p209
        %p1561 = pneg %p206
        %p1562 = pneg %p230
        %p1563 = pneg %p227
        %p1564 = pneg %p251
        %p1565 = pneg %p248
        %p1566 = pneg %p272
        %p1567 = pneg %p269
        %p1568 = pneg %p293
        %p1569 = pneg %p290
        %p1570 = pneg %p314
        %p1571 = pneg %p311
        %p1572 = pneg %p335
        %p1573 = pneg %p332
        %p1574 = pneg %p356
        %p1575 = pneg %p353
        %p1576 = pneg %p377
        %p1577 = pneg %p374
        %p1578 = pneg %p398
        %p1579 = pneg %p395
        %p1580 = pneg %p419
        %p1581 = pneg %p416
        %p1582 = pneg %p440
        %p1583 = pneg %p437
        %p1584 = pneg %p461
        %p1585 = pneg %p458
        %p1586 = pneg %p482
        %p1587 = pneg %p479
        %p1588 = pneg %p503
        %p1589 = pneg %p500
        %p1590 = pneg %p524
        %p1591 = pneg %p521
        %p1592 = pneg %p545
        %p1593 = pneg %p542
        %p1594 = pneg %p566
        %p1595 = pneg %p563
        %p1596 = pneg %p587
        %p1597 = pneg %p584
        %p1598 = pneg %p608
        %p1599 = pneg %p605
        %p1600 = pneg %p629
        %p1601 = pneg %p626
        %p1602 = pneg %p650
        %p1603 = pneg %p647
        %p1604 = pneg %p671
        %p1605 = pneg %p668
        %p1606 = pneg %p692
        %p1607 = pneg %p689
        %p1608 = pneg %p713
        %p1609 = pneg %p710
        %p1610 = pneg %p734
        %p1611 = pneg %p731
        %p1612 = pneg %p755
        %p1613 = pneg %p752
        %p1614 = pneg %p776
        %p1615 = pneg %p773
        %p1616 = pneg %p797
        %p1617 = pneg %p794
        %p1618 = pneg %p818
        %p1619 = pneg %p815
        %p1620 = pneg %p839
        %p1621 = pneg %p836
        %p1622 = pneg %p860
        %p1623 = pneg %p857
        %p1624 = pneg %p881
        %p1625 = pneg %p878
        %p1626 = pneg %p902
        %p1627 = pneg %p899
        %s1628 = sand.u32 %s915, 1
        %s1629 = scalar_lea.sflag [#allocation44], %s1628
        %s1630 = sand.u32 %s915, 1
        %s1631 = smul.addr %s1630, 8
        %s1632 = scalar_lea.vmem [#allocation43], %s1631
        %p1633 = pneg %p928
        %p1634 = pneg %p925
        %p1635 = scmp.lt.s32.totalorder %s109, 1
        %s1636 = scalar_select %p1635, %s109, 1
        %s1637 = smul.addr %s1636, 8
        %s1638 = scalar_lea.vmem %s79, %s1637
        %p1639 = pneg %p954
        %p1640 = pneg %p951
        %p1641 = pneg %p980
        %p1642 = pneg %p977
        %p1643 = scmp.lt.s32.totalorder %s109, 1
        %s1644 = scalar_select %p1643, %s109, 1
        %s1645 = smul.addr %s1644, 8
        %s1646 = scalar_lea.vmem %s81, %s1645
        %p1647 = scmp.lt.s32.totalorder %s109, 1
        %s1648 = scalar_select %p1647, %s109, 1
        %s1649 = smul.addr %s1648, 8
        %s1650 = scalar_lea.vmem %s79, %s1649
        %p1651 = scmp.lt.s32.totalorder %s109, 1
        %s1652 = scalar_select %p1651, %s109, 1
        %s1653 = smul.addr %s1652, 8
        %s1654 = scalar_lea.vmem %s81, %s1653
        %v1656 = vld [vmem:[%s1546] sm:$0xff]
        %v1657 = vpack.c.bf16 %v1656, %v1656
        %v1658 = vld [vmem:[#allocation24] sm:$0xf]
        %v1659 = vld [vmem:[#allocation24 + $0x4] sm:$0xf]
        %v1660 = vld [vmem:[#allocation25] sm:$0x1]
        %v1662 = vperm.slane %v1660, 0
        %v1666 = vunpack.c.l.b16 %v1658
        %v1667 = vunpack.c.l.b16 %v1659
        %v1668 = vpack.c.b16 %v1667, %v1666
        %vm1670 = vcmask 130048
        %v1672 = vsel %vm1670, %v1657, 0
        %1674 = vmatpush.bf16.msra.mxu0 0
        %1675 = vmatpush.bf16.msra.mxu0 0
        %1676 = vmatpush.bf16.msra.mxu0 0
        %1677 = vmatpush.bf16.msra.mxu0 0
        %1678 = vmatpush.bf16.msra.mxu0 0
        %1679 = vmatpush.bf16.msra.mxu0 0
        %1680 = vmatpush.bf16.msra.mxu0 0
        %1681 = vmatpush.bf16.msra.mxu0 %v1668
        %1682 = vmatmul.bf16.gmra.mxu0 %v1672
        %v1683 = vpop.f32.mrf.mxu0
        %v1684 = vadd.f32 %v1662, %v1683
        %v1685 = vpop.f32.mrf.mxu0
        %1686 = vdwg.mxu0
        %v1687 = vmax.f32 %v1684, 0.0
        %v1688 = vpack.c.bf16 %v1687, %v1687
        %v1689 = vld [vmem:[#allocation27] sm:$0xf]
        %v1690 = vld [vmem:[#allocation27 + $0x4] sm:$0xf]
        %v1691 = vld [vmem:[#allocation27 + $0x8] sm:$0xf]
        %v1692 = vld [vmem:[#allocation27 + $0xc] sm:$0xf]
        %v1693 = vld [vmem:[#allocation28] sm:$0x1]
        %v1695 = vperm.slane %v1693, 0
        %v1701 = vunpack.c.l.b16 %v1689
        %v1702 = vunpack.c.l.b16 %v1690
        %v1703 = vunpack.c.l.b16 %v1691
        %v1704 = vunpack.c.l.b16 %v1692
        %v1705 = vpack.c.b16 %v1702, %v1701
        %v1706 = vpack.c.b16 %v1704, %v1703
        %vm1709 = vcmask 261120
        %v1711 = vsel %vm1709, %v1688, 0
        %1713 = vmatpush.bf16.msra.mxu0 0
        %1714 = vmatpush.bf16.msra.mxu0 0
        %1715 = vmatpush.bf16.msra.mxu0 0
        %1716 = vmatpush.bf16.msra.mxu0 0
        %1717 = vmatpush.bf16.msra.mxu0 0
        %1718 = vmatpush.bf16.msra.mxu0 0
        %1719 = vmatpush.bf16.msra.mxu0 %v1706
        %1720 = vmatpush.bf16.msra.mxu0 %v1705
        %1721 = vmatmul.bf16.gmra.mxu0 %v1711
        %v1722 = vpop.f32.mrf.mxu0
        %v1723 = vadd.f32 %v1695, %v1722
        %v1724 = vpop.f32.mrf.mxu0
        %1725 = vdwg.mxu0
        %v1726 = vld [vmem:[#allocation42] sm:$0xff]
        %v1727 = vadd.f32 %v1723, %v1726
        %v1728 = vpack.c.bf16 %v1727, %v1727
        %v1729 = vld [vmem:[#allocation34] sm:$0xf]
        %v1730 = vld [vmem:[#allocation34 + $0x4] sm:$0xf]
        %v1731 = vld [vmem:[#allocation34 + $0x8] sm:$0xf]
        %v1732 = vld [vmem:[#allocation34 + $0xc] sm:$0xf]
        %v1737 = vunpack.c.l.b16 %v1729
        %v1738 = vunpack.c.l.b16 %v1730
        %v1739 = vunpack.c.l.b16 %v1731
        %v1740 = vunpack.c.l.b16 %v1732
        %v1741 = vpack.c.b16 %v1738, %v1737
        %v1742 = vpack.c.b16 %v1740, %v1739
        %v1746 = vsel %vm1709, %v1728, 0
        %1748 = vmatpush.bf16.msra.mxu0 0
        %1749 = vmatpush.bf16.msra.mxu0 0
        %1750 = vmatpush.bf16.msra.mxu0 0
        %1751 = vmatpush.bf16.msra.mxu0 0
        %1752 = vmatpush.bf16.msra.mxu0 0
        %1753 = vmatpush.bf16.msra.mxu0 0
        %1754 = vmatpush.bf16.msra.mxu0 %v1742
        %1755 = vmatpush.bf16.msra.mxu0 %v1741
        %1756 = vmatmul.bf16.gmra.mxu0 %v1746
        %v1757 = vpop.f32.mrf.mxu0
        %v1758 = vadd.f32 0.0, %v1757
        %v1759 = vpop.f32.mrf.mxu0
        %1760 = vdwg.mxu0
        %v1761 = vlaneseq
        %v1762 = vand.u32 %v1761, 127
        %v1763 = vpack.c.bf16 %v1758, %v1758
        %1765 = vrot.lane.b32.xlu0 %v1763, 96
        %v1766 = vpop.permute.xlu0 %1765
        %v1768 = vsel %vm1670, %v1763, 0
        %v1771 = vsel %vm1670, %v1766, 0
        %1773 = vmatpush.bf16.xpose.msra.mxu0 0
        %1774 = vmatpush.bf16.xpose.msra.mxu0 0
        %1775 = vmatpush.bf16.xpose.msra.mxu0 0
        %1776 = vmatpush.bf16.xpose.msra.mxu0 0
        %1777 = vmatpush.bf16.xpose.msra.mxu0 0
        %1778 = vmatpush.bf16.xpose.msra.mxu0 0
        %1779 = vmatpush.bf16.xpose.msra.mxu0 0
        %1780 = vmatpush.bf16.xpose.msra.mxu0 %v1771
        %1781 = vmatmul.bf16.gmra.mxu0 %v1768
        %v1782 = vpop.f32.mrf.mxu0
        %v1783 = vadd.f32 0.0, %v1782
        %v1784 = vpop.f32.mrf.mxu0
        %1785 = vdwg.mxu0
        %vm1786 = vcmask 64512
        %v1787 = vsel %vm1786, %v1783, -inf
        %1788 = vmax.xlane.f32.xlu0 %v1787
        %v1789 = vpop.xlane.xlu0 %1788
        %v1790 = vsub.f32 %v1783, %v1789
        %v1791 = vmul.f32 %v1790, 1.442695
        %v1792 = vpow.pop %v1791
        %v1793 = vsel %vm1786, %v1792, 0.0
        %1794 = vadd.xlane.f32.xlu0 %v1793
        %v1795 = vpop.xlane.xlu0 %1794
        %v1796 = vrcp.pop %v1795
        %v1797 = vmul.f32 %v1792, %v1796
        %vm1798 = vcmp.ge.s32.totalorder %v1762, 0
        %vm1799 = vcmp.lt.s32.totalorder %v1762, 16
        %vm1800 = vmand %vm1798, %vm1799
        %1802 = vrot.lane.b32.xlu0 %v1758, 64
        %v1803 = vpop.permute.xlu0 %1802
        %v1805 = vsel %vm1800, %v1803, 0.0
        %v1806 = vpack.c.bf16 %v1797, %v1797
        %v1807 = vpack.c.bf16 %v1805, %v1805
        %1808 = vrot.lane.b32.xlu0 %v1763, 112
        %v1809 = vpop.permute.xlu0 %1808
        %1810 = vrot.lane.b32.xlu0 %v1763, 80
        %v1811 = vpop.permute.xlu0 %1810
        %v1813 = vsel %vm1670, %v1809, 0
        %v1816 = vsel %vm1670, %v1811, 0
        %1818 = vmatpush.bf16.xpose.msra.mxu0 0
        %1819 = vmatpush.bf16.xpose.msra.mxu0 0
        %1820 = vmatpush.bf16.xpose.msra.mxu0 0
        %1821 = vmatpush.bf16.xpose.msra.mxu0 0
        %1822 = vmatpush.bf16.xpose.msra.mxu0 0
        %1823 = vmatpush.bf16.xpose.msra.mxu0 0
        %1824 = vmatpush.bf16.xpose.msra.mxu0 0
        %1825 = vmatpush.bf16.xpose.msra.mxu0 %v1816
        %1826 = vmatmul.bf16.gmra.mxu0 %v1813
        %v1827 = vpop.f32.mrf.mxu0
        %v1828 = vadd.f32 0.0, %v1827
        %v1829 = vpop.f32.mrf.mxu0
        %1830 = vdwg.mxu0
        %v1831 = vsel %vm1786, %v1828, -inf
        %1832 = vmax.xlane.f32.xlu0 %v1831
        %v1833 = vpop.xlane.xlu0 %1832
        %v1834 = vsub.f32 %v1828, %v1833
        %v1835 = vmul.f32 %v1834, 1.442695
        %v1836 = vpow.pop %v1835
        %v1837 = vsel %vm1786, %v1836, 0.0
        %1838 = vadd.xlane.f32.xlu0 %v1837
        %v1839 = vpop.xlane.xlu0 %1838
        %v1840 = vrcp.pop %v1839
        %v1841 = vmul.f32 %v1836, %v1840
        %vm1842 = vcmp.ge.s32.totalorder %v1762, 16
        %vm1843 = vcmp.lt.s32.totalorder %v1762, 32
        %vm1844 = vmand %vm1842, %vm1843
        %v1845 = vsel %vm1844, %v1803, 0.0
        %v1846 = vpack.c.bf16 %v1841, %v1841
        %v1847 = vpack.c.bf16 %v1845, %v1845
        %v1849 = vsel %vm1786, %v1846, 0
        %vm1851 = vcmask 1043456
        %v1853 = vsel %vm1851, %v1847, 0
        %1855 = vmatpush.bf16.msra.mxu0 0
        %1856 = vmatpush.bf16.msra.mxu0 0
        %1857 = vmatpush.bf16.msra.mxu0 0
        %1858 = vmatpush.bf16.msra.mxu0 0
        %1859 = vmatpush.bf16.msra.mxu0 0
        %1860 = vmatpush.bf16.msra.mxu0 0
        %1861 = vmatpush.bf16.msra.mxu0 0
        %1862 = vmatpush.bf16.msra.mxu0 %v1853
        %1863 = vmatmul.bf16.gmra.mxu0 %v1849
        %v1864 = vpop.f32.mrf.mxu0
        %v1865 = vadd.f32 0.0, %v1864
        %v1866 = vpop.f32.mrf.mxu0
        %1867 = vdwg.mxu0
        %v1869 = vsel %vm1786, %v1806, 0
        %v1872 = vsel %vm1851, %v1807, 0
        %1874 = vmatpush.bf16.msra.mxu0 0
        %1875 = vmatpush.bf16.msra.mxu0 0
        %1876 = vmatpush.bf16.msra.mxu0 0
        %1877 = vmatpush.bf16.msra.mxu0 0
        %1878 = vmatpush.bf16.msra.mxu0 0
        %1879 = vmatpush.bf16.msra.mxu0 0
        %1880 = vmatpush.bf16.msra.mxu0 0
        %1881 = vmatpush.bf16.msra.mxu0 %v1872
        %1882 = vmatmul.bf16.gmra.mxu0 %v1869
        %v1883 = vpop.f32.mrf.mxu0
        %v1884 = vadd.f32 %v1865, %v1883
        %v1885 = vpop.f32.mrf.mxu0
        %1886 = vdwg.mxu0
        %v1887 = vadd.f32 %v1727, %v1884
        %v1888 = vsel %vm1709, %v1887, 0.0
        %1889 = vadd.xlane.f32.xlu0 %v1888
        %v1890 = vpop.xlane.xlu0 %1889
        %v1891 = vrcp.pop 32.0
        %v1892 = vmul.f32 32.0, %v1891
        %v1893 = vsub.f32 1.0, %v1892
        %v1894 = vmul.f32 %v1891, %v1893
        %v1895 = vadd.f32 %v1891, %v1894
        %vm1896 = vweird.f32 %v1891
        %v1897 = vsel %vm1896, %v1891, %v1895
        %v1898 = vmul.f32 %v1890, %v1897
        %v1899 = vsub.f32 %v1887, %v1898
        %v1900 = vmul.f32 %v1899, %v1899
        %v1901 = vsel %vm1709, %v1900, 0.0
        %1902 = vadd.xlane.f32.xlu0 %v1901
        %v1903 = vpop.xlane.xlu0 %1902
        %v1904 = vmul.f32 %v1903, %v1897
        %v1905 = vadd.f32 %v1904, 1e-05
        %v1906 = vrsqrt.pop %v1905
        %v1907 = vmul.f32 %v1906, %v1905
        %v1908 = vmul.f32 %v1907, %v1906
        %v1909 = vmul.f32 0.5, %v1908
        %v1910 = vsub.f32 1.5, %v1909
        %v1911 = vmul.f32 %v1906, %v1910
        %vm1912 = vweird.f32 %v1905
        %vm1913 = vweird.f32 %v1906
        %vm1914 = vmor %vm1912, %vm1913
        %v1915 = vsel %vm1914, %v1906, %v1911
        %v1916 = vmul.f32 %v1899, %v1915
        %v1917 = vld [vmem:[#allocation39] sm:$0x1]
        %v1919 = vperm.slane %v1917, 0
        %v1921 = vmul.f32 %v1916, %v1919
        %v1922 = vld [vmem:[#allocation40] sm:$0x1]
        %v1924 = vperm.slane %v1922, 0
        %v1926 = vadd.f32 %v1921, %v1924
        %v1927 = vpack.c.bf16 %v1926, %v1926
        %v1928 = vld [vmem:[#allocation30] sm:$0xf]
        %v1929 = vld [vmem:[#allocation30 + $0x4] sm:$0xf]
        %v1930 = vld [vmem:[#allocation30 + $0x8] sm:$0xf]
        %v1931 = vld [vmem:[#allocation30 + $0xc] sm:$0xf]
        %v1932 = vld [vmem:[#allocation31] sm:$0x1]
        %v1934 = vperm.slane %v1932, 0
        %v1940 = vunpack.c.l.b16 %v1928
        %v1941 = vunpack.c.l.b16 %v1929
        %v1942 = vunpack.c.l.b16 %v1930
        %v1943 = vunpack.c.l.b16 %v1931
        %v1944 = vpack.c.b16 %v1941, %v1940
        %v1945 = vpack.c.b16 %v1943, %v1942
        %v1949 = vsel %vm1709, %v1927, 0
        %1951 = vmatpush.bf16.msra.mxu0 0
        %1952 = vmatpush.bf16.msra.mxu0 0
        %1953 = vmatpush.bf16.msra.mxu0 0
        %1954 = vmatpush.bf16.msra.mxu0 0
        %1955 = vmatpush.bf16.msra.mxu0 0
        %1956 = vmatpush.bf16.msra.mxu0 0
        %1957 = vmatpush.bf16.msra.mxu0 %v1945
        %1958 = vmatpush.bf16.msra.mxu0 %v1944
        %1959 = vmatmul.bf16.gmra.mxu0 %v1949
        %v1960 = vpop.f32.mrf.mxu0
        %v1961 = vadd.f32 %v1934, %v1960
        %v1962 = vpop.f32.mrf.mxu0
        %1963 = vdwg.mxu0
        %v1964 = vmax.f32 %v1961, 0.0
        %v1965 = vadd.f32 %v1926, %v1964
        %v1966 = vsel %vm1709, %v1965, 0.0
        %1967 = vadd.xlane.f32.xlu0 %v1966
        %v1968 = vpop.xlane.xlu0 %1967
        %v1969 = vmul.f32 %v1968, %v1897
        %v1970 = vsub.f32 %v1965, %v1969
        %v1971 = vmul.f32 %v1970, %v1970
        %v1972 = vsel %vm1709, %v1971, 0.0
        %1973 = vadd.xlane.f32.xlu0 %v1972
        %v1974 = vpop.xlane.xlu0 %1973
        %v1975 = vmul.f32 %v1974, %v1897
        %v1976 = vadd.f32 %v1975, 1e-05
        %v1977 = vrsqrt.pop %v1976
        %v1978 = vmul.f32 %v1977, %v1976
        %v1979 = vmul.f32 %v1978, %v1977
        %v1980 = vmul.f32 0.5, %v1979
        %v1981 = vsub.f32 1.5, %v1980
        %v1982 = vmul.f32 %v1977, %v1981
        %vm1983 = vweird.f32 %v1976
        %vm1984 = vweird.f32 %v1977
        %vm1985 = vmor %vm1983, %vm1984
        %v1986 = vsel %vm1985, %v1977, %v1982
        %v1987 = vmul.f32 %v1970, %v1986
        %v1988 = vld [vmem:[#allocation36] sm:$0x1]
        %v1990 = vperm.slane %v1988, 0
        %v1992 = vmul.f32 %v1987, %v1990
        %v1993 = vld [vmem:[#allocation37] sm:$0x1]
        %v1995 = vperm.slane %v1993, 0
        %v1997 = vadd.f32 %v1992, %v1995
        %v1998 = vpack.c.bf16 %v1997, %v1997
        %v1999 = vld [vmem:[#allocation33] sm:$0xf]
        %v2000 = vld [vmem:[#allocation33 + $0x4] sm:$0xf]
        %v2001 = vld [vmem:[#allocation33 + $0x8] sm:$0xf]
        %v2002 = vld [vmem:[#allocation33 + $0xc] sm:$0xf]
        %v2007 = vunpack.c.l.b16 %v1999
        %v2008 = vunpack.c.l.b16 %v2000
        %v2009 = vunpack.c.l.b16 %v2001
        %v2010 = vunpack.c.l.b16 %v2002
        %v2011 = vpack.c.b16 %v2008, %v2007
        %v2012 = vpack.c.b16 %v2010, %v2009
        %v2016 = vsel %vm1709, %v1998, 0
        %2018 = vmatpush.bf16.msra.mxu0 0
        %2019 = vmatpush.bf16.msra.mxu0 0
        %2020 = vmatpush.bf16.msra.mxu0 0
        %2021 = vmatpush.bf16.msra.mxu0 0
        %2022 = vmatpush.bf16.msra.mxu0 0
        %2023 = vmatpush.bf16.msra.mxu0 0
        %2024 = vmatpush.bf16.msra.mxu0 %v2012
        %2025 = vmatpush.bf16.msra.mxu0 %v2011
        %2026 = vmatmul.bf16.gmra.mxu0 %v2016
        %v2027 = vpop.f32.mrf.mxu0
        %v2028 = vadd.f32 0.0, %v2027
        %v2029 = vpop.f32.mrf.mxu0
        %2030 = vdwg.mxu0
        %v2031 = vld [vmem:[%s1650] sm:$0x7f]
        %v2032 = vpack.c.bf16 %v2031, %v2031
        %v2033 = vld [vmem:[%s1] sm:$0x3]
        %v2034 = vld [vmem:[%s3] sm:$0x1]
        %v2036 = vperm.slane %v2034, 0
        %vm2038 = vcmask 31744
        %v2040 = vsel %vm2038, %v2032, 0
        %vm2042 = vcmask 1041408
        %v2044 = vsel %vm2042, %v2033, 0
        %2046 = vmatpush.bf16.msra.mxu0 0
        %2047 = vmatpush.bf16.msra.mxu0 0
        %2048 = vmatpush.bf16.msra.mxu0 0
        %2049 = vmatpush.bf16.msra.mxu0 0
        %2050 = vmatpush.bf16.msra.mxu0 0
        %2051 = vmatpush.bf16.msra.mxu0 0
        %2052 = vmatpush.bf16.msra.mxu0 0
        %2053 = vmatpush.bf16.msra.mxu0 %v2044
        %2054 = vmatmul.bf16.gmra.mxu0 %v2040
        %v2055 = vpop.f32.mrf.mxu0
        %v2056 = vadd.f32 %v2036, %v2055
        %v2057 = vpop.f32.mrf.mxu0
        %2058 = vdwg.mxu0
        %v2059 = vmax.f32 %v2056, 0.0
        %v2060 = vpack.c.bf16 %v2059, %v2059
        %v2061 = vld [vmem:[%s5] sm:$0xf]
        %v2062 = vld [vmem:[%s5 + $0x4] sm:$0xf]
        %v2063 = vld [vmem:[%s5 + $0x8] sm:$0xf]
        %v2064 = vld [vmem:[%s5 + $0xc] sm:$0xf]
        %v2065 = vld [vmem:[%s7] sm:$0x1]
        %v2067 = vperm.slane %v2065, 0
        %v2073 = vunpack.c.l.b16 %v2061
        %v2074 = vunpack.c.l.b16 %v2062
        %v2075 = vunpack.c.l.b16 %v2063
        %v2076 = vunpack.c.l.b16 %v2064
        %v2077 = vpack.c.b16 %v2074, %v2073
        %v2078 = vpack.c.b16 %v2076, %v2075
        %v2082 = vsel %vm1709, %v2060, 0
        %2084 = vmatpush.bf16.msra.mxu0 0
        %2085 = vmatpush.bf16.msra.mxu0 0
        %2086 = vmatpush.bf16.msra.mxu0 0
        %2087 = vmatpush.bf16.msra.mxu0 0
        %2088 = vmatpush.bf16.msra.mxu0 0
        %2089 = vmatpush.bf16.msra.mxu0 0
        %2090 = vmatpush.bf16.msra.mxu0 %v2078
        %2091 = vmatpush.bf16.msra.mxu0 %v2077
        %2092 = vmatmul.bf16.gmra.mxu0 %v2082
        %v2093 = vpop.f32.mrf.mxu0
        %v2094 = vadd.f32 %v2067, %v2093
        %v2095 = vpop.f32.mrf.mxu0
        %2096 = vdwg.mxu0
        %v2097 = vld [vmem:[#allocation22] sm:$0x7f]
        %v2098 = vadd.f32 %v2094, %v2097
        %v2099 = vpack.c.bf16 %v2098, %v2098
        %v2100 = vld [vmem:[#allocation2] sm:$0xf]
        %v2101 = vld [vmem:[#allocation2 + $0x4] sm:$0xf]
        %v2102 = vld [vmem:[#allocation2 + $0x8] sm:$0xf]
        %v2103 = vld [vmem:[#allocation2 + $0xc] sm:$0xf]
        %v2108 = vunpack.c.l.b16 %v2100
        %v2109 = vunpack.c.l.b16 %v2101
        %v2110 = vunpack.c.l.b16 %v2102
        %v2111 = vunpack.c.l.b16 %v2103
        %v2112 = vpack.c.b16 %v2109, %v2108
        %v2113 = vpack.c.b16 %v2111, %v2110
        %v2117 = vsel %vm1709, %v2099, 0
        %2119 = vmatpush.bf16.msra.mxu0 0
        %2120 = vmatpush.bf16.msra.mxu0 0
        %2121 = vmatpush.bf16.msra.mxu0 0
        %2122 = vmatpush.bf16.msra.mxu0 0
        %2123 = vmatpush.bf16.msra.mxu0 0
        %2124 = vmatpush.bf16.msra.mxu0 0
        %2125 = vmatpush.bf16.msra.mxu0 %v2113
        %2126 = vmatpush.bf16.msra.mxu0 %v2112
        %2127 = vmatmul.bf16.gmra.mxu0 %v2117
        %v2128 = vpop.f32.mrf.mxu0
        %v2129 = vadd.f32 0.0, %v2128
        %v2130 = vpop.f32.mrf.mxu0
        %2131 = vdwg.mxu0
        %v2132 = vlaneseq
        %v2133 = vshrl.u32 %v2132, 7
        %vm2134 = vcmp.gt.s32.totalorder %v1762, %v2133
        %v2135 = vsel %vm2134, -1e+30, 0.0
        %v2136 = vpack.c.bf16 %v2129, %v2129
        %2138 = vrot.lane.b32.xlu0 %v2136, 96
        %v2139 = vpop.permute.xlu0 %2138
        %v2141 = vsel %vm1670, %v2136, 0
        %v2144 = vsel %vm1670, %v2139, 0
        %2146 = vmatpush.bf16.xpose.msra.mxu0 0
        %2147 = vmatpush.bf16.xpose.msra.mxu0 0
        %2148 = vmatpush.bf16.xpose.msra.mxu0 0
        %2149 = vmatpush.bf16.xpose.msra.mxu0 0
        %2150 = vmatpush.bf16.xpose.msra.mxu0 0
        %2151 = vmatpush.bf16.xpose.msra.mxu0 0
        %2152 = vmatpush.bf16.xpose.msra.mxu0 0
        %2153 = vmatpush.bf16.xpose.msra.mxu0 %v2144
        %2154 = vmatmul.bf16.gmra.mxu0 %v2141
        %v2155 = vpop.f32.mrf.mxu0
        %v2156 = vadd.f32 %v2135, %v2155
        %v2157 = vpop.f32.mrf.mxu0
        %2158 = vdwg.mxu0
        %vm2159 = vcmask 55296
        %v2160 = vsel %vm2159, %v2156, -inf
        %2161 = vmax.xlane.f32.xlu0 %v2160
        %v2162 = vpop.xlane.xlu0 %2161
        %v2163 = vsub.f32 %v2156, %v2162
        %v2164 = vmul.f32 %v2163, 1.442695
        %v2165 = vpow.pop %v2164
        %v2166 = vsel %vm2159, %v2165, 0.0
        %2167 = vadd.xlane.f32.xlu0 %v2166
        %v2168 = vpop.xlane.xlu0 %2167
        %v2169 = vrcp.pop %v2168
        %v2170 = vmul.f32 %v2165, %v2169
        %2172 = vrot.lane.b32.xlu0 %v2129, 64
        %v2173 = vpop.permute.xlu0 %2172
        %v2175 = vsel %vm1800, %v2173, 0.0
        %v2176 = vpack.c.bf16 %v2170, %v2170
        %v2177 = vpack.c.bf16 %v2175, %v2175
        %2178 = vrot.lane.b32.xlu0 %v2136, 112
        %v2179 = vpop.permute.xlu0 %2178
        %2180 = vrot.lane.b32.xlu0 %v2136, 80
        %v2181 = vpop.permute.xlu0 %2180
        %v2183 = vsel %vm1670, %v2179, 0
        %v2186 = vsel %vm1670, %v2181, 0
        %2188 = vmatpush.bf16.xpose.msra.mxu0 0
        %2189 = vmatpush.bf16.xpose.msra.mxu0 0
        %2190 = vmatpush.bf16.xpose.msra.mxu0 0
        %2191 = vmatpush.bf16.xpose.msra.mxu0 0
        %2192 = vmatpush.bf16.xpose.msra.mxu0 0
        %2193 = vmatpush.bf16.xpose.msra.mxu0 0
        %2194 = vmatpush.bf16.xpose.msra.mxu0 0
        %2195 = vmatpush.bf16.xpose.msra.mxu0 %v2186
        %2196 = vmatmul.bf16.gmra.mxu0 %v2183
        %v2197 = vpop.f32.mrf.mxu0
        %v2198 = vadd.f32 %v2135, %v2197
        %v2199 = vpop.f32.mrf.mxu0
        %2200 = vdwg.mxu0
        %v2201 = vsel %vm2159, %v2198, -inf
        %2202 = vmax.xlane.f32.xlu0 %v2201
        %v2203 = vpop.xlane.xlu0 %2202
        %v2204 = vsub.f32 %v2198, %v2203
        %v2205 = vmul.f32 %v2204, 1.442695
        %v2206 = vpow.pop %v2205
        %v2207 = vsel %vm2159, %v2206, 0.0
        %2208 = vadd.xlane.f32.xlu0 %v2207
        %v2209 = vpop.xlane.xlu0 %2208
        %v2210 = vrcp.pop %v2209
        %v2211 = vmul.f32 %v2206, %v2210
        %v2212 = vsel %vm1844, %v2173, 0.0
        %v2213 = vpack.c.bf16 %v2211, %v2211
        %v2214 = vpack.c.bf16 %v2212, %v2212
        %vm2215 = vcmask 56320
        %v2217 = vsel %vm2215, %v2213, 0
        %vm2219 = vcmask 1042432
        %v2220 = vsel %vm2219, 4294967295, 65535
        %v2221 = vsel %vm1851, %v2220, 0
        %v2223 = vand.u32 %v2214, %v2221
        %2225 = vmatpush.bf16.msra.mxu0 0
        %2226 = vmatpush.bf16.msra.mxu0 0
        %2227 = vmatpush.bf16.msra.mxu0 0
        %2228 = vmatpush.bf16.msra.mxu0 0
        %2229 = vmatpush.bf16.msra.mxu0 0
        %2230 = vmatpush.bf16.msra.mxu0 0
        %2231 = vmatpush.bf16.msra.mxu0 0
        %2232 = vmatpush.bf16.msra.mxu0 %v2223
        %2233 = vmatmul.bf16.gmra.mxu0 %v2217
        %v2234 = vpop.f32.mrf.mxu0
        %v2235 = vadd.f32 0.0, %v2234
        %v2236 = vpop.f32.mrf.mxu0
        %2237 = vdwg.mxu0
        %v2239 = vsel %vm2215, %v2176, 0
        %v2242 = vand.u32 %v2177, %v2221
        %2244 = vmatpush.bf16.msra.mxu0 0
        %2245 = vmatpush.bf16.msra.mxu0 0
        %2246 = vmatpush.bf16.msra.mxu0 0
        %2247 = vmatpush.bf16.msra.mxu0 0
        %2248 = vmatpush.bf16.msra.mxu0 0
        %2249 = vmatpush.bf16.msra.mxu0 0
        %2250 = vmatpush.bf16.msra.mxu0 0
        %2251 = vmatpush.bf16.msra.mxu0 %v2242
        %2252 = vmatmul.bf16.gmra.mxu0 %v2239
        %v2253 = vpop.f32.mrf.mxu0
        %v2254 = vadd.f32 %v2235, %v2253
        %v2255 = vpop.f32.mrf.mxu0
        %2256 = vdwg.mxu0
        %v2257 = vadd.f32 %v2098, %v2254
        %vm2258 = vcmask 260096
        %v2259 = vsel %vm2258, %v2257, 0.0
        %2260 = vadd.xlane.f32.xlu0 %v2259
        %v2261 = vpop.xlane.xlu0 %2260
        %v2262 = vmul.f32 %v2261, %v1897
        %v2263 = vsub.f32 %v2257, %v2262
        %v2264 = vmul.f32 %v2263, %v2263
        %v2265 = vsel %vm2258, %v2264, 0.0
        %2266 = vadd.xlane.f32.xlu0 %v2265
        %v2267 = vpop.xlane.xlu0 %2266
        %v2268 = vmul.f32 %v2267, %v1897
        %v2269 = vadd.f32 %v2268, 1e-05
        %v2270 = vrsqrt.pop %v2269
        %v2271 = vmul.f32 %v2270, %v2269
        %v2272 = vmul.f32 %v2271, %v2270
        %v2273 = vmul.f32 0.5, %v2272
        %v2274 = vsub.f32 1.5, %v2273
        %v2275 = vmul.f32 %v2270, %v2274
        %vm2276 = vweird.f32 %v2269
        %vm2277 = vweird.f32 %v2270
        %vm2278 = vmor %vm2276, %vm2277
        %v2279 = vsel %vm2278, %v2270, %v2275
        %v2280 = vmul.f32 %v2263, %v2279
        %v2281 = vld [vmem:[#allocation10] sm:$0x1]
        %v2283 = vperm.slane %v2281, 0
        %v2285 = vmul.f32 %v2280, %v2283
        %v2286 = vld [vmem:[#allocation12] sm:$0x1]
        %v2288 = vperm.slane %v2286, 0
        %v2290 = vadd.f32 %v2285, %v2288
        %v2291 = vpack.c.bf16 %v2290, %v2290
        %v2292 = vld [vmem:[#allocation6] sm:$0xf]
        %v2293 = vld [vmem:[#allocation6 + $0x4] sm:$0xf]
        %v2294 = vld [vmem:[#allocation6 + $0x8] sm:$0xf]
        %v2295 = vld [vmem:[#allocation6 + $0xc] sm:$0xf]
        %v2300 = vunpack.c.l.b16 %v2292
        %v2301 = vunpack.c.l.b16 %v2293
        %v2302 = vunpack.c.l.b16 %v2294
        %v2303 = vunpack.c.l.b16 %v2295
        %v2304 = vpack.c.b16 %v2301, %v2300
        %v2305 = vpack.c.b16 %v2303, %v2302
        %v2309 = vsel %vm1709, %v2291, 0
        %2311 = vmatpush.bf16.msra.mxu0 0
        %2312 = vmatpush.bf16.msra.mxu0 0
        %2313 = vmatpush.bf16.msra.mxu0 0
        %2314 = vmatpush.bf16.msra.mxu0 0
        %2315 = vmatpush.bf16.msra.mxu0 0
        %2316 = vmatpush.bf16.msra.mxu0 0
        %2317 = vmatpush.bf16.msra.mxu0 %v2305
        %2318 = vmatpush.bf16.msra.mxu0 %v2304
        %2319 = vmatmul.bf16.gmra.mxu0 %v2309
        %v2320 = vpop.f32.mrf.mxu0
        %v2321 = vadd.f32 0.0, %v2320
        %v2322 = vpop.f32.mrf.mxu0
        %2323 = vdwg.mxu0
        %v2324 = vpack.c.bf16 %v2321, %v2321
        %v2325 = vpack.c.bf16 %v2028, %v2028
        %v2327 = vsel %vm1670, %v2324, 0
        %v2330 = vsel %vm1670, %v2325, 0
        %2332 = vmatpush.bf16.xpose.msra.mxu0 0
        %2333 = vmatpush.bf16.xpose.msra.mxu0 0
        %2334 = vmatpush.bf16.xpose.msra.mxu0 0
        %2335 = vmatpush.bf16.xpose.msra.mxu0 0
        %2336 = vmatpush.bf16.xpose.msra.mxu0 0
        %2337 = vmatpush.bf16.xpose.msra.mxu0 0
        %2338 = vmatpush.bf16.xpose.msra.mxu0 0
        %2339 = vmatpush.bf16.xpose.msra.mxu0 %v2330
        %2340 = vmatmul.bf16.gmra.mxu0 %v2327
        %v2341 = vpop.f32.mrf.mxu0
        %v2342 = vadd.f32 %v2135, %v2341
        %v2343 = vpop.f32.mrf.mxu0
        %2344 = vdwg.mxu0
        %vm2345 = vcmask 63488
        %v2346 = vsel %vm2345, %v2342, -inf
        %2347 = vmax.xlane.f32.xlu0 %v2346
        %v2348 = vpop.xlane.xlu0 %2347
        %v2349 = vsub.f32 %v2342, %v2348
        %v2350 = vmul.f32 %v2349, 1.442695
        %v2351 = vpow.pop %v2350
        %v2352 = vsel %vm2345, %v2351, 0.0
        %2353 = vadd.xlane.f32.xlu0 %v2352
        %v2354 = vpop.xlane.xlu0 %2353
        %v2355 = vrcp.pop %v2354
        %v2356 = vmul.f32 %v2351, %v2355
        %2358 = vrot.lane.b32.xlu0 %v2028, 96
        %v2359 = vpop.permute.xlu0 %2358
        %v2361 = vsel %vm1800, %v2359, 0.0
        %v2362 = vpack.c.bf16 %v2356, %v2356
        %v2363 = vpack.c.bf16 %v2361, %v2361
        %2365 = vrot.lane.b32.xlu0 %v2324, 112
        %v2366 = vpop.permute.xlu0 %2365
        %2368 = vrot.lane.b32.xlu0 %v2325, 112
        %v2369 = vpop.permute.xlu0 %2368
        %v2371 = vsel %vm1670, %v2366, 0
        %v2374 = vsel %vm1670, %v2369, 0
        %2376 = vmatpush.bf16.xpose.msra.mxu0 0
        %2377 = vmatpush.bf16.xpose.msra.mxu0 0
        %2378 = vmatpush.bf16.xpose.msra.mxu0 0
        %2379 = vmatpush.bf16.xpose.msra.mxu0 0
        %2380 = vmatpush.bf16.xpose.msra.mxu0 0
        %2381 = vmatpush.bf16.xpose.msra.mxu0 0
        %2382 = vmatpush.bf16.xpose.msra.mxu0 0
        %2383 = vmatpush.bf16.xpose.msra.mxu0 %v2374
        %2384 = vmatmul.bf16.gmra.mxu0 %v2371
        %v2385 = vpop.f32.mrf.mxu0
        %v2386 = vadd.f32 %v2135, %v2385
        %v2387 = vpop.f32.mrf.mxu0
        %2388 = vdwg.mxu0
        %v2389 = vsel %vm2345, %v2386, -inf
        %2390 = vmax.xlane.f32.xlu0 %v2389
        %v2391 = vpop.xlane.xlu0 %2390
        %v2392 = vsub.f32 %v2386, %v2391
        %v2393 = vmul.f32 %v2392, 1.442695
        %v2394 = vpow.pop %v2393
        %v2395 = vsel %vm2345, %v2394, 0.0
        %2396 = vadd.xlane.f32.xlu0 %v2395
        %v2397 = vpop.xlane.xlu0 %2396
        %v2398 = vrcp.pop %v2397
        %v2399 = vmul.f32 %v2394, %v2398
        %v2400 = vsel %vm1844, %v2359, 0.0
        %v2401 = vpack.c.bf16 %v2399, %v2399
        %v2402 = vpack.c.bf16 %v2400, %v2400
        %v2404 = vsel %vm1786, %v2401, 0
        %v2407 = vsel %vm1851, %v2402, 0
        %2409 = vmatpush.bf16.msra.mxu0 0
        %2410 = vmatpush.bf16.msra.mxu0 0
        %2411 = vmatpush.bf16.msra.mxu0 0
        %2412 = vmatpush.bf16.msra.mxu0 0
        %2413 = vmatpush.bf16.msra.mxu0 0
        %2414 = vmatpush.bf16.msra.mxu0 0
        %2415 = vmatpush.bf16.msra.mxu0 0
        %2416 = vmatpush.bf16.msra.mxu0 %v2407
        %2417 = vmatmul.bf16.gmra.mxu0 %v2404
        %v2418 = vpop.f32.mrf.mxu0
        %v2419 = vadd.f32 0.0, %v2418
        %v2420 = vpop.f32.mrf.mxu0
        %2421 = vdwg.mxu0
        %v2423 = vsel %vm1786, %v2362, 0
        %v2426 = vsel %vm1851, %v2363, 0
        %2428 = vmatpush.bf16.msra.mxu0 0
        %2429 = vmatpush.bf16.msra.mxu0 0
        %2430 = vmatpush.bf16.msra.mxu0 0
        %2431 = vmatpush.bf16.msra.mxu0 0
        %2432 = vmatpush.bf16.msra.mxu0 0
        %2433 = vmatpush.bf16.msra.mxu0 0
        %2434 = vmatpush.bf16.msra.mxu0 0
        %2435 = vmatpush.bf16.msra.mxu0 %v2426
        %2436 = vmatmul.bf16.gmra.mxu0 %v2423
        %v2437 = vpop.f32.mrf.mxu0
        %v2438 = vadd.f32 %v2419, %v2437
        %v2439 = vpop.f32.mrf.mxu0
        %2440 = vdwg.mxu0
        %v2441 = vadd.f32 %v2290, %v2438
        %v2442 = vsel %vm2258, %v2441, 0.0
        %2443 = vadd.xlane.f32.xlu0 %v2442
        %v2444 = vpop.xlane.xlu0 %2443
        %v2445 = vmul.f32 %v2444, %v1897
        %v2446 = vsub.f32 %v2441, %v2445
        %v2447 = vmul.f32 %v2446, %v2446
        %v2448 = vsel %vm2258, %v2447, 0.0
        %2449 = vadd.xlane.f32.xlu0 %v2448
        %v2450 = vpop.xlane.xlu0 %2449
        %v2451 = vmul.f32 %v2450, %v1897
        %v2452 = vadd.f32 %v2451, 1e-05
        %v2453 = vrsqrt.pop %v2452
        %v2454 = vmul.f32 %v2453, %v2452
        %v2455 = vmul.f32 %v2454, %v2453
        %v2456 = vmul.f32 0.5, %v2455
        %v2457 = vsub.f32 1.5, %v2456
        %v2458 = vmul.f32 %v2453, %v2457
        %vm2459 = vweird.f32 %v2452
        %vm2460 = vweird.f32 %v2453
        %vm2461 = vmor %vm2459, %vm2460
        %v2462 = vsel %vm2461, %v2453, %v2458
        %v2463 = vmul.f32 %v2446, %v2462
        %v2464 = vld [vmem:[#allocation16] sm:$0x1]
        %v2466 = vperm.slane %v2464, 0
        %v2468 = vmul.f32 %v2463, %v2466
        %v2469 = vld [vmem:[#allocation18] sm:$0x1]
        %v2471 = vperm.slane %v2469, 0
        %v2473 = vadd.f32 %v2468, %v2471
        %v2474 = vpack.c.bf16 %v2473, %v2473
        %v2475 = vld [vmem:[%s9] sm:$0xf]
        %v2476 = vld [vmem:[%s9 + $0x4] sm:$0xf]
        %v2477 = vld [vmem:[%s9 + $0x8] sm:$0xf]
        %v2478 = vld [vmem:[%s9 + $0xc] sm:$0xf]
        %v2479 = vld [vmem:[%s11] sm:$0x1]
        %v2481 = vperm.slane %v2479, 0
        %v2487 = vunpack.c.l.b16 %v2475
        %v2488 = vunpack.c.l.b16 %v2476
        %v2489 = vunpack.c.l.b16 %v2477
        %v2490 = vunpack.c.l.b16 %v2478
        %v2491 = vpack.c.b16 %v2488, %v2487
        %v2492 = vpack.c.b16 %v2490, %v2489
        %v2496 = vsel %vm1709, %v2474, 0
        %2498 = vmatpush.bf16.msra.mxu0 0
        %2499 = vmatpush.bf16.msra.mxu0 0
        %2500 = vmatpush.bf16.msra.mxu0 0
        %2501 = vmatpush.bf16.msra.mxu0 0
        %2502 = vmatpush.bf16.msra.mxu0 0
        %2503 = vmatpush.bf16.msra.mxu0 0
        %2504 = vmatpush.bf16.msra.mxu0 %v2492
        %2505 = vmatpush.bf16.msra.mxu0 %v2491
        %2506 = vmatmul.bf16.gmra.mxu0 %v2496
        %v2507 = vpop.f32.mrf.mxu0
        %v2508 = vadd.f32 %v2481, %v2507
        %v2509 = vpop.f32.mrf.mxu0
        %2510 = vdwg.mxu0
        %v2511 = vmax.f32 %v2508, 0.0
        %v2512 = vadd.f32 %v2511, %v2473
        %v2513 = vsel %vm2258, %v2512, 0.0
        %2514 = vadd.xlane.f32.xlu0 %v2513
        %v2515 = vpop.xlane.xlu0 %2514
        %v2516 = vmul.f32 %v2515, %v1897
        %v2517 = vsub.f32 %v2512, %v2516
        %v2518 = vmul.f32 %v2517, %v2517
        %v2519 = vsel %vm2258, %v2518, 0.0
        %2520 = vadd.xlane.f32.xlu0 %v2519
        %v2521 = vpop.xlane.xlu0 %2520
        %v2522 = vmul.f32 %v2521, %v1897
        %v2523 = vadd.f32 %v2522, 1e-05
        %v2524 = vrsqrt.pop %v2523
        %v2525 = vmul.f32 %v2524, %v2523
        %v2526 = vmul.f32 %v2525, %v2524
        %v2527 = vmul.f32 0.5, %v2526
        %v2528 = vsub.f32 1.5, %v2527
        %v2529 = vmul.f32 %v2524, %v2528
        %vm2530 = vweird.f32 %v2523
        %vm2531 = vweird.f32 %v2524
        %vm2532 = vmor %vm2530, %vm2531
        %v2533 = vsel %vm2532, %v2524, %v2529
        %v2534 = vmul.f32 %v2517, %v2533
        %v2535 = vld [vmem:[%s29] sm:$0x1]
        %v2537 = vperm.slane %v2535, 0
        %v2539 = vmul.f32 %v2534, %v2537
        %v2540 = vld [vmem:[#allocation9] sm:$0x1]
        %v2542 = vperm.slane %v2540, 0
        %v2544 = vadd.f32 %v2539, %v2542
        %v2545 = vpack.c.bf16 %v2544, %v2544
        %v2546 = vld [vmem:[#allocation4] sm:$0xf]
        %v2547 = vld [vmem:[#allocation4 + $0x4] sm:$0xf]
        %v2548 = vld [vmem:[#allocation4 + $0x8] sm:$0xf]
        %v2549 = vld [vmem:[#allocation4 + $0xc] sm:$0xf]
        %v2554 = vunpack.c.l.b16 %v2546
        %v2555 = vunpack.c.l.b16 %v2547
        %v2556 = vunpack.c.l.b16 %v2548
        %v2557 = vunpack.c.l.b16 %v2549
        %v2558 = vpack.c.b16 %v2555, %v2554
        %v2559 = vpack.c.b16 %v2557, %v2556
        %v2563 = vsel %vm1709, %v2545, 0
        %2565 = vmatpush.bf16.msra.mxu0 0
        %2566 = vmatpush.bf16.msra.mxu0 0
        %2567 = vmatpush.bf16.msra.mxu0 0
        %2568 = vmatpush.bf16.msra.mxu0 0
        %2569 = vmatpush.bf16.msra.mxu0 0
        %2570 = vmatpush.bf16.msra.mxu0 0
        %2571 = vmatpush.bf16.msra.mxu0 %v2559
        %2572 = vmatpush.bf16.msra.mxu0 %v2558
        %2573 = vmatmul.bf16.gmra.mxu0 %v2563
        %v2574 = vpop.f32.mrf.mxu0
        %v2575 = vadd.f32 0.0, %v2574
        %v2576 = vpop.f32.mrf.mxu0
        %2577 = vdwg.mxu0
        %v2578 = vpack.c.bf16 %v2575, %v2575
        %2580 = vrot.lane.b32.xlu0 %v2578, 96
        %v2581 = vpop.permute.xlu0 %2580
        %v2583 = vsel %vm1670, %v2578, 0
        %v2586 = vsel %vm1670, %v2581, 0
        %2588 = vmatpush.bf16.xpose.msra.mxu0 0
        %2589 = vmatpush.bf16.xpose.msra.mxu0 0
        %2590 = vmatpush.bf16.xpose.msra.mxu0 0
        %2591 = vmatpush.bf16.xpose.msra.mxu0 0
        %2592 = vmatpush.bf16.xpose.msra.mxu0 0
        %2593 = vmatpush.bf16.xpose.msra.mxu0 0
        %2594 = vmatpush.bf16.xpose.msra.mxu0 0
        %2595 = vmatpush.bf16.xpose.msra.mxu0 %v2586
        %2596 = vmatmul.bf16.gmra.mxu0 %v2583
        %v2597 = vpop.f32.mrf.mxu0
        %v2598 = vadd.f32 %v2135, %v2597
        %v2599 = vpop.f32.mrf.mxu0
        %2600 = vdwg.mxu0
        %v2601 = vsel %vm2159, %v2598, -inf
        %2602 = vmax.xlane.f32.xlu0 %v2601
        %v2603 = vpop.xlane.xlu0 %2602
        %v2604 = vsub.f32 %v2598, %v2603
        %v2605 = vmul.f32 %v2604, 1.442695
        %v2606 = vpow.pop %v2605
        %v2607 = vsel %vm2159, %v2606, 0.0
        %2608 = vadd.xlane.f32.xlu0 %v2607
        %v2609 = vpop.xlane.xlu0 %2608
        %v2610 = vrcp.pop %v2609
        %v2611 = vmul.f32 %v2606, %v2610
        %2613 = vrot.lane.b32.xlu0 %v2575, 64
        %v2614 = vpop.permute.xlu0 %2613
        %v2616 = vsel %vm1800, %v2614, 0.0
        %v2617 = vpack.c.bf16 %v2611, %v2611
        %v2618 = vpack.c.bf16 %v2616, %v2616
        %2619 = vrot.lane.b32.xlu0 %v2578, 112
        %v2620 = vpop.permute.xlu0 %2619
        %2621 = vrot.lane.b32.xlu0 %v2578, 80
        %v2622 = vpop.permute.xlu0 %2621
        %v2624 = vsel %vm1670, %v2620, 0
        %v2627 = vsel %vm1670, %v2622, 0
        %2629 = vmatpush.bf16.xpose.msra.mxu0 0
        %2630 = vmatpush.bf16.xpose.msra.mxu0 0
        %2631 = vmatpush.bf16.xpose.msra.mxu0 0
        %2632 = vmatpush.bf16.xpose.msra.mxu0 0
        %2633 = vmatpush.bf16.xpose.msra.mxu0 0
        %2634 = vmatpush.bf16.xpose.msra.mxu0 0
        %2635 = vmatpush.bf16.xpose.msra.mxu0 0
        %2636 = vmatpush.bf16.xpose.msra.mxu0 %v2627
        %2637 = vmatmul.bf16.gmra.mxu0 %v2624
        %v2638 = vpop.f32.mrf.mxu0
        %v2639 = vadd.f32 %v2135, %v2638
        %v2640 = vpop.f32.mrf.mxu0
        %2641 = vdwg.mxu0
        %v2642 = vsel %vm2159, %v2639, -inf
        %2643 = vmax.xlane.f32.xlu0 %v2642
        %v2644 = vpop.xlane.xlu0 %2643
        %v2645 = vsub.f32 %v2639, %v2644
        %v2646 = vmul.f32 %v2645, 1.442695
        %v2647 = vpow.pop %v2646
        %v2648 = vsel %vm2159, %v2647, 0.0
        %2649 = vadd.xlane.f32.xlu0 %v2648
        %v2650 = vpop.xlane.xlu0 %2649
        %v2651 = vrcp.pop %v2650
        %v2652 = vmul.f32 %v2647, %v2651
        %v2653 = vsel %vm1844, %v2614, 0.0
        %v2654 = vpack.c.bf16 %v2652, %v2652
        %v2655 = vpack.c.bf16 %v2653, %v2653
        %v2657 = vsel %vm2215, %v2654, 0
        %v2660 = vand.u32 %v2655, %v2221
        %2662 = vmatpush.bf16.msra.mxu0 0
        %2663 = vmatpush.bf16.msra.mxu0 0
        %2664 = vmatpush.bf16.msra.mxu0 0
        %2665 = vmatpush.bf16.msra.mxu0 0
        %2666 = vmatpush.bf16.msra.mxu0 0
        %2667 = vmatpush.bf16.msra.mxu0 0
        %2668 = vmatpush.bf16.msra.mxu0 0
        %2669 = vmatpush.bf16.msra.mxu0 %v2660
        %2670 = vmatmul.bf16.gmra.mxu0 %v2657
        %v2671 = vpop.f32.mrf.mxu0
        %v2672 = vadd.f32 0.0, %v2671
        %v2673 = vpop.f32.mrf.mxu0
        %2674 = vdwg.mxu0
        %v2676 = vsel %vm2215, %v2617, 0
        %v2679 = vand.u32 %v2618, %v2221
        %2681 = vmatpush.bf16.msra.mxu0 0
        %2682 = vmatpush.bf16.msra.mxu0 0
        %2683 = vmatpush.bf16.msra.mxu0 0
        %2684 = vmatpush.bf16.msra.mxu0 0
        %2685 = vmatpush.bf16.msra.mxu0 0
        %2686 = vmatpush.bf16.msra.mxu0 0
        %2687 = vmatpush.bf16.msra.mxu0 0
        %2688 = vmatpush.bf16.msra.mxu0 %v2679
        %2689 = vmatmul.bf16.gmra.mxu0 %v2676
        %v2690 = vpop.f32.mrf.mxu0
        %v2691 = vadd.f32 %v2672, %v2690
        %v2692 = vpop.f32.mrf.mxu0
        %2693 = vdwg.mxu0
        %v2694 = vadd.f32 %v2544, %v2691
        %v2695 = vsel %vm2258, %v2694, 0.0
        %2696 = vadd.xlane.f32.xlu0 %v2695
        %v2697 = vpop.xlane.xlu0 %2696
        %v2698 = vmul.f32 %v2697, %v1897
        %v2699 = vsub.f32 %v2694, %v2698
        %v2700 = vmul.f32 %v2699, %v2699
        %v2701 = vsel %vm2258, %v2700, 0.0
        %2702 = vadd.xlane.f32.xlu0 %v2701
        %v2703 = vpop.xlane.xlu0 %2702
        %v2704 = vmul.f32 %v2703, %v1897
        %v2705 = vadd.f32 %v2704, 1e-05
        %v2706 = vrsqrt.pop %v2705
        %v2707 = vmul.f32 %v2706, %v2705
        %v2708 = vmul.f32 %v2707, %v2706
        %v2709 = vmul.f32 0.5, %v2708
        %v2710 = vsub.f32 1.5, %v2709
        %v2711 = vmul.f32 %v2706, %v2710
        %vm2712 = vweird.f32 %v2705
        %vm2713 = vweird.f32 %v2706
        %vm2714 = vmor %vm2712, %vm2713
        %v2715 = vsel %vm2714, %v2706, %v2711
        %v2716 = vmul.f32 %v2699, %v2715
        %v2717 = vld [vmem:[#allocation13] sm:$0x1]
        %v2719 = vperm.slane %v2717, 0
        %v2721 = vmul.f32 %v2716, %v2719
        %v2722 = vld [vmem:[#allocation15] sm:$0x1]
        %v2724 = vperm.slane %v2722, 0
        %v2726 = vadd.f32 %v2721, %v2724
        %v2727 = vpack.c.bf16 %v2726, %v2726
        %v2728 = vld [vmem:[#allocation7] sm:$0xf]
        %v2729 = vld [vmem:[#allocation7 + $0x4] sm:$0xf]
        %v2730 = vld [vmem:[#allocation7 + $0x8] sm:$0xf]
        %v2731 = vld [vmem:[#allocation7 + $0xc] sm:$0xf]
        %v2736 = vunpack.c.l.b16 %v2728
        %v2737 = vunpack.c.l.b16 %v2729
        %v2738 = vunpack.c.l.b16 %v2730
        %v2739 = vunpack.c.l.b16 %v2731
        %v2740 = vpack.c.b16 %v2737, %v2736
        %v2741 = vpack.c.b16 %v2739, %v2738
        %v2745 = vsel %vm1709, %v2727, 0
        %2747 = vmatpush.bf16.msra.mxu0 0
        %2748 = vmatpush.bf16.msra.mxu0 0
        %2749 = vmatpush.bf16.msra.mxu0 0
        %2750 = vmatpush.bf16.msra.mxu0 0
        %2751 = vmatpush.bf16.msra.mxu0 0
        %2752 = vmatpush.bf16.msra.mxu0 0
        %2753 = vmatpush.bf16.msra.mxu0 %v2741
        %2754 = vmatpush.bf16.msra.mxu0 %v2740
        %2755 = vmatmul.bf16.gmra.mxu0 %v2745
        %v2756 = vpop.f32.mrf.mxu0
        %v2757 = vadd.f32 0.0, %v2756
        %v2758 = vpop.f32.mrf.mxu0
        %2759 = vdwg.mxu0
        %v2760 = vpack.c.bf16 %v2757, %v2757
        %v2762 = vsel %vm1670, %v2760, 0
        %2764 = vmatpush.bf16.xpose.msra.mxu0 0
        %2765 = vmatpush.bf16.xpose.msra.mxu0 0
        %2766 = vmatpush.bf16.xpose.msra.mxu0 0
        %2767 = vmatpush.bf16.xpose.msra.mxu0 0
        %2768 = vmatpush.bf16.xpose.msra.mxu0 0
        %2769 = vmatpush.bf16.xpose.msra.mxu0 0
        %2770 = vmatpush.bf16.xpose.msra.mxu0 0
        %2771 = vmatpush.bf16.xpose.msra.mxu0 %v2330
        %2772 = vmatmul.bf16.gmra.mxu0 %v2762
        %v2773 = vpop.f32.mrf.mxu0
        %v2774 = vadd.f32 %v2135, %v2773
        %v2775 = vpop.f32.mrf.mxu0
        %2776 = vdwg.mxu0
        %v2777 = vsel %vm2345, %v2774, -inf
        %2778 = vmax.xlane.f32.xlu0 %v2777
        %v2779 = vpop.xlane.xlu0 %2778
        %v2780 = vsub.f32 %v2774, %v2779
        %v2781 = vmul.f32 %v2780, 1.442695
        %v2782 = vpow.pop %v2781
        %v2783 = vsel %vm2345, %v2782, 0.0
        %2784 = vadd.xlane.f32.xlu0 %v2783
        %v2785 = vpop.xlane.xlu0 %2784
        %v2786 = vrcp.pop %v2785
        %v2787 = vmul.f32 %v2782, %v2786
        %v2788 = vpack.c.bf16 %v2787, %v2787
        %2790 = vrot.lane.b32.xlu0 %v2760, 112
        %v2791 = vpop.permute.xlu0 %2790
        %v2793 = vsel %vm1670, %v2791, 0
        %2795 = vmatpush.bf16.xpose.msra.mxu0 0
        %2796 = vmatpush.bf16.xpose.msra.mxu0 0
        %2797 = vmatpush.bf16.xpose.msra.mxu0 0
        %2798 = vmatpush.bf16.xpose.msra.mxu0 0
        %2799 = vmatpush.bf16.xpose.msra.mxu0 0
        %2800 = vmatpush.bf16.xpose.msra.mxu0 0
        %2801 = vmatpush.bf16.xpose.msra.mxu0 0
        %2802 = vmatpush.bf16.xpose.msra.mxu0 %v2374
        %2803 = vmatmul.bf16.gmra.mxu0 %v2793
        %v2804 = vpop.f32.mrf.mxu0
        %v2805 = vadd.f32 %v2135, %v2804
        %v2806 = vpop.f32.mrf.mxu0
        %2807 = vdwg.mxu0
        %v2808 = vsel %vm2345, %v2805, -inf
        %2809 = vmax.xlane.f32.xlu0 %v2808
        %v2810 = vpop.xlane.xlu0 %2809
        %v2811 = vsub.f32 %v2805, %v2810
        %v2812 = vmul.f32 %v2811, 1.442695
        %v2813 = vpow.pop %v2812
        %v2814 = vsel %vm2345, %v2813, 0.0
        %2815 = vadd.xlane.f32.xlu0 %v2814
        %v2816 = vpop.xlane.xlu0 %2815
        %v2817 = vrcp.pop %v2816
        %v2818 = vmul.f32 %v2813, %v2817
        %v2819 = vpack.c.bf16 %v2818, %v2818
        %v2821 = vsel %vm1786, %v2819, 0
        %2823 = vmatpush.bf16.msra.mxu0 0
        %2824 = vmatpush.bf16.msra.mxu0 0
        %2825 = vmatpush.bf16.msra.mxu0 0
        %2826 = vmatpush.bf16.msra.mxu0 0
        %2827 = vmatpush.bf16.msra.mxu0 0
        %2828 = vmatpush.bf16.msra.mxu0 0
        %2829 = vmatpush.bf16.msra.mxu0 0
        %2830 = vmatpush.bf16.msra.mxu0 %v2407
        %2831 = vmatmul.bf16.gmra.mxu0 %v2821
        %v2832 = vpop.f32.mrf.mxu0
        %v2833 = vadd.f32 0.0, %v2832
        %v2834 = vpop.f32.mrf.mxu0
        %2835 = vdwg.mxu0
        %v2837 = vsel %vm1786, %v2788, 0
        %2839 = vmatpush.bf16.msra.mxu0 0
        %2840 = vmatpush.bf16.msra.mxu0 0
        %2841 = vmatpush.bf16.msra.mxu0 0
        %2842 = vmatpush.bf16.msra.mxu0 0
        %2843 = vmatpush.bf16.msra.mxu0 0
        %2844 = vmatpush.bf16.msra.mxu0 0
        %2845 = vmatpush.bf16.msra.mxu0 0
        %2846 = vmatpush.bf16.msra.mxu0 %v2426
        %2847 = vmatmul.bf16.gmra.mxu0 %v2837
        %v2848 = vpop.f32.mrf.mxu0
        %v2849 = vadd.f32 %v2833, %v2848
        %v2850 = vpop.f32.mrf.mxu0
        %2851 = vdwg.mxu0
        %v2852 = vadd.f32 %v2726, %v2849
        %v2853 = vsel %vm2258, %v2852, 0.0
        %2854 = vadd.xlane.f32.xlu0 %v2853
        %v2855 = vpop.xlane.xlu0 %2854
        %v2856 = vmul.f32 %v2855, %v1897
        %v2857 = vsub.f32 %v2852, %v2856
        %v2858 = vmul.f32 %v2857, %v2857
        %v2859 = vsel %vm2258, %v2858, 0.0
        %2860 = vadd.xlane.f32.xlu0 %v2859
        %v2861 = vpop.xlane.xlu0 %2860
        %v2862 = vmul.f32 %v2861, %v1897
        %v2863 = vadd.f32 %v2862, 1e-05
        %v2864 = vrsqrt.pop %v2863
        %v2865 = vmul.f32 %v2864, %v2863
        %v2866 = vmul.f32 %v2865, %v2864
        %v2867 = vmul.f32 0.5, %v2866
        %v2868 = vsub.f32 1.5, %v2867
        %v2869 = vmul.f32 %v2864, %v2868
        %vm2870 = vweird.f32 %v2863
        %vm2871 = vweird.f32 %v2864
        %vm2872 = vmor %vm2870, %vm2871
        %v2873 = vsel %vm2872, %v2864, %v2869
        %v2874 = vmul.f32 %v2857, %v2873
        %v2875 = vld [vmem:[#allocation19] sm:$0x1]
        %v2877 = vperm.slane %v2875, 0
        %v2879 = vmul.f32 %v2874, %v2877
        %v2880 = vld [vmem:[#allocation21] sm:$0x1]
        %v2882 = vperm.slane %v2880, 0
        %v2884 = vadd.f32 %v2879, %v2882
        %v2885 = vpack.c.bf16 %v2884, %v2884
        %v2886 = vld [vmem:[%s13] sm:$0xf]
        %v2887 = vld [vmem:[%s13 + $0x4] sm:$0xf]
        %v2888 = vld [vmem:[%s13 + $0x8] sm:$0xf]
        %v2889 = vld [vmem:[%s13 + $0xc] sm:$0xf]
        %v2890 = vld [vmem:[%s15] sm:$0x1]
        %v2892 = vperm.slane %v2890, 0
        %v2898 = vunpack.c.l.b16 %v2886
        %v2899 = vunpack.c.l.b16 %v2887
        %v2900 = vunpack.c.l.b16 %v2888
        %v2901 = vunpack.c.l.b16 %v2889
        %v2902 = vpack.c.b16 %v2899, %v2898
        %v2903 = vpack.c.b16 %v2901, %v2900
        %v2907 = vsel %vm1709, %v2885, 0
        %2909 = vmatpush.bf16.msra.mxu0 0
        %2910 = vmatpush.bf16.msra.mxu0 0
        %2911 = vmatpush.bf16.msra.mxu0 0
        %2912 = vmatpush.bf16.msra.mxu0 0
        %2913 = vmatpush.bf16.msra.mxu0 0
        %2914 = vmatpush.bf16.msra.mxu0 0
        %2915 = vmatpush.bf16.msra.mxu0 %v2903
        %2916 = vmatpush.bf16.msra.mxu0 %v2902
        %2917 = vmatmul.bf16.gmra.mxu0 %v2907
        %v2918 = vpop.f32.mrf.mxu0
        %v2919 = vadd.f32 %v2892, %v2918
        %v2920 = vpop.f32.mrf.mxu0
        %2921 = vdwg.mxu0
        %v2922 = vmax.f32 %v2919, 0.0
        %v2923 = vadd.f32 %v2922, %v2884
        %v2924 = vpack.c.bf16 %v2923, %v2923
        %v2925 = vld [vmem:[%s17] sm:$0xf]
        %v2926 = vld [vmem:[%s17 + $0x4] sm:$0xf]
        %v2927 = vld [vmem:[%s17 + $0x8] sm:$0xf]
        %v2928 = vld [vmem:[%s17 + $0xc] sm:$0xf]
        %v2929 = vld [vmem:[%s19] sm:$0x1]
        %v2931 = vperm.slane %v2929, 0
        %v2937 = vunpack.c.l.b16 %v2925
        %v2938 = vunpack.c.l.b16 %v2926
        %v2939 = vunpack.c.l.b16 %v2927
        %v2940 = vunpack.c.l.b16 %v2928
        %v2941 = vpack.c.b16 %v2938, %v2937
        %v2942 = vpack.c.b16 %v2940, %v2939
        %v2946 = vsel %vm1709, %v2924, 0
        %2948 = vmatpush.bf16.msra.mxu0 0
        %2949 = vmatpush.bf16.msra.mxu0 0
        %2950 = vmatpush.bf16.msra.mxu0 0
        %2951 = vmatpush.bf16.msra.mxu0 0
        %2952 = vmatpush.bf16.msra.mxu0 0
        %2953 = vmatpush.bf16.msra.mxu0 0
        %2954 = vmatpush.bf16.msra.mxu0 %v2942
        %2955 = vmatpush.bf16.msra.mxu0 %v2941
        %2956 = vmatmul.bf16.gmra.mxu0 %v2946
        %v2957 = vpop.f32.mrf.mxu0
        %v2958 = vadd.f32 %v2931, %v2957
        %v2959 = vpop.f32.mrf.mxu0
        %2960 = vdwg.mxu0
        %vm2961 = vcmask 30720
        %2962 = vst.msk [vmem:[%s1654] sm:$0x7f] %vm2961, %v2958
        %p2963 = scmp.lt.s32.totalorder %s109, 1
        %s2964 = scalar_select %p2963, %s109, 1
        %s2965 = smul.addr %s2964, 8
        %s2966 = scalar_lea.vmem %s81, %s2965
        // Predicated region
        $region293: #{transformer_ed_forward.1} parent=179 // pred_check
          %p2967 = pneg %p977
        $region294: #{transformer_ed_forward.1} parent=179 // pred_check_branch
          %2969 = sbr.rel (%p2967) target = $region296
        $region295: #{transformer_ed_forward.1} parent=179 // pred_region
          _
        $region296: #{transformer_ed_forward.1} parent=179 // pred_fallthru
          _
      $region180: #{transformer_ed_forward.1} parent=5 // pred_fallthru
        _
      %p2970 = scmp.le.s32.totalorder 2, %s104
      // Predicated region
      $region297: #{transformer_ed_forward.1} parent=5 // pred_check
        %p2971 = pneg %p2970
      $region298: #{transformer_ed_forward.1} parent=5 // pred_check_branch
        %2973 = sbr.rel (%p2971) target = $region300
      $region299: #{transformer_ed_forward.1} parent=5 // pred_region
        %s2974 = ssub.s32 %s104, 2
        // Predicated region
        $region301: #{transformer_ed_forward.1} parent=299 // pred_check
          %p2975 = pneg %p983
        $region302: #{transformer_ed_forward.1} parent=299 // pred_check_branch
          %2977 = sbr.rel (%p2975) target = $region304
        $region303: #{transformer_ed_forward.1} parent=299 // pred_region
          %p2978 = scmp.lt.s32.totalorder %s110, 1
          %s2979 = scalar_select %p2978, %s110, 1
          %s2980 = smul.addr %s2979, 8
          %s2981 = scalar_lea.vmem %s81, %s2980
        $region304: #{transformer_ed_forward.1} parent=299 // pred_fallthru
          _
      $region300: #{transformer_ed_forward.1} parent=5 // pred_fallthru
        _
    $region6: #{transformer_ed_forward.1} parent=1 // loop_footer
      %s108 = sadd.s32 1, %s104
    $region7: #{transformer_ed_forward.1} parent=1 // loop_footer_branch
      %103 = sbr.rel target = $region3
    $region8: #{transformer_ed_forward.1} parent=1 // loop_exit
      _
    %2982 = vsyncpa [#allocation3], 1
    %s2983 = scalar_lea.sflag [#allocation3], 1
    %2984 = vsyncpa %s2983, 1
    %2985 = vsyncpa [#allocation5], 1
    %2986 = vsyncpa [#allocation8], 1
    %2987 = vsyncpa [#allocation11], 1
    %2988 = vsyncpa [#allocation14], 1
    %2989 = vsyncpa [#allocation17], 1
    %2990 = vsyncpa [#allocation20], 1
    %2991 = vsyncpa [#allocation23], 1
    %2992 = vsyncpa [#allocation26], 1
    %2993 = vsyncpa [#allocation29], 1
    %2994 = vsyncpa [#allocation32], 1
    %2995 = vsyncpa [#allocation35], 1
    %2996 = vsyncpa [#allocation38], 1
    %2997 = vsyncpa [#allocation41], 1
    %2998 = vsyncpa [#allocation44], 1
    %s2999 = scalar_lea.sflag [#allocation44], 1
    %3000 = vsyncpa %s2999, 1

</llo_original>
